<compile_context>
chip_gen: v7x
topology: tpu7x:2x2x1
jax: 0.10.0
libtpu: 0.0.40
codegen_flags: <defaults>
</compile_context>

<pallas_src>
import math
from functools import partial

import jax
import jax.numpy as jnp
from jax.experimental import pallas as pl
from jax.experimental.pallas import tpu as pltpu


# MXU operand dtype (operands only; accumulation stays f32 via
# preferred_element_type, epilogues stay f32).  Set to jnp.bfloat16 on
# v5e/v6e/v7x for ~2x MXU throughput and half the weight/activation bytes.
MATMUL_DTYPE = jnp.float32


# --------------------------- Pallas kernels ---------------------------------

def _linear_kernel(x_ref, w_ref, b_ref, o_ref):
    # y = x @ w + b  on the MXU for one (tm, tn) output tile.
    o_ref[...] = (jnp.dot(x_ref[...].astype(MATMUL_DTYPE),
                          w_ref[...].astype(MATMUL_DTYPE),
                          preferred_element_type=jnp.float32) + b_ref[...])


def linear(x2d, w, b, *, tm=512, tn=512):
    """x2d: (N, d_in), w: (d_in, d_out), b: (d_out,) -> (N, d_out).

    Grid order is (cols, rows): the (d_in, tn) WEIGHT tile is invariant over
    the inner (row) axis, so the weight is streamed from HBM once per forward
    while only the cheap activation row tiles re-stream per column block.
    This is the right order for the vocab projection where the weight
    dominates HBM traffic.  Both axes parallel -> megacore sharding.
    """
    N, d_in = x2d.shape
    d_out = w.shape[1]
    tm = min(tm, N)
    tn = min(tn, d_out)
    grid = (pl.cdiv(d_out, tn), pl.cdiv(N, tm))
    return pl.pallas_call(
        _linear_kernel,
        out_shape=jax.ShapeDtypeStruct((N, d_out), jnp.float32),
        grid=grid,
        in_specs=[pl.BlockSpec((tm, d_in), lambda j, i: (i, 0)),
                  pl.BlockSpec((d_in, tn), lambda j, i: (0, j)),
                  pl.BlockSpec((1, tn), lambda j, i: (0, j))],
        out_specs=pl.BlockSpec((tm, tn), lambda j, i: (i, j)),
        compiler_params=pltpu.CompilerParams(
            dimension_semantics=("parallel", "parallel")),
    )(x2d, w, b.reshape(1, d_out))


def _proj_add_ln_kernel(a_ref, w_ref, b_ref, res_ref, g_ref, be_ref, o_ref,
                        *, eps):
    # LayerNorm(residual + a @ W_o + b)  fused for one row tile (f32 epilogue).
    y = jnp.dot(a_ref[...].astype(MATMUL_DTYPE),
                w_ref[...].astype(MATMUL_DTYPE),
                preferred_element_type=jnp.float32) + b_ref[...]
    z = res_ref[...] + y
    mean = jnp.mean(z, axis=-1, keepdims=True)
    var = jnp.mean(jnp.square(z - mean), axis=-1, keepdims=True)
    o_ref[...] = (z - mean) * jax.lax.rsqrt(var + eps) * g_ref[...] + be_ref[...]


def proj_add_ln(a2d, w, b, res2d, gamma, beta, *, eps=1e-5, tm=512):
    """LayerNorm(res + a @ w + b).  a2d,res2d: (N, D); w: (D, D).  Row-tiled.

    TODO(synk): on v7x (64 MiB VMEM) with very large D, put the constant-index
    W_o block on pipeline_mode=pl.Buffered(1) / set vmem_limit_bytes.
    """
    N, D = a2d.shape
    tm = min(tm, N)
    return pl.pallas_call(
        partial(_proj_add_ln_kernel, eps=eps),
        out_shape=jax.ShapeDtypeStruct((N, D), jnp.float32),
        grid=(pl.cdiv(N, tm),),
        in_specs=[pl.BlockSpec((tm, D), lambda i: (i, 0)),
                  pl.BlockSpec((D, D), lambda i: (0, 0)),
                  pl.BlockSpec((1, D), lambda i: (0, 0)),
                  pl.BlockSpec((tm, D), lambda i: (i, 0)),
                  pl.BlockSpec((1, D), lambda i: (0, 0)),
                  pl.BlockSpec((1, D), lambda i: (0, 0))],
        out_specs=pl.BlockSpec((tm, D), lambda i: (i, 0)),
        compiler_params=pltpu.CompilerParams(
            dimension_semantics=("parallel",)),
    )(a2d, w, b.reshape(1, D), res2d, gamma.reshape(1, D), beta.reshape(1, D))


def _ffn_add_ln_kernel(x_ref, w1_ref, b1_ref, w2_ref, b2_ref, g_ref, be_ref,
                       o_ref, acc_ref, *, eps):
    # LayerNorm(x + fc2(relu(fc1(x)))) fused, K-tiled over d_ff (axis 1 of the
    # grid is the reduction axis; f32 accumulator in VMEM scratch).
    j = pl.program_id(1)

    @pl.when(j == 0)
    def _():
        acc_ref[...] = jnp.zeros_like(acc_ref)

    h = jnp.dot(x_ref[...].astype(MATMUL_DTYPE),
                w1_ref[...].astype(MATMUL_DTYPE),
                preferred_element_type=jnp.float32) + b1_ref[...]
    h = jnp.maximum(h, 0.0)
    acc_ref[...] += jnp.dot(h.astype(MATMUL_DTYPE),
                            w2_ref[...].astype(MATMUL_DTYPE),
                            preferred_element_type=jnp.float32)

    @pl.when(j == pl.num_programs(1) - 1)
    def _():
        z = x_ref[...] + acc_ref[...] + b2_ref[...]
        mean = jnp.mean(z, axis=-1, keepdims=True)
        var = jnp.mean(jnp.square(z - mean), axis=-1, keepdims=True)
        o_ref[...] = ((z - mean) * jax.lax.rsqrt(var + eps) * g_ref[...]
                      + be_ref[...])


def ffn_add_ln(x2d, fc1, fc2, gamma, beta, *, eps=1e-5, tm=512, tf=512):
    """LayerNorm(x + fc2(relu(fc1(x)))).  x2d: (N, D).

    Row-tiled (parallel) x d_ff-tiled (arbitrary, innermost) so only a
    (D, tf) + (tf, D) weight slice is resident at a time -> fits v7x VMEM at
    arbitrary d_ff.
    """
    N, D = x2d.shape
    d_ff = fc1["w"].shape[1]
    tm = min(tm, N)
    tf = min(tf, d_ff)
    grid = (pl.cdiv(N, tm), pl.cdiv(d_ff, tf))
    return pl.pallas_call(
        partial(_ffn_add_ln_kernel, eps=eps),
        out_shape=jax.ShapeDtypeStruct((N, D), jnp.float32),
        grid=grid,
        in_specs=[pl.BlockSpec((tm, D), lambda i, j: (i, 0)),
                  pl.BlockSpec((D, tf), lambda i, j: (0, j)),
                  pl.BlockSpec((1, tf), lambda i, j: (0, j)),
                  pl.BlockSpec((tf, D), lambda i, j: (j, 0)),
                  pl.BlockSpec((1, D), lambda i, j: (0, 0)),
                  pl.BlockSpec((1, D), lambda i, j: (0, 0)),
                  pl.BlockSpec((1, D), lambda i, j: (0, 0))],
        out_specs=pl.BlockSpec((tm, D), lambda i, j: (i, 0)),
        scratch_shapes=[pltpu.VMEM((tm, D), jnp.float32)],
        compiler_params=pltpu.CompilerParams(
            dimension_semantics=("parallel", "arbitrary")),
    )(x2d, fc1["w"], fc1["b"].reshape(1, d_ff), fc2["w"],
      fc2["b"].reshape(1, D), gamma.reshape(1, D), beta.reshape(1, D))


def _mha_flash_kernel(qv_ref, kv_ref, q_ref, k_ref, v_ref, o_ref,
                      m_sc, l_sc, acc_sc, *, causal, tq, tk):
    """Flash-style MHA for one (batch, q-tile, kv-tile) grid step.

    Q/K/V arrive head-major: blocks are (1, H, tq, dk) / (1, H, tk, dk), so
    heads are a batch axis of one batched dot_general (no per-head Python
    loop, no lane sub-slicing, no concatenations).  Online softmax keeps the
    live score slab at (H, tq, tk).  Masks are built in-kernel from tiny
    per-batch validity vectors plus an offset causal iota.  The 1/sqrt(dk)
    scale is folded into Wq at prepare_params time.
    """
    kv_step = pl.program_id(2)

    @pl.when(kv_step == 0)
    def _():
        m_sc[...] = jnp.full_like(m_sc, -jnp.inf)
        l_sc[...] = jnp.zeros_like(l_sc)
        acc_sc[...] = jnp.zeros_like(acc_sc)

    q = q_ref[0].astype(MATMUL_DTYPE)                    # (H, tq, dk)
    k = k_ref[0].astype(MATMUL_DTYPE)                    # (H, tk, dk)
    v = v_ref[0].astype(MATMUL_DTYPE)                    # (H, tk, dk)

    s = jnp.einsum("hqd,hkd->hqk", q, k,
                   preferred_element_type=jnp.float32)   # (H, tq, tk) f32

    valid = (qv_ref[0] != 0.0) & (kv_ref[0] != 0.0)      # (tq,1)&(1,tk)->(tq,tk)
    if causal:
        qi = (pl.program_id(1) * tq
              + jax.lax.broadcasted_iota(jnp.int32, (tq, tk), 0))
        ki = (kv_step * tk
              + jax.lax.broadcasted_iota(jnp.int32, (tq, tk), 1))
        valid = valid & (ki <= qi)
    s = jnp.where(valid[None, :, :], s, -1000000000.0)

    m_prev = m_sc[...]                                   # (H, tq, 1)
    m_new = jnp.maximum(m_prev, jnp.max(s, axis=-1, keepdims=True))
    alpha = jnp.exp(m_prev - m_new)
    p = jnp.exp(s - m_new)
    l_sc[...] = alpha * l_sc[...] + jnp.sum(p, axis=-1, keepdims=True)
    acc_sc[...] = alpha * acc_sc[...] + jnp.einsum(
        "hqk,hkd->hqd", p.astype(MATMUL_DTYPE), v,
        preferred_element_type=jnp.float32)
    m_sc[...] = m_new

    @pl.when(kv_step == pl.num_programs(2) - 1)
    def _():
        o_ref[0] = (acc_sc[...] * pl.reciprocal(l_sc[...], approx=True)
                    ).astype(o_ref.dtype)


def attention(q, k, v, q_valid, k_valid, *, num_heads, causal,
              tq=256, tk=256):
    """q: (B,Sq,D), k/v: (B,Sk,D); q_valid: (B,Sq,1), k_valid: (B,1,Sk) f32."""
    B, Sq, D = q.shape
    Sk = k.shape[1]
    dk = D // num_heads
    # Head split in XLA (one cheap pass over small activations); the kernel
    # then sees head-major (H, S, dk) blocks and never sub-slices lanes.
    qh = q.reshape(B, Sq, num_heads, dk).transpose(0, 2, 1, 3)
    kh = k.reshape(B, Sk, num_heads, dk).transpose(0, 2, 1, 3)
    vh = v.reshape(B, Sk, num_heads, dk).transpose(0, 2, 1, 3)
    tq = min(tq, Sq)
    tk = min(tk, Sk)
    grid = (B, pl.cdiv(Sq, tq), pl.cdiv(Sk, tk))
    out = pl.pallas_call(
        partial(_mha_flash_kernel, causal=causal, tq=tq, tk=tk),
        out_shape=jax.ShapeDtypeStruct((B, num_heads, Sq, dk), jnp.float32),
        grid=grid,
        in_specs=[
            pl.BlockSpec((1, tq, 1), lambda b, qi, ki: (b, qi, 0)),
            pl.BlockSpec((1, 1, tk), lambda b, qi, ki: (b, 0, ki)),
            pl.BlockSpec((1, num_heads, tq, dk), lambda b, qi, ki: (b, 0, qi, 0)),
            pl.BlockSpec((1, num_heads, tk, dk), lambda b, qi, ki: (b, 0, ki, 0)),
            pl.BlockSpec((1, num_heads, tk, dk), lambda b, qi, ki: (b, 0, ki, 0)),
        ],
        out_specs=pl.BlockSpec((1, num_heads, tq, dk),
                               lambda b, qi, ki: (b, 0, qi, 0)),
        scratch_shapes=[pltpu.VMEM((num_heads, tq, 1), jnp.float32),
                        pltpu.VMEM((num_heads, tq, 1), jnp.float32),
                        pltpu.VMEM((num_heads, tq, dk), jnp.float32)],
        compiler_params=pltpu.CompilerParams(
            dimension_semantics=("parallel", "parallel", "arbitrary")),
    )(q_valid, k_valid, qh, kh, vh)
    return out.transpose(0, 2, 1, 3).reshape(B, Sq, D)


# ----------------------- model forward (JAX glue) ---------------------------

def mha_self(p, x, q_valid, k_valid, *, causal, num_heads):
    """Self-attention up to (but not including) W_o; W_o is fused downstream.
    Wq|Wk|Wv pre-fused (and Wq pre-scaled by 1/sqrt(dk)) in prepare_params."""
    B, S, D = x.shape
    qkv = linear(x.reshape(B * S, D), p["wqkv"], p["bqkv"])   # one fused GEMM
    q = qkv[:, :D].reshape(B, S, D)
    k = qkv[:, D:2 * D].reshape(B, S, D)
    v = qkv[:, 2 * D:].reshape(B, S, D)
    return attention(q, k, v, q_valid, k_valid, num_heads=num_heads,
                     causal=causal)


def mha_cross(p, x, enc, q_valid, k_valid, *, num_heads):
    """Cross-attention up to W_o (W_o fused downstream)."""
    B, Sq, D = x.shape
    Sk = enc.shape[1]
    q = linear(x.reshape(B * Sq, D), p["wq"], p["bq"]).reshape(B, Sq, D)
    kv = linear(enc.reshape(B * Sk, D), p["wkv"], p["bkv"])
    k = kv[:, :D].reshape(B, Sk, D)
    v = kv[:, D:].reshape(B, Sk, D)
    return attention(q, k, v, q_valid, k_valid, num_heads=num_heads,
                     causal=False)


def encoder_layer_fwd(p, x, q_valid, k_valid, num_heads):
    B, S, D = x.shape
    N = B * S
    a = mha_self(p["self_attn"], x, q_valid, k_valid,
                 causal=False, num_heads=num_heads)
    x2d = proj_add_ln(a.reshape(N, D), p["self_attn"]["wo"]["w"],
                      p["self_attn"]["wo"]["b"], x.reshape(N, D),
                      p["ln1_g"], p["ln1_b"])
    y2d = ffn_add_ln(x2d, p["fc1"], p["fc2"], p["ln2_g"], p["ln2_b"])
    return y2d.reshape(B, S, D)


def decoder_layer_fwd(p, x, enc_out, self_qv, self_kv, cross_qv, cross_kv,
                      num_heads):
    B, S, D = x.shape
    N = B * S
    a = mha_self(p["self_attn"], x, self_qv, self_kv,
                 causal=True, num_heads=num_heads)
    x2d = proj_add_ln(a.reshape(N, D), p["self_attn"]["wo"]["w"],
                      p["self_attn"]["wo"]["b"], x.reshape(N, D),
                      p["ln1_g"], p["ln1_b"])
    a = mha_cross(p["cross_attn"], x2d.reshape(B, S, D), enc_out,
                  cross_qv, cross_kv, num_heads=num_heads)
    x2d = proj_add_ln(a.reshape(N, D), p["cross_attn"]["wo"]["w"],
                      p["cross_attn"]["wo"]["b"], x2d,
                      p["ln2_g"], p["ln2_b"])
    y2d = ffn_add_ln(x2d, p["fc1"], p["fc2"], p["ln3_g"], p["ln3_b"])
    return y2d.reshape(B, S, D)


def prepare_params(params, num_heads):
    """One-time (outside-jit) parameter prep:
      * fold 1/sqrt(dk) into Wq / bq,
      * pre-fuse Wq|Wk|Wv (self-attn) and Wk|Wv (cross-attn),
      * pre-pad fc_out's vocab dim to a lane multiple of 128.
    Keeps these copies out of the per-forward jitted path."""
    d_model = params["enc_emb"].shape[1]
    qscale = 1.0 / math.sqrt(d_model // num_heads)

    def prep_self(m):
        return {"wqkv": jnp.concatenate(
                    [m["wq"]["w"] * qscale, m["wk"]["w"], m["wv"]["w"]], axis=1),
                "bqkv": jnp.concatenate(
                    [m["wq"]["b"] * qscale, m["wk"]["b"], m["wv"]["b"]], axis=0),
                "wo": m["wo"]}

    def prep_cross(m):
        return {"wq": m["wq"]["w"] * qscale, "bq": m["wq"]["b"] * qscale,
                "wkv": jnp.concatenate([m["wk"]["w"], m["wv"]["w"]], axis=1),
                "bkv": jnp.concatenate([m["wk"]["b"], m["wv"]["b"]], axis=0),
                "wo": m["wo"]}

    def prep_enc(lp):
        return {"self_attn": prep_self(lp["self_attn"]),
                "fc1": lp["fc1"], "fc2": lp["fc2"],
                "ln1_g": lp["ln1_g"], "ln1_b": lp["ln1_b"],
                "ln2_g": lp["ln2_g"], "ln2_b": lp["ln2_b"]}

    def prep_dec(lp):
        return {"self_attn": prep_self(lp["self_attn"]),
                "cross_attn": prep_cross(lp["cross_attn"]),
                "fc1": lp["fc1"], "fc2": lp["fc2"],
                "ln1_g": lp["ln1_g"], "ln1_b": lp["ln1_b"],
                "ln2_g": lp["ln2_g"], "ln2_b": lp["ln2_b"],
                "ln3_g": lp["ln3_g"], "ln3_b": lp["ln3_b"]}

    w = params["fc_out"]["w"]
    b = params["fc_out"]["b"]
    V = w.shape[1]
    Vp = ((V + 127) // 128) * 128
    if Vp != V:
        w = jnp.pad(w, ((0, 0), (0, Vp - V)))
        b = jnp.pad(b, (0, Vp - V))

    return {"enc_emb": params["enc_emb"], "dec_emb": params["dec_emb"],
            "pe": params["pe"], "fc_out_w": w, "fc_out_b": b,
            "enc_layers": [prep_enc(lp) for lp in params["enc_layers"]],
            "dec_layers": [prep_dec(lp) for lp in params["dec_layers"]]}


def transformer_forward(params, src, tgt, *, d_model, num_heads, tgt_vocab):
    """Forward pass on prepare_params() output."""
    B, Ssrc = src.shape
    _, Stgt = tgt.shape

    # generate_mask -> tiny per-batch validity vectors; the (Sq,Sk) masks are
    # built in-kernel (causal part via an offset iota), never stored in HBM.
    src_k_valid = (src != 0).astype(jnp.float32)[:, None, :]   # (B,1,Ssrc)
    tgt_q_valid = (tgt != 0).astype(jnp.float32)[:, :, None]   # (B,Stgt,1)
    ones_q_src = jnp.ones((B, Ssrc, 1), jnp.float32)
    ones_q_tgt = jnp.ones((B, Stgt, 1), jnp.float32)
    ones_k_tgt = jnp.ones((B, 1, Stgt), jnp.float32)

    scale = math.sqrt(d_model)
    pe = params["pe"]                                          # (max_len, d_model)
    # NB: faithfully reproduces PositionalEncoding.forward, which indexes the
    # PE table by *batch* index and broadcasts over the sequence dimension.
    src_emb = params["enc_emb"][src] * scale + pe[:B][:, None, :]
    tgt_emb = params["dec_emb"][tgt] * scale + pe[:B][:, None, :]
    # dropout: identity (eval mode)

    enc = src_emb
    for lp in params["enc_layers"]:
        enc = encoder_layer_fwd(lp, enc, ones_q_src, src_k_valid, num_heads)
    dec = tgt_emb
    for lp in params["dec_layers"]:
        dec = decoder_layer_fwd(lp, dec, enc, tgt_q_valid, ones_k_tgt,
                                ones_q_tgt, src_k_valid, num_heads)

    # fc_out: weight pre-padded to a lane multiple of 128; slice back here.
    out = linear(dec.reshape(B * Stgt, d_model),
                 params["fc_out_w"], params["fc_out_b"])[:, :tgt_vocab]
    return out.reshape(B, Stgt, tgt_vocab)


# ----------------------- deterministic parameter init -----------------------

def init_linear(key, d_in, d_out):
    kw, kb = jax.random.split(key)
    lim = 1.0 / math.sqrt(d_in)
    return {"w": jax.random.uniform(kw, (d_in, d_out), jnp.float32, -lim, lim),
            "b": jax.random.uniform(kb, (d_out,), jnp.float32, -lim, lim)}


def init_mha(key, d_model):
    ks = jax.random.split(key, 4)
    return {"wq": init_linear(ks[0], d_model, d_model),
            "wk": init_linear(ks[1], d_model, d_model),
            "wv": init_linear(ks[2], d_model, d_model),
            "wo": init_linear(ks[3], d_model, d_model)}


def _ln_params(d):
    return jnp.ones((d,), jnp.float32), jnp.zeros((d,), jnp.float32)


def init_encoder_layer(key, d_model, d_ff):
    k1, k2, k3 = jax.random.split(key, 3)
    g1, b1 = _ln_params(d_model)
    g2, b2 = _ln_params(d_model)
    return {"self_attn": init_mha(k1, d_model),
            "fc1": init_linear(k2, d_model, d_ff),
            "fc2": init_linear(k3, d_ff, d_model),
            "ln1_g": g1, "ln1_b": b1, "ln2_g": g2, "ln2_b": b2}


def init_decoder_layer(key, d_model, d_ff):
    k1, k2, k3, k4 = jax.random.split(key, 4)
    g1, b1 = _ln_params(d_model)
    g2, b2 = _ln_params(d_model)
    g3, b3 = _ln_params(d_model)
    return {"self_attn": init_mha(k1, d_model),
            "cross_attn": init_mha(k2, d_model),
            "fc1": init_linear(k3, d_model, d_ff),
            "fc2": init_linear(k4, d_ff, d_model),
            "ln1_g": g1, "ln1_b": b1, "ln2_g": g2, "ln2_b": b2,
            "ln3_g": g3, "ln3_b": b3}


def positional_encoding_table(max_len, d_model):
    position = jnp.arange(max_len, dtype=jnp.float32)[:, None]
    div_term = jnp.exp(jnp.arange(0, d_model, 2, dtype=jnp.float32)
                       * (-math.log(10000.0) / d_model))
    pe = jnp.zeros((max_len, d_model), jnp.float32)
    pe = pe.at[:, 0::2].set(jnp.sin(position * div_term))
    pe = pe.at[:, 1::2].set(jnp.cos(position * div_term))
    return pe


def init_transformer(key, src_vocab, tgt_vocab, d_model, num_layers, d_ff,
                     max_seq_length):
    keys = jax.random.split(key, 3 + 2 * num_layers)
    return {
        "enc_emb": jax.random.normal(keys[0], (src_vocab, d_model), jnp.float32),
        "dec_emb": jax.random.normal(keys[1], (tgt_vocab, d_model), jnp.float32),
        "fc_out": init_linear(keys[2], d_model, tgt_vocab),
        "pe": positional_encoding_table(max_seq_length, d_model),
        "enc_layers": [init_encoder_layer(keys[3 + i], d_model, d_ff)
                       for i in range(num_layers)],
        "dec_layers": [init_decoder_layer(keys[3 + num_layers + i], d_model, d_ff)
                       for i in range(num_layers)],
    }


# ------------------------- pure-JAX reference --------------------------------

def ref_forward(params, src, tgt, d_model, num_heads):
    HI = jax.lax.Precision.HIGHEST

    def lin(p, x):
        return jnp.dot(x, p["w"], precision=HI) + p["b"]

    def ln(x, g, b):
        m = x.mean(-1, keepdims=True)
        v = ((x - m) ** 2).mean(-1, keepdims=True)
        return (x - m) / jnp.sqrt(v + 1e-5) * g + b

    def mha(p, q, k, v, mask):
        B, Sq, D = q.shape
        Sk = k.shape[1]
        dk = D // num_heads

        def sp(lp, x, S):
            return lin(lp, x).reshape(B, S, num_heads, dk).transpose(0, 2, 1, 3)

        Q, K, V = sp(p["wq"], q, Sq), sp(p["wk"], k, Sk), sp(p["wv"], v, Sk)
        s = jnp.einsum("bhqd,bhkd->bhqk", Q, K, precision=HI) / math.sqrt(dk)
        s = jnp.where(mask == 0, -1000000000.0, s)
        pr = jax.nn.softmax(s, axis=-1)
        o = jnp.einsum("bhqk,bhkd->bhqd", pr, V, precision=HI)
        return lin(p["wo"], o.transpose(0, 2, 1, 3).reshape(B, Sq, D))

    def ffw(p, x):
        return lin(p["fc2"], jax.nn.relu(lin(p["fc1"], x)))

    B, Ssrc = src.shape
    _, Stgt = tgt.shape
    src_mask = (src != 0)[:, None, None, :]
    causal = jnp.tril(jnp.ones((Stgt, Stgt), dtype=bool))
    tgt_mask = (tgt != 0)[:, None, :, None] & causal[None, None]
    scale = math.sqrt(d_model)
    pe = params["pe"]
    enc = params["enc_emb"][src] * scale + pe[:B][:, None, :]
    dec = params["dec_emb"][tgt] * scale + pe[:B][:, None, :]
    for p in params["enc_layers"]:
        a = mha(p["self_attn"], enc, enc, enc, src_mask)
        enc = ln(enc + a, p["ln1_g"], p["ln1_b"])
        enc = ln(enc + ffw(p, enc), p["ln2_g"], p["ln2_b"])
    for p in params["dec_layers"]:
        a = mha(p["self_attn"], dec, dec, dec, tgt_mask)
        dec = ln(dec + a, p["ln1_g"], p["ln1_b"])
        a = mha(p["cross_attn"], dec, enc, enc, src_mask)
        dec = ln(dec + a, p["ln2_g"], p["ln2_b"])
        dec = ln(dec + ffw(p, dec), p["ln3_g"], p["ln3_b"])
    return lin(params["fc_out"], dec)


# ------------------------------------ main -----------------------------------

if __name__ == "__main__":
    src_vocab, tgt_vocab = 11, 13
    d_model, num_heads, num_layers, d_ff = 32, 4, 2, 64
    max_seq_length = 64
    B, S = 2, 8

    key = jax.random.PRNGKey(0)
    pkey, skey, tkey = jax.random.split(key, 3)
    params = init_transformer(pkey, src_vocab, tgt_vocab, d_model, num_layers,
                              d_ff, max_seq_length)
    src = jax.random.randint(skey, (B, S), 0, src_vocab, dtype=jnp.int32)
    tgt = jax.random.randint(tkey, (B, S), 0, tgt_vocab, dtype=jnp.int32)

    prepared = prepare_params(params, num_heads)     # once, outside jit
    fwd = jax.jit(partial(transformer_forward, d_model=d_model,
                          num_heads=num_heads, tgt_vocab=tgt_vocab))
    out = fwd(prepared, src, tgt)
    jax.block_until_ready(out)
    assert out.shape == (B, S, tgt_vocab), out.shape

    ref = ref_forward(params, src, tgt, d_model, num_heads)
    err = float(jnp.max(jnp.abs(out - ref)))
    # tolerance covers the EUP approximate reciprocal in the softmax
    # denominator; everything else is f32 math with f32 accumulation.
    assert err < 2e-2, f"max abs err {err}"
    print("KERNEL_OK")
</pallas_src>

<mosaic_0001>
module attributes {stable_mosaic.version = 11 : i64} {
  func.func @_linear_kernel(%arg0: i32, %arg1: i32, %arg2: memref<16x32xf32, #tpu.memory_space<vmem>>, %arg3: memref<32x96xf32, #tpu.memory_space<vmem>>, %arg4: memref<1x96xf32, #tpu.memory_space<vmem>>, %arg5: memref<16x96xf32, #tpu.memory_space<vmem>>) attributes {dimension_semantics = [#tpu.dimension_semantics<parallel>, #tpu.dimension_semantics<parallel>], iteration_bounds = array<i64: 1, 1>, scalar_prefetch = 0 : i64, scratch_operands = 0 : i64, tpu.core_type = #tpu.core_type<tc>, window_params = [{transform_indices = @transform_0, window_bounds = array<i64: 16, 32>}, {transform_indices = @transform_1, window_bounds = array<i64: 32, 96>}, {transform_indices = @transform_2, window_bounds = array<i64: 1, 96>}, {transform_indices = @transform_3, window_bounds = array<i64: 16, 96>}]} {
    %c0 = arith.constant 0 : index
    %c0_0 = arith.constant 0 : index
    %0 = vector.load %arg2[%c0, %c0_0] : memref<16x32xf32, #tpu.memory_space<vmem>>, vector<16x32xf32>
    %c0_1 = arith.constant 0 : index
    %c0_2 = arith.constant 0 : index
    %1 = vector.load %arg3[%c0_1, %c0_2] : memref<32x96xf32, #tpu.memory_space<vmem>>, vector<32x96xf32>
    %cst = arith.constant dense<0.000000e+00> : vector<16x96xf32>
    %2 = tpu.matmul %0, %1, %cst {dimension_numbers = #tpu.dot_dimension_numbers<[1], [0], [0], [1], [0, 0, 1, 1], [], []>} : vector<16x32xf32>, vector<32x96xf32>, vector<16x96xf32> -> vector<16x96xf32>
    %c0_3 = arith.constant 0 : index
    %c0_4 = arith.constant 0 : index
    %3 = vector.load %arg4[%c0_3, %c0_4] : memref<1x96xf32, #tpu.memory_space<vmem>>, vector<1x96xf32>
    %4 = vector.broadcast %3 : vector<1x96xf32> to vector<16x96xf32>
    %5 = arith.addf %2, %4 : vector<16x96xf32>
    %c0_5 = arith.constant 0 : index
    %c0_6 = arith.constant 0 : index
    %6 = vector.load %arg5[%c0_5, %c0_6] : memref<16x96xf32, #tpu.memory_space<vmem>>, vector<16x96xf32>
    tpu.vector_store %arg5[%c0_5, %c0_6], %5 {strides = array<i32>} : memref<16x96xf32, #tpu.memory_space<vmem>>, vector<16x96xf32>,
    return
  }
  func.func @transform_0(%arg0: i32, %arg1: i32) -> (i32, i32) {
    %c0_i32 = arith.constant 0 : i32
    %c0_i32_0 = arith.constant 0 : i32
    return %arg1, %c0_i32 : i32, i32
  }
  func.func @transform_1(%arg0: i32, %arg1: i32) -> (i32, i32) {
    %c0_i32 = arith.constant 0 : i32
    %c0_i32_0 = arith.constant 0 : i32
    return %c0_i32, %arg0 : i32, i32
  }
  func.func @transform_2(%arg0: i32, %arg1: i32) -> (i32, i32) {
    %c0_i32 = arith.constant 0 : i32
    %c0_i32_0 = arith.constant 0 : i32
    return %c0_i32, %arg0 : i32, i32
  }
  func.func @transform_3(%arg0: i32, %arg1: i32) -> (i32, i32) {
    %c0_i32 = arith.constant 0 : i32
    return %arg1, %arg0 : i32, i32
  }
}

module attributes {stable_mosaic.version = 11 : i64} {
  func.func @_mha_flash_kernel(%arg0: i32, %arg1: i32, %arg2: i32, %arg3: memref<1x8x1xf32, #tpu.memory_space<vmem>>, %arg4: memref<1x1x8xf32, #tpu.memory_space<vmem>>, %arg5: memref<1x4x8x8xf32, #tpu.memory_space<vmem>>, %arg6: memref<1x4x8x8xf32, #tpu.memory_space<vmem>>, %arg7: memref<1x4x8x8xf32, #tpu.memory_space<vmem>>, %arg8: memref<1x4x8x8xf32, #tpu.memory_space<vmem>>, %arg9: memref<4x8x1xf32, #tpu.memory_space<vmem>>, %arg10: memref<4x8x1xf32, #tpu.memory_space<vmem>>, %arg11: memref<4x8x8xf32, #tpu.memory_space<vmem>>) attributes {dimension_semantics = [#tpu.dimension_semantics<parallel>, #tpu.dimension_semantics<parallel>, #tpu.dimension_semantics<arbitrary>], iteration_bounds = array<i64: 2, 1, 1>, scalar_prefetch = 0 : i64, scratch_operands = 3 : i64, tpu.core_type = #tpu.core_type<tc>, window_params = [{transform_indices = @transform_0, window_bounds = array<i64: 1, 8, 1>}, {transform_indices = @transform_1, window_bounds = array<i64: 1, 1, 8>}, {transform_indices = @transform_2, window_bounds = array<i64: 1, 4, 8, 8>}, {transform_indices = @transform_3, window_bounds = array<i64: 1, 4, 8, 8>}, {transform_indices = @transform_4, window_bounds = array<i64: 1, 4, 8, 8>}, {transform_indices = @transform_5, window_bounds = array<i64: 1, 4, 8, 8>}]} {
    %c0_i32 = arith.constant 0 : i32
    %0 = arith.cmpi eq, %arg2, %c0_i32 : i32
    %1 = arith.extui %0 : i1 to i32
    %c0_i32_0 = arith.constant 0 : i32
    %2 = arith.cmpi ne, %1, %c0_i32_0 : i32
    scf.if %2 {
      %cst_44 = arith.constant 0xFF800000 : f32
      %51 = vector.broadcast %cst_44 : f32 to vector<4x8x1xf32>
      %c0_45 = arith.constant 0 : index
      %c0_46 = arith.constant 0 : index
      %c0_47 = arith.constant 0 : index
      %52 = vector.load %arg9[%c0_45, %c0_46, %c0_47] : memref<4x8x1xf32, #tpu.memory_space<vmem>>, vector<4x8x1xf32>
      tpu.vector_store %arg9[%c0_45, %c0_46, %c0_47], %51 {strides = array<i32>} : memref<4x8x1xf32, #tpu.memory_space<vmem>>, vector<4x8x1xf32>,
      %cst_48 = arith.constant 0.000000e+00 : f32
      %53 = vector.broadcast %cst_48 : f32 to vector<4x8x1xf32>
      %c0_49 = arith.constant 0 : index
      %c0_50 = arith.constant 0 : index
      %c0_51 = arith.constant 0 : index
      %54 = vector.load %arg10[%c0_49, %c0_50, %c0_51] : memref<4x8x1xf32, #tpu.memory_space<vmem>>, vector<4x8x1xf32>
      tpu.vector_store %arg10[%c0_49, %c0_50, %c0_51], %53 {strides = array<i32>} : memref<4x8x1xf32, #tpu.memory_space<vmem>>, vector<4x8x1xf32>,
      %cst_52 = arith.constant 0.000000e+00 : f32
      %55 = vector.broadcast %cst_52 : f32 to vector<4x8x8xf32>
      %c0_53 = arith.constant 0 : index
      %c0_54 = arith.constant 0 : index
      %c0_55 = arith.constant 0 : index
      %56 = vector.load %arg11[%c0_53, %c0_54, %c0_55] : memref<4x8x8xf32, #tpu.memory_space<vmem>>, vector<4x8x8xf32>
      tpu.vector_store %arg11[%c0_53, %c0_54, %c0_55], %55 {strides = array<i32>} : memref<4x8x8xf32, #tpu.memory_space<vmem>>, vector<4x8x8xf32>,
    } else {
    }
    %c0 = arith.constant 0 : index
    %c0_1 = arith.constant 0 : index
    %c0_2 = arith.constant 0 : index
    %c0_3 = arith.constant 0 : index
    %3 = vector.load %arg5[%c0, %c0_1, %c0_2, %c0_3] : memref<1x4x8x8xf32, #tpu.memory_space<vmem>>, vector<1x4x8x8xf32>
    %4 = vector.shape_cast %3 : vector<1x4x8x8xf32> to vector<4x8x8xf32>
    %c0_4 = arith.constant 0 : index
    %c0_5 = arith.constant 0 : index
    %c0_6 = arith.constant 0 : index
    %c0_7 = arith.constant 0 : index
    %5 = vector.load %arg6[%c0_4, %c0_5, %c0_6, %c0_7] : memref<1x4x8x8xf32, #tpu.memory_space<vmem>>, vector<1x4x8x8xf32>
    %6 = vector.shape_cast %5 : vector<1x4x8x8xf32> to vector<4x8x8xf32>
    %c0_8 = arith.constant 0 : index
    %c0_9 = arith.constant 0 : index
    %c0_10 = arith.constant 0 : index
    %c0_11 = arith.constant 0 : index
    %7 = vector.load %arg7[%c0_8, %c0_9, %c0_10, %c0_11] : memref<1x4x8x8xf32, #tpu.memory_space<vmem>>, vector<1x4x8x8xf32>
    %8 = vector.shape_cast %7 : vector<1x4x8x8xf32> to vector<4x8x8xf32>
    "tpu.trace_start"() <{level = 10 : i32, message = "hqd,hkd->hqk"}> : () -> ()
    %cst = arith.constant dense<0.000000e+00> : vector<4x8x8xf32>
    %9 = tpu.matmul %4, %6, %cst {dimension_numbers = #tpu.dot_dimension_numbers<[2], [2], [1], [1], [0, 0, 0, 1, 1, 1], [0], [0]>} : vector<4x8x8xf32>, vector<4x8x8xf32>, vector<4x8x8xf32> -> vector<4x8x8xf32>
    "tpu.trace_stop"() : () -> ()
    %c0_12 = arith.constant 0 : index
    %c0_13 = arith.constant 0 : index
    %c0_14 = arith.constant 0 : index
    %10 = vector.load %arg3[%c0_12, %c0_13, %c0_14] : memref<1x8x1xf32, #tpu.memory_space<vmem>>, vector<1x8x1xf32>
    %11 = vector.shape_cast %10 : vector<1x8x1xf32> to vector<8x1xf32>
    %cst_15 = arith.constant 0.000000e+00 : f32
    %12 = vector.broadcast %cst_15 : f32 to vector<8x1xf32>
    %13 = arith.cmpf one, %11, %12 : vector<8x1xf32>
    %c0_16 = arith.constant 0 : index
    %c0_17 = arith.constant 0 : index
    %c0_18 = arith.constant 0 : index
    %14 = vector.load %arg4[%c0_16, %c0_17, %c0_18] : memref<1x1x8xf32, #tpu.memory_space<vmem>>, vector<1x1x8xf32>
    %15 = vector.shape_cast %14 : vector<1x1x8xf32> to vector<1x8xf32>
    %cst_19 = arith.constant 0.000000e+00 : f32
    %16 = vector.broadcast %cst_19 : f32 to vector<1x8xf32>
    %17 = arith.cmpf one, %15, %16 : vector<1x8xf32>
    %18 = vector.broadcast %13 : vector<8x1xi1> to vector<8x8xi1>
    %19 = vector.broadcast %17 : vector<1x8xi1> to vector<8x8xi1>
    %20 = arith.andi %18, %19 : vector<8x8xi1>
    %21 = vector.shape_cast %20 : vector<8x8xi1> to vector<1x8x8xi1>
    %cst_20 = arith.constant -1.000000e+09 : f32
    %22 = vector.shape_cast %21 : vector<1x8x8xi1> to vector<1x8x8xi1>
    %23 = vector.broadcast %22 : vector<1x8x8xi1> to vector<4x8x8xi1>
    %24 = vector.broadcast %cst_20 : f32 to vector<4x8x8xf32>
    %25 = arith.select %23, %9, %24 : vector<4x8x8xi1>, vector<4x8x8xf32>
    %c0_21 = arith.constant 0 : index
    %c0_22 = arith.constant 0 : index
    %c0_23 = arith.constant 0 : index
    %26 = vector.load %arg9[%c0_21, %c0_22, %c0_23] : memref<4x8x1xf32, #tpu.memory_space<vmem>>, vector<4x8x1xf32>
    %cst_24 = arith.constant dense<0xFF800000> : vector<4x8xf32>
    %27 = vector.multi_reduction <maximumf>, %25, %cst_24 [2] : vector<4x8x8xf32> to vector<4x8xf32>
    %28 = vector.shape_cast %27 : vector<4x8xf32> to vector<4x8x1xf32>
    %29 = arith.maximumf %26, %28 : vector<4x8x1xf32>
    %30 = arith.subf %26, %29 : vector<4x8x1xf32>
    %31 = math.exp %30 : vector<4x8x1xf32>
    %32 = vector.broadcast %29 : vector<4x8x1xf32> to vector<4x8x8xf32>
    %33 = arith.subf %25, %32 : vector<4x8x8xf32>
    %34 = math.exp %33 : vector<4x8x8xf32>
    %c0_25 = arith.constant 0 : index
    %c0_26 = arith.constant 0 : index
    %c0_27 = arith.constant 0 : index
    %35 = vector.load %arg10[%c0_25, %c0_26, %c0_27] : memref<4x8x1xf32, #tpu.memory_space<vmem>>, vector<4x8x1xf32>
    %36 = arith.mulf %31, %35 : vector<4x8x1xf32>
    %cst_28 = arith.constant dense<0.000000e+00> : vector<4x8xf32>
    %37 = vector.multi_reduction <add>, %34, %cst_28 [2] : vector<4x8x8xf32> to vector<4x8xf32>
    %38 = vector.shape_cast %37 : vector<4x8xf32> to vector<4x8x1xf32>
    %39 = arith.addf %36, %38 : vector<4x8x1xf32>
    %c0_29 = arith.constant 0 : index
    %c0_30 = arith.constant 0 : index
    %c0_31 = arith.constant 0 : index
    %40 = vector.load %arg10[%c0_29, %c0_30, %c0_31] : memref<4x8x1xf32, #tpu.memory_space<vmem>>, vector<4x8x1xf32>
    tpu.vector_store %arg10[%c0_29, %c0_30, %c0_31], %39 {strides = array<i32>} : memref<4x8x1xf32, #tpu.memory_space<vmem>>, vector<4x8x1xf32>,
    %c0_32 = arith.constant 0 : index
    %c0_33 = arith.constant 0 : index
    %c0_34 = arith.constant 0 : index
    %41 = vector.load %arg11[%c0_32, %c0_33, %c0_34] : memref<4x8x8xf32, #tpu.memory_space<vmem>>, vector<4x8x8xf32>
    %42 = vector.broadcast %31 : vector<4x8x1xf32> to vector<4x8x8xf32>
    %43 = arith.mulf %42, %41 : vector<4x8x8xf32>
    "tpu.trace_start"() <{level = 10 : i32, message = "hqk,hkd->hqd"}> : () -> ()
    %cst_35 = arith.constant dense<0.000000e+00> : vector<4x8x8xf32>
    %44 = tpu.matmul %34, %8, %cst_35 {dimension_numbers = #tpu.dot_dimension_numbers<[2], [1], [1], [2], [0, 0, 0, 1, 1, 2], [0], [0]>} : vector<4x8x8xf32>, vector<4x8x8xf32>, vector<4x8x8xf32> -> vector<4x8x8xf32>
    "tpu.trace_stop"() : () -> ()
    %45 = arith.addf %43, %44 : vector<4x8x8xf32>
    %c0_36 = arith.constant 0 : index
    %c0_37 = arith.constant 0 : index
    %c0_38 = arith.constant 0 : index
    %46 = vector.load %arg11[%c0_36, %c0_37, %c0_38] : memref<4x8x8xf32, #tpu.memory_space<vmem>>, vector<4x8x8xf32>
    tpu.vector_store %arg11[%c0_36, %c0_37, %c0_38], %45 {strides = array<i32>} : memref<4x8x8xf32, #tpu.memory_space<vmem>>, vector<4x8x8xf32>,
    %c0_39 = arith.constant 0 : index
    %c0_40 = arith.constant 0 : index
    %c0_41 = arith.constant 0 : index
    %47 = vector.load %arg9[%c0_39, %c0_40, %c0_41] : memref<4x8x1xf32, #tpu.memory_space<vmem>>, vector<4x8x1xf32>
    tpu.vector_store %arg9[%c0_39, %c0_40, %c0_41], %29 {strides = array<i32>} : memref<4x8x1xf32, #tpu.memory_space<vmem>>, vector<4x8x1xf32>,
    %c0_i32_42 = arith.constant 0 : i32
    %48 = arith.cmpi eq, %arg2, %c0_i32_42 : i32
    %49 = arith.extui %48 : i1 to i32
    %c0_i32_43 = arith.constant 0 : i32
    %50 = arith.cmpi ne, %49, %c0_i32_43 : i32
    scf.if %50 {
      %c0_44 = arith.constant 0 : index
      %c0_45 = arith.constant 0 : index
      %c0_46 = arith.constant 0 : index
      %51 = vector.load %arg11[%c0_44, %c0_45, %c0_46] : memref<4x8x8xf32, #tpu.memory_space<vmem>>, vector<4x8x8xf32>
      %c0_47 = arith.constant 0 : index
      %c0_48 = arith.constant 0 : index
      %c0_49 = arith.constant 0 : index
      %52 = vector.load %arg10[%c0_47, %c0_48, %c0_49] : memref<4x8x1xf32, #tpu.memory_space<vmem>>, vector<4x8x1xf32>
      %53 = tpu.reciprocal %52 {approx = true} : vector<4x8x1xf32> -> vector<4x8x1xf32>
      %54 = vector.broadcast %53 : vector<4x8x1xf32> to vector<4x8x8xf32>
      %55 = arith.mulf %51, %54 : vector<4x8x8xf32>
      %c0_50 = arith.constant 0 : index
      %c0_51 = arith.constant 0 : index
      %c0_52 = arith.constant 0 : index
      %c0_53 = arith.constant 0 : index
      %56 = vector.load %arg8[%c0_50, %c0_51, %c0_52, %c0_53] : memref<1x4x8x8xf32, #tpu.memory_space<vmem>>, vector<1x4x8x8xf32>
      %57 = vector.shape_cast %56 : vector<1x4x8x8xf32> to vector<4x8x8xf32>
      %58 = vector.shape_cast %55 : vector<4x8x8xf32> to vector<1x4x8x8xf32>
      tpu.vector_store %arg8[%c0_50, %c0_51, %c0_52, %c0_53], %58 {strides = array<i32>} : memref<1x4x8x8xf32, #tpu.memory_space<vmem>>, vector<1x4x8x8xf32>,
    } else {
    }
    return
  }
  func.func @transform_0(%arg0: i32, %arg1: i32, %arg2: i32) -> (i32, i32, i32) {
    %c0_i32 = arith.constant 0 : i32
    %c0_i32_0 = arith.constant 0 : i32
    return %arg0, %arg1, %c0_i32 : i32, i32, i32
  }
  func.func @transform_1(%arg0: i32, %arg1: i32, %arg2: i32) -> (i32, i32, i32) {
    %c0_i32 = arith.constant 0 : i32
    %c0_i32_0 = arith.constant 0 : i32
    return %arg0, %c0_i32, %arg2 : i32, i32, i32
  }
  func.func @transform_2(%arg0: i32, %arg1: i32, %arg2: i32) -> (i32, i32, i32, i32) {
    %c0_i32 = arith.constant 0 : i32
    %c0_i32_0 = arith.constant 0 : i32
    %c0_i32_1 = arith.constant 0 : i32
    return %arg0, %c0_i32, %arg1, %c0_i32_0 : i32, i32, i32, i32
  }
  func.func @transform_3(%arg0: i32, %arg1: i32, %arg2: i32) -> (i32, i32, i32, i32) {
    %c0_i32 = arith.constant 0 : i32
    %c0_i32_0 = arith.constant 0 : i32
    %c0_i32_1 = arith.constant 0 : i32
    return %arg0, %c0_i32, %arg2, %c0_i32_0 : i32, i32, i32, i32
  }
  func.func @transform_4(%arg0: i32, %arg1: i32, %arg2: i32) -> (i32, i32, i32, i32) {
    %c0_i32 = arith.constant 0 : i32
    %c0_i32_0 = arith.constant 0 : i32
    %c0_i32_1 = arith.constant 0 : i32
    return %arg0, %c0_i32, %arg2, %c0_i32_0 : i32, i32, i32, i32
  }
  func.func @transform_5(%arg0: i32, %arg1: i32, %arg2: i32) -> (i32, i32, i32, i32) {
    %c0_i32 = arith.constant 0 : i32
    %c0_i32_0 = arith.constant 0 : i32
    %c0_i32_1 = arith.constant 0 : i32
    return %arg0, %c0_i32, %arg1, %c0_i32_0 : i32, i32, i32, i32
  }
}

module attributes {stable_mosaic.version = 11 : i64} {
  func.func @_proj_add_ln_kernel(%arg0: i32, %arg1: memref<16x32xf32, #tpu.memory_space<vmem>>, %arg2: memref<32x32xf32, #tpu.memory_space<vmem>>, %arg3: memref<1x32xf32, #tpu.memory_space<vmem>>, %arg4: memref<16x32xf32, #tpu.memory_space<vmem>>, %arg5: memref<1x32xf32, #tpu.memory_space<vmem>>, %arg6: memref<1x32xf32, #tpu.memory_space<vmem>>, %arg7: memref<16x32xf32, #tpu.memory_space<vmem>>) attributes {dimension_semantics = [#tpu.dimension_semantics<parallel>], iteration_bounds = array<i64: 1>, scalar_prefetch = 0 : i64, scratch_operands = 0 : i64, tpu.core_type = #tpu.core_type<tc>, window_params = [{transform_indices = @transform_0, window_bounds = array<i64: 16, 32>}, {pipeline_mode = #tpu.pipeline_mode<synchronous>, transform_indices = @transform_1, window_bounds = array<i64: 32, 32>}, {pipeline_mode = #tpu.pipeline_mode<synchronous>, transform_indices = @transform_2, window_bounds = array<i64: 1, 32>}, {transform_indices = @transform_3, window_bounds = array<i64: 16, 32>}, {pipeline_mode = #tpu.pipeline_mode<synchronous>, transform_indices = @transform_4, window_bounds = array<i64: 1, 32>}, {pipeline_mode = #tpu.pipeline_mode<synchronous>, transform_indices = @transform_5, window_bounds = array<i64: 1, 32>}, {transform_indices = @transform_6, window_bounds = array<i64: 16, 32>}]} {
    %c0 = arith.constant 0 : index
    %c0_0 = arith.constant 0 : index
    %0 = vector.load %arg1[%c0, %c0_0] : memref<16x32xf32, #tpu.memory_space<vmem>>, vector<16x32xf32>
    %c0_1 = arith.constant 0 : index
    %c0_2 = arith.constant 0 : index
    %1 = vector.load %arg2[%c0_1, %c0_2] : memref<32x32xf32, #tpu.memory_space<vmem>>, vector<32x32xf32>
    %cst = arith.constant dense<0.000000e+00> : vector<16x32xf32>
    %2 = tpu.matmul %0, %1, %cst {dimension_numbers = #tpu.dot_dimension_numbers<[1], [0], [0], [1], [0, 0, 1, 1], [], []>} : vector<16x32xf32>, vector<32x32xf32>, vector<16x32xf32> -> vector<16x32xf32>
    %c0_3 = arith.constant 0 : index
    %c0_4 = arith.constant 0 : index
    %3 = vector.load %arg3[%c0_3, %c0_4] : memref<1x32xf32, #tpu.memory_space<vmem>>, vector<1x32xf32>
    %4 = vector.broadcast %3 : vector<1x32xf32> to vector<16x32xf32>
    %5 = arith.addf %2, %4 : vector<16x32xf32>
    %c0_5 = arith.constant 0 : index
    %c0_6 = arith.constant 0 : index
    %6 = vector.load %arg4[%c0_5, %c0_6] : memref<16x32xf32, #tpu.memory_space<vmem>>, vector<16x32xf32>
    %7 = arith.addf %6, %5 : vector<16x32xf32>
    %cst_7 = arith.constant dense<0.000000e+00> : vector<16xf32>
    %8 = vector.multi_reduction <add>, %7, %cst_7 [1] : vector<16x32xf32> to vector<16xf32>
    %9 = vector.shape_cast %8 : vector<16xf32> to vector<16x1xf32>
    %cst_8 = arith.constant 3.200000e+01 : f32
    %10 = vector.broadcast %cst_8 : f32 to vector<16x1xf32>
    %11 = arith.divf %9, %10 : vector<16x1xf32>
    %12 = vector.broadcast %11 : vector<16x1xf32> to vector<16x32xf32>
    %13 = arith.subf %7, %12 : vector<16x32xf32>
    %14 = arith.mulf %13, %13 : vector<16x32xf32>
    %cst_9 = arith.constant dense<0.000000e+00> : vector<16xf32>
    %15 = vector.multi_reduction <add>, %14, %cst_9 [1] : vector<16x32xf32> to vector<16xf32>
    %16 = vector.shape_cast %15 : vector<16xf32> to vector<16x1xf32>
    %cst_10 = arith.constant 3.200000e+01 : f32
    %17 = vector.broadcast %cst_10 : f32 to vector<16x1xf32>
    %18 = arith.divf %16, %17 : vector<16x1xf32>
    %19 = vector.broadcast %11 : vector<16x1xf32> to vector<16x32xf32>
    %20 = arith.subf %7, %19 : vector<16x32xf32>
    %cst_11 = arith.constant 9.99999974E-6 : f32
    %21 = vector.broadcast %cst_11 : f32 to vector<16x1xf32>
    %22 = arith.addf %18, %21 : vector<16x1xf32>
    %23 = math.rsqrt %22 : vector<16x1xf32>
    %24 = vector.broadcast %23 : vector<16x1xf32> to vector<16x32xf32>
    %25 = arith.mulf %20, %24 : vector<16x32xf32>
    %c0_12 = arith.constant 0 : index
    %c0_13 = arith.constant 0 : index
    %26 = vector.load %arg5[%c0_12, %c0_13] : memref<1x32xf32, #tpu.memory_space<vmem>>, vector<1x32xf32>
    %27 = vector.broadcast %26 : vector<1x32xf32> to vector<16x32xf32>
    %28 = arith.mulf %25, %27 : vector<16x32xf32>
    %c0_14 = arith.constant 0 : index
    %c0_15 = arith.constant 0 : index
    %29 = vector.load %arg6[%c0_14, %c0_15] : memref<1x32xf32, #tpu.memory_space<vmem>>, vector<1x32xf32>
    %30 = vector.broadcast %29 : vector<1x32xf32> to vector<16x32xf32>
    %31 = arith.addf %28, %30 : vector<16x32xf32>
    %c0_16 = arith.constant 0 : index
    %c0_17 = arith.constant 0 : index
    %32 = vector.load %arg7[%c0_16, %c0_17] : memref<16x32xf32, #tpu.memory_space<vmem>>, vector<16x32xf32>
    tpu.vector_store %arg7[%c0_16, %c0_17], %31 {strides = array<i32>} : memref<16x32xf32, #tpu.memory_space<vmem>>, vector<16x32xf32>,
    return
  }
  func.func @transform_0(%arg0: i32) -> (i32, i32) {
    %c0_i32 = arith.constant 0 : i32
    %c0_i32_0 = arith.constant 0 : i32
    return %arg0, %c0_i32 : i32, i32
  }
  func.func @transform_1(%arg0: i32) -> (i32, i32) {
    %c0_i32 = arith.constant 0 : i32
    %c0_i32_0 = arith.constant 0 : i32
    %c0_i32_1 = arith.constant 0 : i32
    return %c0_i32, %c0_i32_0 : i32, i32
  }
  func.func @transform_2(%arg0: i32) -> (i32, i32) {
    %c0_i32 = arith.constant 0 : i32
    %c0_i32_0 = arith.constant 0 : i32
    %c0_i32_1 = arith.constant 0 : i32
    return %c0_i32, %c0_i32_0 : i32, i32
  }
  func.func @transform_3(%arg0: i32) -> (i32, i32) {
    %c0_i32 = arith.constant 0 : i32
    %c0_i32_0 = arith.constant 0 : i32
    return %arg0, %c0_i32 : i32, i32
  }
  func.func @transform_4(%arg0: i32) -> (i32, i32) {
    %c0_i32 = arith.constant 0 : i32
    %c0_i32_0 = arith.constant 0 : i32
    %c0_i32_1 = arith.constant 0 : i32
    return %c0_i32, %c0_i32_0 : i32, i32
  }
  func.func @transform_5(%arg0: i32) -> (i32, i32) {
    %c0_i32 = arith.constant 0 : i32
    %c0_i32_0 = arith.constant 0 : i32
    %c0_i32_1 = arith.constant 0 : i32
    return %c0_i32, %c0_i32_0 : i32, i32
  }
  func.func @transform_6(%arg0: i32) -> (i32, i32) {
    %c0_i32 = arith.constant 0 : i32
    %c0_i32_0 = arith.constant 0 : i32
    return %arg0, %c0_i32 : i32, i32
  }
}

module attributes {stable_mosaic.version = 11 : i64} {
  func.func @_ffn_add_ln_kernel(%arg0: i32, %arg1: i32, %arg2: memref<16x32xf32, #tpu.memory_space<vmem>>, %arg3: memref<32x64xf32, #tpu.memory_space<vmem>>, %arg4: memref<1x64xf32, #tpu.memory_space<vmem>>, %arg5: memref<64x32xf32, #tpu.memory_space<vmem>>, %arg6: memref<1x32xf32, #tpu.memory_space<vmem>>, %arg7: memref<1x32xf32, #tpu.memory_space<vmem>>, %arg8: memref<1x32xf32, #tpu.memory_space<vmem>>, %arg9: memref<16x32xf32, #tpu.memory_space<vmem>>, %arg10: memref<16x32xf32, #tpu.memory_space<vmem>>) attributes {dimension_semantics = [#tpu.dimension_semantics<parallel>, #tpu.dimension_semantics<arbitrary>], iteration_bounds = array<i64: 1, 1>, scalar_prefetch = 0 : i64, scratch_operands = 1 : i64, tpu.core_type = #tpu.core_type<tc>, window_params = [{transform_indices = @transform_0, window_bounds = array<i64: 16, 32>}, {transform_indices = @transform_1, window_bounds = array<i64: 32, 64>}, {transform_indices = @transform_2, window_bounds = array<i64: 1, 64>}, {transform_indices = @transform_3, window_bounds = array<i64: 64, 32>}, {pipeline_mode = #tpu.pipeline_mode<synchronous>, transform_indices = @transform_4, window_bounds = array<i64: 1, 32>}, {pipeline_mode = #tpu.pipeline_mode<synchronous>, transform_indices = @transform_5, window_bounds = array<i64: 1, 32>}, {pipeline_mode = #tpu.pipeline_mode<synchronous>, transform_indices = @transform_6, window_bounds = array<i64: 1, 32>}, {transform_indices = @transform_7, window_bounds = array<i64: 16, 32>}]} {
    %c0_i32 = arith.constant 0 : i32
    %0 = arith.cmpi eq, %arg1, %c0_i32 : i32
    %1 = arith.extui %0 : i1 to i32
    %c0_i32_0 = arith.constant 0 : i32
    %2 = arith.cmpi ne, %1, %c0_i32_0 : i32
    scf.if %2 {
      %cst_16 = arith.constant 0.000000e+00 : f32
      %19 = vector.broadcast %cst_16 : f32 to vector<16x32xf32>
      %c0_17 = arith.constant 0 : index
      %c0_18 = arith.constant 0 : index
      %20 = vector.load %arg10[%c0_17, %c0_18] : memref<16x32xf32, #tpu.memory_space<vmem>>, vector<16x32xf32>
      tpu.vector_store %arg10[%c0_17, %c0_18], %19 {strides = array<i32>} : memref<16x32xf32, #tpu.memory_space<vmem>>, vector<16x32xf32>,
    } else {
    }
    %c0 = arith.constant 0 : index
    %c0_1 = arith.constant 0 : index
    %3 = vector.load %arg2[%c0, %c0_1] : memref<16x32xf32, #tpu.memory_space<vmem>>, vector<16x32xf32>
    %c0_2 = arith.constant 0 : index
    %c0_3 = arith.constant 0 : index
    %4 = vector.load %arg3[%c0_2, %c0_3] : memref<32x64xf32, #tpu.memory_space<vmem>>, vector<32x64xf32>
    %cst = arith.constant dense<0.000000e+00> : vector<16x64xf32>
    %5 = tpu.matmul %3, %4, %cst {dimension_numbers = #tpu.dot_dimension_numbers<[1], [0], [0], [1], [0, 0, 1, 1], [], []>} : vector<16x32xf32>, vector<32x64xf32>, vector<16x64xf32> -> vector<16x64xf32>
    %c0_4 = arith.constant 0 : index
    %c0_5 = arith.constant 0 : index
    %6 = vector.load %arg4[%c0_4, %c0_5] : memref<1x64xf32, #tpu.memory_space<vmem>>, vector<1x64xf32>
    %7 = vector.broadcast %6 : vector<1x64xf32> to vector<16x64xf32>
    %8 = arith.addf %5, %7 : vector<16x64xf32>
    %cst_6 = arith.constant 0.000000e+00 : f32
    %9 = vector.broadcast %cst_6 : f32 to vector<16x64xf32>
    %10 = arith.maximumf %8, %9 : vector<16x64xf32>
    %c0_7 = arith.constant 0 : index
    %c0_8 = arith.constant 0 : index
    %11 = vector.load %arg10[%c0_7, %c0_8] : memref<16x32xf32, #tpu.memory_space<vmem>>, vector<16x32xf32>
    %c0_9 = arith.constant 0 : index
    %c0_10 = arith.constant 0 : index
    %12 = vector.load %arg5[%c0_9, %c0_10] : memref<64x32xf32, #tpu.memory_space<vmem>>, vector<64x32xf32>
    %cst_11 = arith.constant dense<0.000000e+00> : vector<16x32xf32>
    %13 = tpu.matmul %10, %12, %cst_11 {dimension_numbers = #tpu.dot_dimension_numbers<[1], [0], [0], [1], [0, 0, 1, 1], [], []>} : vector<16x64xf32>, vector<64x32xf32>, vector<16x32xf32> -> vector<16x32xf32>
    %14 = arith.addf %11, %13 : vector<16x32xf32>
    %c0_12 = arith.constant 0 : index
    %c0_13 = arith.constant 0 : index
    %15 = vector.load %arg10[%c0_12, %c0_13] : memref<16x32xf32, #tpu.memory_space<vmem>>, vector<16x32xf32>
    tpu.vector_store %arg10[%c0_12, %c0_13], %14 {strides = array<i32>} : memref<16x32xf32, #tpu.memory_space<vmem>>, vector<16x32xf32>,
    %c0_i32_14 = arith.constant 0 : i32
    %16 = arith.cmpi eq, %arg1, %c0_i32_14 : i32
    %17 = arith.extui %16 : i1 to i32
    %c0_i32_15 = arith.constant 0 : i32
    %18 = arith.cmpi ne, %17, %c0_i32_15 : i32
    scf.if %18 {
      %c0_16 = arith.constant 0 : index
      %c0_17 = arith.constant 0 : index
      %19 = vector.load %arg2[%c0_16, %c0_17] : memref<16x32xf32, #tpu.memory_space<vmem>>, vector<16x32xf32>
      %c0_18 = arith.constant 0 : index
      %c0_19 = arith.constant 0 : index
      %20 = vector.load %arg10[%c0_18, %c0_19] : memref<16x32xf32, #tpu.memory_space<vmem>>, vector<16x32xf32>
      %21 = arith.addf %19, %20 : vector<16x32xf32>
      %c0_20 = arith.constant 0 : index
      %c0_21 = arith.constant 0 : index
      %22 = vector.load %arg6[%c0_20, %c0_21] : memref<1x32xf32, #tpu.memory_space<vmem>>, vector<1x32xf32>
      %23 = vector.broadcast %22 : vector<1x32xf32> to vector<16x32xf32>
      %24 = arith.addf %21, %23 : vector<16x32xf32>
      %cst_22 = arith.constant dense<0.000000e+00> : vector<16xf32>
      %25 = vector.multi_reduction <add>, %24, %cst_22 [1] : vector<16x32xf32> to vector<16xf32>
      %26 = vector.shape_cast %25 : vector<16xf32> to vector<16x1xf32>
      %cst_23 = arith.constant 3.200000e+01 : f32
      %27 = vector.broadcast %cst_23 : f32 to vector<16x1xf32>
      %28 = arith.divf %26, %27 : vector<16x1xf32>
      %29 = vector.broadcast %28 : vector<16x1xf32> to vector<16x32xf32>
      %30 = arith.subf %24, %29 : vector<16x32xf32>
      %31 = arith.mulf %30, %30 : vector<16x32xf32>
      %cst_24 = arith.constant dense<0.000000e+00> : vector<16xf32>
      %32 = vector.multi_reduction <add>, %31, %cst_24 [1] : vector<16x32xf32> to vector<16xf32>
      %33 = vector.shape_cast %32 : vector<16xf32> to vector<16x1xf32>
      %cst_25 = arith.constant 3.200000e+01 : f32
      %34 = vector.broadcast %cst_25 : f32 to vector<16x1xf32>
      %35 = arith.divf %33, %34 : vector<16x1xf32>
      %36 = vector.broadcast %28 : vector<16x1xf32> to vector<16x32xf32>
      %37 = arith.subf %24, %36 : vector<16x32xf32>
      %cst_26 = arith.constant 9.99999974E-6 : f32
      %38 = vector.broadcast %cst_26 : f32 to vector<16x1xf32>
      %39 = arith.addf %35, %38 : vector<16x1xf32>
      %40 = math.rsqrt %39 : vector<16x1xf32>
      %41 = vector.broadcast %40 : vector<16x1xf32> to vector<16x32xf32>
      %42 = arith.mulf %37, %41 : vector<16x32xf32>
      %c0_27 = arith.constant 0 : index
      %c0_28 = arith.constant 0 : index
      %43 = vector.load %arg7[%c0_27, %c0_28] : memref<1x32xf32, #tpu.memory_space<vmem>>, vector<1x32xf32>
      %44 = vector.broadcast %43 : vector<1x32xf32> to vector<16x32xf32>
      %45 = arith.mulf %42, %44 : vector<16x32xf32>
      %c0_29 = arith.constant 0 : index
      %c0_30 = arith.constant 0 : index
      %46 = vector.load %arg8[%c0_29, %c0_30] : memref<1x32xf32, #tpu.memory_space<vmem>>, vector<1x32xf32>
      %47 = vector.broadcast %46 : vector<1x32xf32> to vector<16x32xf32>
      %48 = arith.addf %45, %47 : vector<16x32xf32>
      %c0_31 = arith.constant 0 : index
      %c0_32 = arith.constant 0 : index
      %49 = vector.load %arg9[%c0_31, %c0_32] : memref<16x32xf32, #tpu.memory_space<vmem>>, vector<16x32xf32>
      tpu.vector_store %arg9[%c0_31, %c0_32], %48 {strides = array<i32>} : memref<16x32xf32, #tpu.memory_space<vmem>>, vector<16x32xf32>,
    } else {
    }
    return
  }
  func.func @transform_0(%arg0: i32, %arg1: i32) -> (i32, i32) {
    %c0_i32 = arith.constant 0 : i32
    %c0_i32_0 = arith.constant 0 : i32
    return %arg0, %c0_i32 : i32, i32
  }
  func.func @transform_1(%arg0: i32, %arg1: i32) -> (i32, i32) {
    %c0_i32 = arith.constant 0 : i32
    %c0_i32_0 = arith.constant 0 : i32
    return %c0_i32, %arg1 : i32, i32
  }
  func.func @transform_2(%arg0: i32, %arg1: i32) -> (i32, i32) {
    %c0_i32 = arith.constant 0 : i32
    %c0_i32_0 = arith.constant 0 : i32
    return %c0_i32, %arg1 : i32, i32
  }
  func.func @transform_3(%arg0: i32, %arg1: i32) -> (i32, i32) {
    %c0_i32 = arith.constant 0 : i32
    %c0_i32_0 = arith.constant 0 : i32
    return %arg1, %c0_i32 : i32, i32
  }
  func.func @transform_4(%arg0: i32, %arg1: i32) -> (i32, i32) {
    %c0_i32 = arith.constant 0 : i32
    %c0_i32_0 = arith.constant 0 : i32
    %c0_i32_1 = arith.constant 0 : i32
    return %c0_i32, %c0_i32_0 : i32, i32
  }
  func.func @transform_5(%arg0: i32, %arg1: i32) -> (i32, i32) {
    %c0_i32 = arith.constant 0 : i32
    %c0_i32_0 = arith.constant 0 : i32
    %c0_i32_1 = arith.constant 0 : i32
    return %c0_i32, %c0_i32_0 : i32, i32
  }
  func.func @transform_6(%arg0: i32, %arg1: i32) -> (i32, i32) {
    %c0_i32 = arith.constant 0 : i32
    %c0_i32_0 = arith.constant 0 : i32
    %c0_i32_1 = arith.constant 0 : i32
    return %c0_i32, %c0_i32_0 : i32, i32
  }
  func.func @transform_7(%arg0: i32, %arg1: i32) -> (i32, i32) {
    %c0_i32 = arith.constant 0 : i32
    %c0_i32_0 = arith.constant 0 : i32
    return %arg0, %c0_i32 : i32, i32
  }
}

module attributes {stable_mosaic.version = 11 : i64} {
  func.func @_linear_kernel(%arg0: i32, %arg1: i32, %arg2: memref<16x32xf32, #tpu.memory_space<vmem>>, %arg3: memref<32x64xf32, #tpu.memory_space<vmem>>, %arg4: memref<1x64xf32, #tpu.memory_space<vmem>>, %arg5: memref<16x64xf32, #tpu.memory_space<vmem>>) attributes {dimension_semantics = [#tpu.dimension_semantics<parallel>, #tpu.dimension_semantics<parallel>], iteration_bounds = array<i64: 1, 1>, scalar_prefetch = 0 : i64, scratch_operands = 0 : i64, tpu.core_type = #tpu.core_type<tc>, window_params = [{transform_indices = @transform_0, window_bounds = array<i64: 16, 32>}, {transform_indices = @transform_1, window_bounds = array<i64: 32, 64>}, {transform_indices = @transform_2, window_bounds = array<i64: 1, 64>}, {transform_indices = @transform_3, window_bounds = array<i64: 16, 64>}]} {
    %c0 = arith.constant 0 : index
    %c0_0 = arith.constant 0 : index
    %0 = vector.load %arg2[%c0, %c0_0] : memref<16x32xf32, #tpu.memory_space<vmem>>, vector<16x32xf32>
    %c0_1 = arith.constant 0 : index
    %c0_2 = arith.constant 0 : index
    %1 = vector.load %arg3[%c0_1, %c0_2] : memref<32x64xf32, #tpu.memory_space<vmem>>, vector<32x64xf32>
    %cst = arith.constant dense<0.000000e+00> : vector<16x64xf32>
    %2 = tpu.matmul %0, %1, %cst {dimension_numbers = #tpu.dot_dimension_numbers<[1], [0], [0], [1], [0, 0, 1, 1], [], []>} : vector<16x32xf32>, vector<32x64xf32>, vector<16x64xf32> -> vector<16x64xf32>
    %c0_3 = arith.constant 0 : index
    %c0_4 = arith.constant 0 : index
    %3 = vector.load %arg4[%c0_3, %c0_4] : memref<1x64xf32, #tpu.memory_space<vmem>>, vector<1x64xf32>
    %4 = vector.broadcast %3 : vector<1x64xf32> to vector<16x64xf32>
    %5 = arith.addf %2, %4 : vector<16x64xf32>
    %c0_5 = arith.constant 0 : index
    %c0_6 = arith.constant 0 : index
    %6 = vector.load %arg5[%c0_5, %c0_6] : memref<16x64xf32, #tpu.memory_space<vmem>>, vector<16x64xf32>
    tpu.vector_store %arg5[%c0_5, %c0_6], %5 {strides = array<i32>} : memref<16x64xf32, #tpu.memory_space<vmem>>, vector<16x64xf32>,
    return
  }
  func.func @transform_0(%arg0: i32, %arg1: i32) -> (i32, i32) {
    %c0_i32 = arith.constant 0 : i32
    %c0_i32_0 = arith.constant 0 : i32
    return %arg1, %c0_i32 : i32, i32
  }
  func.func @transform_1(%arg0: i32, %arg1: i32) -> (i32, i32) {
    %c0_i32 = arith.constant 0 : i32
    %c0_i32_0 = arith.constant 0 : i32
    return %c0_i32, %arg0 : i32, i32
  }
  func.func @transform_2(%arg0: i32, %arg1: i32) -> (i32, i32) {
    %c0_i32 = arith.constant 0 : i32
    %c0_i32_0 = arith.constant 0 : i32
    return %c0_i32, %arg0 : i32, i32
  }
  func.func @transform_3(%arg0: i32, %arg1: i32) -> (i32, i32) {
    %c0_i32 = arith.constant 0 : i32
    return %arg1, %arg0 : i32, i32
  }
}

module attributes {stable_mosaic.version = 11 : i64} {
  func.func @_linear_kernel(%arg0: i32, %arg1: i32, %arg2: memref<16x32xf32, #tpu.memory_space<vmem>>, %arg3: memref<32x32xf32, #tpu.memory_space<vmem>>, %arg4: memref<1x32xf32, #tpu.memory_space<vmem>>, %arg5: memref<16x32xf32, #tpu.memory_space<vmem>>) attributes {dimension_semantics = [#tpu.dimension_semantics<parallel>, #tpu.dimension_semantics<parallel>], iteration_bounds = array<i64: 1, 1>, scalar_prefetch = 0 : i64, scratch_operands = 0 : i64, tpu.core_type = #tpu.core_type<tc>, window_params = [{transform_indices = @transform_0, window_bounds = array<i64: 16, 32>}, {transform_indices = @transform_1, window_bounds = array<i64: 32, 32>}, {transform_indices = @transform_2, window_bounds = array<i64: 1, 32>}, {transform_indices = @transform_3, window_bounds = array<i64: 16, 32>}]} {
    %c0 = arith.constant 0 : index
    %c0_0 = arith.constant 0 : index
    %0 = vector.load %arg2[%c0, %c0_0] : memref<16x32xf32, #tpu.memory_space<vmem>>, vector<16x32xf32>
    %c0_1 = arith.constant 0 : index
    %c0_2 = arith.constant 0 : index
    %1 = vector.load %arg3[%c0_1, %c0_2] : memref<32x32xf32, #tpu.memory_space<vmem>>, vector<32x32xf32>
    %cst = arith.constant dense<0.000000e+00> : vector<16x32xf32>
    %2 = tpu.matmul %0, %1, %cst {dimension_numbers = #tpu.dot_dimension_numbers<[1], [0], [0], [1], [0, 0, 1, 1], [], []>} : vector<16x32xf32>, vector<32x32xf32>, vector<16x32xf32> -> vector<16x32xf32>
    %c0_3 = arith.constant 0 : index
    %c0_4 = arith.constant 0 : index
    %3 = vector.load %arg4[%c0_3, %c0_4] : memref<1x32xf32, #tpu.memory_space<vmem>>, vector<1x32xf32>
    %4 = vector.broadcast %3 : vector<1x32xf32> to vector<16x32xf32>
    %5 = arith.addf %2, %4 : vector<16x32xf32>
    %c0_5 = arith.constant 0 : index
    %c0_6 = arith.constant 0 : index
    %6 = vector.load %arg5[%c0_5, %c0_6] : memref<16x32xf32, #tpu.memory_space<vmem>>, vector<16x32xf32>
    tpu.vector_store %arg5[%c0_5, %c0_6], %5 {strides = array<i32>} : memref<16x32xf32, #tpu.memory_space<vmem>>, vector<16x32xf32>,
    return
  }
  func.func @transform_0(%arg0: i32, %arg1: i32) -> (i32, i32) {
    %c0_i32 = arith.constant 0 : i32
    %c0_i32_0 = arith.constant 0 : i32
    return %arg1, %c0_i32 : i32, i32
  }
  func.func @transform_1(%arg0: i32, %arg1: i32) -> (i32, i32) {
    %c0_i32 = arith.constant 0 : i32
    %c0_i32_0 = arith.constant 0 : i32
    return %c0_i32, %arg0 : i32, i32
  }
  func.func @transform_2(%arg0: i32, %arg1: i32) -> (i32, i32) {
    %c0_i32 = arith.constant 0 : i32
    %c0_i32_0 = arith.constant 0 : i32
    return %c0_i32, %arg0 : i32, i32
  }
  func.func @transform_3(%arg0: i32, %arg1: i32) -> (i32, i32) {
    %c0_i32 = arith.constant 0 : i32
    return %arg1, %arg0 : i32, i32
  }
}

module attributes {stable_mosaic.version = 11 : i64} {
  func.func @_mha_flash_kernel(%arg0: i32, %arg1: i32, %arg2: i32, %arg3: memref<1x8x1xf32, #tpu.memory_space<vmem>>, %arg4: memref<1x1x8xf32, #tpu.memory_space<vmem>>, %arg5: memref<1x4x8x8xf32, #tpu.memory_space<vmem>>, %arg6: memref<1x4x8x8xf32, #tpu.memory_space<vmem>>, %arg7: memref<1x4x8x8xf32, #tpu.memory_space<vmem>>, %arg8: memref<1x4x8x8xf32, #tpu.memory_space<vmem>>, %arg9: memref<4x8x1xf32, #tpu.memory_space<vmem>>, %arg10: memref<4x8x1xf32, #tpu.memory_space<vmem>>, %arg11: memref<4x8x8xf32, #tpu.memory_space<vmem>>) attributes {dimension_semantics = [#tpu.dimension_semantics<parallel>, #tpu.dimension_semantics<parallel>, #tpu.dimension_semantics<arbitrary>], iteration_bounds = array<i64: 2, 1, 1>, scalar_prefetch = 0 : i64, scratch_operands = 3 : i64, tpu.core_type = #tpu.core_type<tc>, window_params = [{transform_indices = @transform_0, window_bounds = array<i64: 1, 8, 1>}, {transform_indices = @transform_1, window_bounds = array<i64: 1, 1, 8>}, {transform_indices = @transform_2, window_bounds = array<i64: 1, 4, 8, 8>}, {transform_indices = @transform_3, window_bounds = array<i64: 1, 4, 8, 8>}, {transform_indices = @transform_4, window_bounds = array<i64: 1, 4, 8, 8>}, {transform_indices = @transform_5, window_bounds = array<i64: 1, 4, 8, 8>}]} {
    %c0_i32 = arith.constant 0 : i32
    %0 = arith.cmpi eq, %arg2, %c0_i32 : i32
    %1 = arith.extui %0 : i1 to i32
    %c0_i32_0 = arith.constant 0 : i32
    %2 = arith.cmpi ne, %1, %c0_i32_0 : i32
    scf.if %2 {
      %cst_45 = arith.constant 0xFF800000 : f32
      %61 = vector.broadcast %cst_45 : f32 to vector<4x8x1xf32>
      %c0_46 = arith.constant 0 : index
      %c0_47 = arith.constant 0 : index
      %c0_48 = arith.constant 0 : index
      %62 = vector.load %arg9[%c0_46, %c0_47, %c0_48] : memref<4x8x1xf32, #tpu.memory_space<vmem>>, vector<4x8x1xf32>
      tpu.vector_store %arg9[%c0_46, %c0_47, %c0_48], %61 {strides = array<i32>} : memref<4x8x1xf32, #tpu.memory_space<vmem>>, vector<4x8x1xf32>,
      %cst_49 = arith.constant 0.000000e+00 : f32
      %63 = vector.broadcast %cst_49 : f32 to vector<4x8x1xf32>
      %c0_50 = arith.constant 0 : index
      %c0_51 = arith.constant 0 : index
      %c0_52 = arith.constant 0 : index
      %64 = vector.load %arg10[%c0_50, %c0_51, %c0_52] : memref<4x8x1xf32, #tpu.memory_space<vmem>>, vector<4x8x1xf32>
      tpu.vector_store %arg10[%c0_50, %c0_51, %c0_52], %63 {strides = array<i32>} : memref<4x8x1xf32, #tpu.memory_space<vmem>>, vector<4x8x1xf32>,
      %cst_53 = arith.constant 0.000000e+00 : f32
      %65 = vector.broadcast %cst_53 : f32 to vector<4x8x8xf32>
      %c0_54 = arith.constant 0 : index
      %c0_55 = arith.constant 0 : index
      %c0_56 = arith.constant 0 : index
      %66 = vector.load %arg11[%c0_54, %c0_55, %c0_56] : memref<4x8x8xf32, #tpu.memory_space<vmem>>, vector<4x8x8xf32>
      tpu.vector_store %arg11[%c0_54, %c0_55, %c0_56], %65 {strides = array<i32>} : memref<4x8x8xf32, #tpu.memory_space<vmem>>, vector<4x8x8xf32>,
    } else {
    }
    %c0 = arith.constant 0 : index
    %c0_1 = arith.constant 0 : index
    %c0_2 = arith.constant 0 : index
    %c0_3 = arith.constant 0 : index
    %3 = vector.load %arg5[%c0, %c0_1, %c0_2, %c0_3] : memref<1x4x8x8xf32, #tpu.memory_space<vmem>>, vector<1x4x8x8xf32>
    %4 = vector.shape_cast %3 : vector<1x4x8x8xf32> to vector<4x8x8xf32>
    %c0_4 = arith.constant 0 : index
    %c0_5 = arith.constant 0 : index
    %c0_6 = arith.constant 0 : index
    %c0_7 = arith.constant 0 : index
    %5 = vector.load %arg6[%c0_4, %c0_5, %c0_6, %c0_7] : memref<1x4x8x8xf32, #tpu.memory_space<vmem>>, vector<1x4x8x8xf32>
    %6 = vector.shape_cast %5 : vector<1x4x8x8xf32> to vector<4x8x8xf32>
    %c0_8 = arith.constant 0 : index
    %c0_9 = arith.constant 0 : index
    %c0_10 = arith.constant 0 : index
    %c0_11 = arith.constant 0 : index
    %7 = vector.load %arg7[%c0_8, %c0_9, %c0_10, %c0_11] : memref<1x4x8x8xf32, #tpu.memory_space<vmem>>, vector<1x4x8x8xf32>
    %8 = vector.shape_cast %7 : vector<1x4x8x8xf32> to vector<4x8x8xf32>
    "tpu.trace_start"() <{level = 10 : i32, message = "hqd,hkd->hqk"}> : () -> ()
    %cst = arith.constant dense<0.000000e+00> : vector<4x8x8xf32>
    %9 = tpu.matmul %4, %6, %cst {dimension_numbers = #tpu.dot_dimension_numbers<[2], [2], [1], [1], [0, 0, 0, 1, 1, 1], [0], [0]>} : vector<4x8x8xf32>, vector<4x8x8xf32>, vector<4x8x8xf32> -> vector<4x8x8xf32>
    "tpu.trace_stop"() : () -> ()
    %c0_12 = arith.constant 0 : index
    %c0_13 = arith.constant 0 : index
    %c0_14 = arith.constant 0 : index
    %10 = vector.load %arg3[%c0_12, %c0_13, %c0_14] : memref<1x8x1xf32, #tpu.memory_space<vmem>>, vector<1x8x1xf32>
    %11 = vector.shape_cast %10 : vector<1x8x1xf32> to vector<8x1xf32>
    %cst_15 = arith.constant 0.000000e+00 : f32
    %12 = vector.broadcast %cst_15 : f32 to vector<8x1xf32>
    %13 = arith.cmpf one, %11, %12 : vector<8x1xf32>
    %c0_16 = arith.constant 0 : index
    %c0_17 = arith.constant 0 : index
    %c0_18 = arith.constant 0 : index
    %14 = vector.load %arg4[%c0_16, %c0_17, %c0_18] : memref<1x1x8xf32, #tpu.memory_space<vmem>>, vector<1x1x8xf32>
    %15 = vector.shape_cast %14 : vector<1x1x8xf32> to vector<1x8xf32>
    %cst_19 = arith.constant 0.000000e+00 : f32
    %16 = vector.broadcast %cst_19 : f32 to vector<1x8xf32>
    %17 = arith.cmpf one, %15, %16 : vector<1x8xf32>
    %18 = vector.broadcast %13 : vector<8x1xi1> to vector<8x8xi1>
    %19 = vector.broadcast %17 : vector<1x8xi1> to vector<8x8xi1>
    %20 = arith.andi %18, %19 : vector<8x8xi1>
    %c8_i32 = arith.constant 8 : i32
    %21 = arith.muli %arg1, %c8_i32 : i32
    %22 = tpu.iota {dimensions = array<i32: 0>} : vector<8x8xi32>
    %23 = vector.broadcast %21 : i32 to vector<8x8xi32>
    %24 = arith.addi %23, %22 : vector<8x8xi32>
    %c8_i32_20 = arith.constant 8 : i32
    %25 = arith.muli %arg2, %c8_i32_20 : i32
    %26 = tpu.iota {dimensions = array<i32: 1>} : vector<8x8xi32>
    %27 = vector.broadcast %25 : i32 to vector<8x8xi32>
    %28 = arith.addi %27, %26 : vector<8x8xi32>
    %29 = arith.cmpi sle, %28, %24 : vector<8x8xi32>
    %30 = arith.andi %20, %29 : vector<8x8xi1>
    %31 = vector.shape_cast %30 : vector<8x8xi1> to vector<1x8x8xi1>
    %cst_21 = arith.constant -1.000000e+09 : f32
    %32 = vector.shape_cast %31 : vector<1x8x8xi1> to vector<1x8x8xi1>
    %33 = vector.broadcast %32 : vector<1x8x8xi1> to vector<4x8x8xi1>
    %34 = vector.broadcast %cst_21 : f32 to vector<4x8x8xf32>
    %35 = arith.select %33, %9, %34 : vector<4x8x8xi1>, vector<4x8x8xf32>
    %c0_22 = arith.constant 0 : index
    %c0_23 = arith.constant 0 : index
    %c0_24 = arith.constant 0 : index
    %36 = vector.load %arg9[%c0_22, %c0_23, %c0_24] : memref<4x8x1xf32, #tpu.memory_space<vmem>>, vector<4x8x1xf32>
    %cst_25 = arith.constant dense<0xFF800000> : vector<4x8xf32>
    %37 = vector.multi_reduction <maximumf>, %35, %cst_25 [2] : vector<4x8x8xf32> to vector<4x8xf32>
    %38 = vector.shape_cast %37 : vector<4x8xf32> to vector<4x8x1xf32>
    %39 = arith.maximumf %36, %38 : vector<4x8x1xf32>
    %40 = arith.subf %36, %39 : vector<4x8x1xf32>
    %41 = math.exp %40 : vector<4x8x1xf32>
    %42 = vector.broadcast %39 : vector<4x8x1xf32> to vector<4x8x8xf32>
    %43 = arith.subf %35, %42 : vector<4x8x8xf32>
    %44 = math.exp %43 : vector<4x8x8xf32>
    %c0_26 = arith.constant 0 : index
    %c0_27 = arith.constant 0 : index
    %c0_28 = arith.constant 0 : index
    %45 = vector.load %arg10[%c0_26, %c0_27, %c0_28] : memref<4x8x1xf32, #tpu.memory_space<vmem>>, vector<4x8x1xf32>
    %46 = arith.mulf %41, %45 : vector<4x8x1xf32>
    %cst_29 = arith.constant dense<0.000000e+00> : vector<4x8xf32>
    %47 = vector.multi_reduction <add>, %44, %cst_29 [2] : vector<4x8x8xf32> to vector<4x8xf32>
    %48 = vector.shape_cast %47 : vector<4x8xf32> to vector<4x8x1xf32>
    %49 = arith.addf %46, %48 : vector<4x8x1xf32>
    %c0_30 = arith.constant 0 : index
    %c0_31 = arith.constant 0 : index
    %c0_32 = arith.constant 0 : index
    %50 = vector.load %arg10[%c0_30, %c0_31, %c0_32] : memref<4x8x1xf32, #tpu.memory_space<vmem>>, vector<4x8x1xf32>
    tpu.vector_store %arg10[%c0_30, %c0_31, %c0_32], %49 {strides = array<i32>} : memref<4x8x1xf32, #tpu.memory_space<vmem>>, vector<4x8x1xf32>,
    %c0_33 = arith.constant 0 : index
    %c0_34 = arith.constant 0 : index
    %c0_35 = arith.constant 0 : index
    %51 = vector.load %arg11[%c0_33, %c0_34, %c0_35] : memref<4x8x8xf32, #tpu.memory_space<vmem>>, vector<4x8x8xf32>
    %52 = vector.broadcast %41 : vector<4x8x1xf32> to vector<4x8x8xf32>
    %53 = arith.mulf %52, %51 : vector<4x8x8xf32>
    "tpu.trace_start"() <{level = 10 : i32, message = "hqk,hkd->hqd"}> : () -> ()
    %cst_36 = arith.constant dense<0.000000e+00> : vector<4x8x8xf32>
    %54 = tpu.matmul %44, %8, %cst_36 {dimension_numbers = #tpu.dot_dimension_numbers<[2], [1], [1], [2], [0, 0, 0, 1, 1, 2], [0], [0]>} : vector<4x8x8xf32>, vector<4x8x8xf32>, vector<4x8x8xf32> -> vector<4x8x8xf32>
    "tpu.trace_stop"() : () -> ()
    %55 = arith.addf %53, %54 : vector<4x8x8xf32>
    %c0_37 = arith.constant 0 : index
    %c0_38 = arith.constant 0 : index
    %c0_39 = arith.constant 0 : index
    %56 = vector.load %arg11[%c0_37, %c0_38, %c0_39] : memref<4x8x8xf32, #tpu.memory_space<vmem>>, vector<4x8x8xf32>
    tpu.vector_store %arg11[%c0_37, %c0_38, %c0_39], %55 {strides = array<i32>} : memref<4x8x8xf32, #tpu.memory_space<vmem>>, vector<4x8x8xf32>,
    %c0_40 = arith.constant 0 : index
    %c0_41 = arith.constant 0 : index
    %c0_42 = arith.constant 0 : index
    %57 = vector.load %arg9[%c0_40, %c0_41, %c0_42] : memref<4x8x1xf32, #tpu.memory_space<vmem>>, vector<4x8x1xf32>
    tpu.vector_store %arg9[%c0_40, %c0_41, %c0_42], %39 {strides = array<i32>} : memref<4x8x1xf32, #tpu.memory_space<vmem>>, vector<4x8x1xf32>,
    %c0_i32_43 = arith.constant 0 : i32
    %58 = arith.cmpi eq, %arg2, %c0_i32_43 : i32
    %59 = arith.extui %58 : i1 to i32
    %c0_i32_44 = arith.constant 0 : i32
    %60 = arith.cmpi ne, %59, %c0_i32_44 : i32
    scf.if %60 {
      %c0_45 = arith.constant 0 : index
      %c0_46 = arith.constant 0 : index
      %c0_47 = arith.constant 0 : index
      %61 = vector.load %arg11[%c0_45, %c0_46, %c0_47] : memref<4x8x8xf32, #tpu.memory_space<vmem>>, vector<4x8x8xf32>
      %c0_48 = arith.constant 0 : index
      %c0_49 = arith.constant 0 : index
      %c0_50 = arith.constant 0 : index
      %62 = vector.load %arg10[%c0_48, %c0_49, %c0_50] : memref<4x8x1xf32, #tpu.memory_space<vmem>>, vector<4x8x1xf32>
      %63 = tpu.reciprocal %62 {approx = true} : vector<4x8x1xf32> -> vector<4x8x1xf32>
      %64 = vector.broadcast %63 : vector<4x8x1xf32> to vector<4x8x8xf32>
      %65 = arith.mulf %61, %64 : vector<4x8x8xf32>
      %c0_51 = arith.constant 0 : index
      %c0_52 = arith.constant 0 : index
      %c0_53 = arith.constant 0 : index
      %c0_54 = arith.constant 0 : index
      %66 = vector.load %arg8[%c0_51, %c0_52, %c0_53, %c0_54] : memref<1x4x8x8xf32, #tpu.memory_space<vmem>>, vector<1x4x8x8xf32>
      %67 = vector.shape_cast %66 : vector<1x4x8x8xf32> to vector<4x8x8xf32>
      %68 = vector.shape_cast %65 : vector<4x8x8xf32> to vector<1x4x8x8xf32>
      tpu.vector_store %arg8[%c0_51, %c0_52, %c0_53, %c0_54], %68 {strides = array<i32>} : memref<1x4x8x8xf32, #tpu.memory_space<vmem>>, vector<1x4x8x8xf32>,
    } else {
    }
    return
  }
  func.func @transform_0(%arg0: i32, %arg1: i32, %arg2: i32) -> (i32, i32, i32) {
    %c0_i32 = arith.constant 0 : i32
    %c0_i32_0 = arith.constant 0 : i32
    return %arg0, %arg1, %c0_i32 : i32, i32, i32
  }
  func.func @transform_1(%arg0: i32, %arg1: i32, %arg2: i32) -> (i32, i32, i32) {
    %c0_i32 = arith.constant 0 : i32
    %c0_i32_0 = arith.constant 0 : i32
    return %arg0, %c0_i32, %arg2 : i32, i32, i32
  }
  func.func @transform_2(%arg0: i32, %arg1: i32, %arg2: i32) -> (i32, i32, i32, i32) {
    %c0_i32 = arith.constant 0 : i32
    %c0_i32_0 = arith.constant 0 : i32
    %c0_i32_1 = arith.constant 0 : i32
    return %arg0, %c0_i32, %arg1, %c0_i32_0 : i32, i32, i32, i32
  }
  func.func @transform_3(%arg0: i32, %arg1: i32, %arg2: i32) -> (i32, i32, i32, i32) {
    %c0_i32 = arith.constant 0 : i32
    %c0_i32_0 = arith.constant 0 : i32
    %c0_i32_1 = arith.constant 0 : i32
    return %arg0, %c0_i32, %arg2, %c0_i32_0 : i32, i32, i32, i32
  }
  func.func @transform_4(%arg0: i32, %arg1: i32, %arg2: i32) -> (i32, i32, i32, i32) {
    %c0_i32 = arith.constant 0 : i32
    %c0_i32_0 = arith.constant 0 : i32
    %c0_i32_1 = arith.constant 0 : i32
    return %arg0, %c0_i32, %arg2, %c0_i32_0 : i32, i32, i32, i32
  }
  func.func @transform_5(%arg0: i32, %arg1: i32, %arg2: i32) -> (i32, i32, i32, i32) {
    %c0_i32 = arith.constant 0 : i32
    %c0_i32_0 = arith.constant 0 : i32
    %c0_i32_1 = arith.constant 0 : i32
    return %arg0, %c0_i32, %arg1, %c0_i32_0 : i32, i32, i32, i32
  }
}

module attributes {stable_mosaic.version = 11 : i64} {
  func.func @_linear_kernel(%arg0: i32, %arg1: i32, %arg2: memref<16x32xf32, #tpu.memory_space<vmem>>, %arg3: memref<32x128xf32, #tpu.memory_space<vmem>>, %arg4: memref<1x128xf32, #tpu.memory_space<vmem>>, %arg5: memref<16x128xf32, #tpu.memory_space<vmem>>) attributes {dimension_semantics = [#tpu.dimension_semantics<parallel>, #tpu.dimension_semantics<parallel>], iteration_bounds = array<i64: 1, 1>, scalar_prefetch = 0 : i64, scratch_operands = 0 : i64, tpu.core_type = #tpu.core_type<tc>, window_params = [{transform_indices = @transform_0, window_bounds = array<i64: 16, 32>}, {transform_indices = @transform_1, window_bounds = array<i64: 32, 128>}, {transform_indices = @transform_2, window_bounds = array<i64: 1, 128>}, {transform_indices = @transform_3, window_bounds = array<i64: 16, 128>}]} {
    %c0 = arith.constant 0 : index
    %c0_0 = arith.constant 0 : index
    %0 = vector.load %arg2[%c0, %c0_0] : memref<16x32xf32, #tpu.memory_space<vmem>>, vector<16x32xf32>
    %c0_1 = arith.constant 0 : index
    %c0_2 = arith.constant 0 : index
    %1 = vector.load %arg3[%c0_1, %c0_2] : memref<32x128xf32, #tpu.memory_space<vmem>>, vector<32x128xf32>
    %cst = arith.constant dense<0.000000e+00> : vector<16x128xf32>
    %2 = tpu.matmul %0, %1, %cst {dimension_numbers = #tpu.dot_dimension_numbers<[1], [0], [0], [1], [0, 0, 1, 1], [], []>} : vector<16x32xf32>, vector<32x128xf32>, vector<16x128xf32> -> vector<16x128xf32>
    %c0_3 = arith.constant 0 : index
    %c0_4 = arith.constant 0 : index
    %3 = vector.load %arg4[%c0_3, %c0_4] : memref<1x128xf32, #tpu.memory_space<vmem>>, vector<1x128xf32>
    %4 = vector.broadcast %3 : vector<1x128xf32> to vector<16x128xf32>
    %5 = arith.addf %2, %4 : vector<16x128xf32>
    %c0_5 = arith.constant 0 : index
    %c0_6 = arith.constant 0 : index
    %6 = vector.load %arg5[%c0_5, %c0_6] : memref<16x128xf32, #tpu.memory_space<vmem>>, vector<16x128xf32>
    tpu.vector_store %arg5[%c0_5, %c0_6], %5 {strides = array<i32>} : memref<16x128xf32, #tpu.memory_space<vmem>>, vector<16x128xf32>,
    return
  }
  func.func @transform_0(%arg0: i32, %arg1: i32) -> (i32, i32) {
    %c0_i32 = arith.constant 0 : i32
    %c0_i32_0 = arith.constant 0 : i32
    return %arg1, %c0_i32 : i32, i32
  }
  func.func @transform_1(%arg0: i32, %arg1: i32) -> (i32, i32) {
    %c0_i32 = arith.constant 0 : i32
    %c0_i32_0 = arith.constant 0 : i32
    return %c0_i32, %arg0 : i32, i32
  }
  func.func @transform_2(%arg0: i32, %arg1: i32) -> (i32, i32) {
    %c0_i32 = arith.constant 0 : i32
    %c0_i32_0 = arith.constant 0 : i32
    return %c0_i32, %arg0 : i32, i32
  }
  func.func @transform_3(%arg0: i32, %arg1: i32) -> (i32, i32) {
    %c0_i32 = arith.constant 0 : i32
    return %arg1, %arg0 : i32, i32
  }
}

</mosaic_0001>

<llo_original>
// kernel: transformer_forward.25
$region0: #{transformer_forward.25}
  #allocation0 [shape = 'u32[]', space=smem, size = 0x4, offset = 0x4, fixed_abs, tag = 'smem constant byte address 0x4 - core index']
  #allocation1 [shape = 'u32[144,128]{1,0:T(1,128)}', space=vmem, size = 0x12000, scoped, tag = 'internal scratch']
  %s0 = inlined_call_operand.vmem [shape: f32[16,32], index: 0, kind: input, shape index: {}]
  %s1 = inlined_call_operand.vmem [shape: f32[32,96], index: 1, kind: input, shape index: {}]
  %s2 = inlined_call_operand.vmem [shape: f32[1,96], index: 2, kind: input, shape index: {}]
  %s3 = inlined_call_operand.vmem [shape: f32[16,96], index: 3, kind: output, shape index: {}]
  %s4 = sld [smem:[#allocation0]]
  $region22: #{transformer_forward.25} parent=0
    _
  %s6 = ssub.s32 1, %s4
  %s7 = scalar_select 0, %s6, %s4
  // Predicated region
  $region2: #{transformer_forward.25} parent=0 // pred_check
    _
  $region3: #{transformer_forward.25} parent=0 // pred_check_branch
    %9 = sbr.rel (0) target = $region5
  $region4: #{transformer_forward.25} parent=0 // pred_region
    _
  $region5: #{transformer_forward.25} parent=0 // pred_fallthru
    _
  // Predicated region
  $region6: #{transformer_forward.25} parent=0 // pred_check
    _
  $region7: #{transformer_forward.25} parent=0 // pred_check_branch
    %11 = sbr.rel (0) target = $region9
  $region8: #{transformer_forward.25} parent=0 // pred_region
    _
  $region9: #{transformer_forward.25} parent=0 // pred_fallthru
    _
  // Predicated region
  $region10: #{transformer_forward.25} parent=0 // pred_check
    _
  $region11: #{transformer_forward.25} parent=0 // pred_check_branch
    %13 = sbr.rel (0) target = $region13
  $region12: #{transformer_forward.25} parent=0 // pred_region
    _
  $region13: #{transformer_forward.25} parent=0 // pred_fallthru
    _
  %v14 = vld [vmem:[%s0] sm:$0xff]
  %v15 = vld [vmem:[%s0 + $0x8] sm:$0xff]
  %v16 = vld [vmem:[%s1] sm:$0xff]
  %v17 = vld [vmem:[%s1 + $0x8] sm:$0xff]
  %v18 = vld [vmem:[%s1 + $0x10] sm:$0xff]
  %v19 = vld [vmem:[%s1 + $0x18] sm:$0xff]
  %v20 = vld [vmem:[%s2] sm:$0x1]
  %v22 = vlaneseq
  %v23 = vshrl.u32 %v22, 7
  %v24 = vsub.s32 0, %v23
  %v25 = vrot.slane %v20, %v24
  %vm27 = vcmask 261120
  %v29 = vsel %vm27, %v14, 0
  %v32 = vsel %vm27, %v15, 0
  %34 = vmatprep.subr.mxu0 0.0
  %35 = vmatpush1.msra.mxu0 %v16
  %36 = vmatprep.subr.mxu0 0.0
  %37 = vmatpush1.msra.mxu0 %v17
  %38 = vmatprep.subr.mxu0 0.0
  %39 = vmatpush1.msra.mxu0 %v18
  %40 = vmatprep.subr.mxu0 0.0
  %41 = vmatpush1.msra.mxu0 %v19
  %42 = vmatprep.subr.mxu0 0.0
  %43 = vmatpush1.msra.mxu0 0.0
  %44 = vmatprep.subr.mxu0 0.0
  %45 = vmatpush1.msra.mxu0 0.0
  %46 = vmatprep.subr.mxu0 0.0
  %47 = vmatpush1.msra.mxu0 0.0
  %48 = vmatprep.subr.mxu0 0.0
  %49 = vmatpush1.msra.mxu0 0.0
  %50 = vmatprep.subr.mxu0 0.0
  %51 = vmatpush1.msra.mxu0 0.0
  %52 = vmatprep.subr.mxu0 0.0
  %53 = vmatpush1.msra.mxu0 0.0
  %54 = vmatprep.subr.mxu0 0.0
  %55 = vmatpush1.msra.mxu0 0.0
  %56 = vmatprep.subr.mxu0 0.0
  %57 = vmatpush1.msra.mxu0 0.0
  %58 = vmatprep.subr.mxu0 0.0
  %59 = vmatpush1.msra.mxu0 0.0
  %60 = vmatprep.subr.mxu0 0.0
  %61 = vmatpush1.msra.mxu0 0.0
  %62 = vmatprep.subr.mxu0 0.0
  %63 = vmatpush1.msra.mxu0 0.0
  %64 = vmatprep.subr.mxu0 0.0
  %65 = vmatpush1.msra.mxu0 0.0
  %66 = vmatprep.subr.mxu0 0.0
  %67 = vmatpush1.msra.mxu0 0.0
  %68 = vmatprep.subr.mxu0 0.0
  %69 = vmatpush1.msra.mxu0 0.0
  %70 = vmatprep.subr.mxu0 0.0
  %71 = vmatpush1.msra.mxu0 0.0
  %72 = vmatprep.subr.mxu0 0.0
  %73 = vmatpush1.msra.mxu0 0.0
  %74 = vmatprep.subr.mxu0 0.0
  %75 = vmatpush1.msra.mxu0 0.0
  %76 = vmatprep.subr.mxu0 0.0
  %77 = vmatpush1.msra.mxu0 0.0
  %78 = vmatprep.subr.mxu0 0.0
  %79 = vmatpush1.msra.mxu0 0.0
  %80 = vmatprep.subr.mxu0 0.0
  %81 = vmatpush1.msra.mxu0 0.0
  %82 = vmatprep.subr.mxu0 0.0
  %83 = vmatpush1.msra.mxu0 0.0
  %84 = vmatprep.subr.mxu0 0.0
  %85 = vmatpush1.msra.mxu0 0.0
  %86 = vmatprep.subr.mxu0 0.0
  %87 = vmatpush1.msra.mxu0 0.0
  %88 = vmatprep.subr.mxu0 0.0
  %89 = vmatpush1.msra.mxu0 0.0
  %90 = vmatprep.subr.mxu0 0.0
  %91 = vmatpush1.msra.mxu0 0.0
  %92 = vmatprep.subr.mxu0 0.0
  %93 = vmatpush1.msra.mxu0 0.0
  %94 = vmatprep.subr.mxu0 0.0
  %95 = vmatpush1.msra.mxu0 0.0
  %96 = vmatprep.subr.mxu0 0.0
  %97 = vmatpush1.msra.mxu0 0.0
  %98 = vmatprep.mubr.f32.mxu0 0.0
  %99 = vmatmul.mubr.f32.gmra.mrb[0].mxu0 %v29
  %v100 = vpop.f32.mrb[0].mxu0
  %v101 = vadd.f32 %v25, %v100
  %v102 = vpop.f32.mrb[0].mxu0
  %103 = vmatprep.mubr.f32.mxu0 0.0
  %104 = vmatmul.mubr.f32.gmra.mrb[0].mxu0 %v32
  %v105 = vpop.f32.mrb[0].mxu0
  %v106 = vadd.f32 %v25, %v105
  %v107 = vpop.f32.mrb[0].mxu0
  %108 = vdwg.mxu0
  %vm109 = vcmask 785408
  %110 = vst.msk [vmem:[%s3] sm:$0xff] %vm109, %v101
  %111 = vst.msk [vmem:[%s3 + $0x8] sm:$0xff] %vm109, %v106
  // Predicated region
  $region14: #{transformer_forward.25} parent=0 // pred_check
    _
  $region15: #{transformer_forward.25} parent=0 // pred_check_branch
    %113 = sbr.rel (0) target = $region17
  $region16: #{transformer_forward.25} parent=0 // pred_region
    _
  $region17: #{transformer_forward.25} parent=0 // pred_fallthru
    _
  // Predicated region
  $region18: #{transformer_forward.25} parent=0 // pred_check
    _
  $region19: #{transformer_forward.25} parent=0 // pred_check_branch
    %115 = sbr.rel (0) target = $region21
  $region20: #{transformer_forward.25} parent=0 // pred_region
    _
  $region21: #{transformer_forward.25} parent=0 // pred_fallthru
    _

// kernel: transformer_forward.27
$region0: #{transformer_forward.27}
  #allocation0 [shape = 'u32[]', space=smem, size = 0x4, offset = 0x4, fixed_abs, tag = 'smem constant byte address 0x4 - core index']
  #allocation1 [shape = 'u32[144,128]{1,0:T(1,128)}', space=vmem, size = 0x12000, scoped, tag = 'internal scratch']
  %s0 = inlined_call_operand.vmem [shape: f32[16,32], index: 0, kind: input, shape index: {}]
  %s1 = inlined_call_operand.vmem [shape: f32[32,32], index: 1, kind: input, shape index: {}]
  %s2 = inlined_call_operand.vmem [shape: f32[1,32], index: 2, kind: input, shape index: {}]
  %s3 = inlined_call_operand.vmem [shape: f32[16,32], index: 3, kind: input, shape index: {}]
  %s4 = inlined_call_operand.vmem [shape: f32[1,32], index: 4, kind: input, shape index: {}]
  %s5 = inlined_call_operand.vmem [shape: f32[1,32], index: 5, kind: input, shape index: {}]
  %s6 = inlined_call_operand.vmem [shape: f32[16,32], index: 6, kind: output, shape index: {}]
  %s7 = sld [smem:[#allocation0]]
  $region34: #{transformer_forward.27} parent=0
    _
  %s9 = ssub.s32 1, %s7
  %s10 = scalar_select 0, %s9, %s7
  // Predicated region
  $region2: #{transformer_forward.27} parent=0 // pred_check
    _
  $region3: #{transformer_forward.27} parent=0 // pred_check_branch
    %12 = sbr.rel (0) target = $region5
  $region4: #{transformer_forward.27} parent=0 // pred_region
    _
  $region5: #{transformer_forward.27} parent=0 // pred_fallthru
    _
  // Predicated region
  $region6: #{transformer_forward.27} parent=0 // pred_check
    _
  $region7: #{transformer_forward.27} parent=0 // pred_check_branch
    %14 = sbr.rel (0) target = $region9
  $region8: #{transformer_forward.27} parent=0 // pred_region
    _
  $region9: #{transformer_forward.27} parent=0 // pred_fallthru
    _
  // Predicated region
  $region10: #{transformer_forward.27} parent=0 // pred_check
    _
  $region11: #{transformer_forward.27} parent=0 // pred_check_branch
    %16 = sbr.rel (0) target = $region13
  $region12: #{transformer_forward.27} parent=0 // pred_region
    _
  $region13: #{transformer_forward.27} parent=0 // pred_fallthru
    _
  // Predicated region
  $region14: #{transformer_forward.27} parent=0 // pred_check
    _
  $region15: #{transformer_forward.27} parent=0 // pred_check_branch
    %18 = sbr.rel (0) target = $region17
  $region16: #{transformer_forward.27} parent=0 // pred_region
    _
  $region17: #{transformer_forward.27} parent=0 // pred_fallthru
    _
  // Predicated region
  $region18: #{transformer_forward.27} parent=0 // pred_check
    _
  $region19: #{transformer_forward.27} parent=0 // pred_check_branch
    %20 = sbr.rel (0) target = $region21
  $region20: #{transformer_forward.27} parent=0 // pred_region
    _
  $region21: #{transformer_forward.27} parent=0 // pred_fallthru
    _
  // Predicated region
  $region22: #{transformer_forward.27} parent=0 // pred_check
    _
  $region23: #{transformer_forward.27} parent=0 // pred_check_branch
    %22 = sbr.rel (0) target = $region25
  $region24: #{transformer_forward.27} parent=0 // pred_region
    _
  $region25: #{transformer_forward.27} parent=0 // pred_fallthru
    _
  %v23 = vld [vmem:[%s0] sm:$0xff]
  %v24 = vld [vmem:[%s0 + $0x8] sm:$0xff]
  %v25 = vld [vmem:[%s1] sm:$0xff]
  %v26 = vld [vmem:[%s1 + $0x8] sm:$0xff]
  %v27 = vld [vmem:[%s1 + $0x10] sm:$0xff]
  %v28 = vld [vmem:[%s1 + $0x18] sm:$0xff]
  %v29 = vld [vmem:[%s2] sm:$0x1]
  %v31 = vlaneseq
  %v32 = vshrl.u32 %v31, 7
  %v33 = vsub.s32 0, %v32
  %v34 = vrot.slane %v29, %v33
  %vm36 = vcmask 261120
  %v38 = vsel %vm36, %v23, 0
  %v41 = vsel %vm36, %v24, 0
  %43 = vmatprep.subr.mxu0 0.0
  %44 = vmatpush1.msra.mxu0 %v25
  %45 = vmatprep.subr.mxu0 0.0
  %46 = vmatpush1.msra.mxu0 %v26
  %47 = vmatprep.subr.mxu0 0.0
  %48 = vmatpush1.msra.mxu0 %v27
  %49 = vmatprep.subr.mxu0 0.0
  %50 = vmatpush1.msra.mxu0 %v28
  %51 = vmatprep.subr.mxu0 0.0
  %52 = vmatpush1.msra.mxu0 0.0
  %53 = vmatprep.subr.mxu0 0.0
  %54 = vmatpush1.msra.mxu0 0.0
  %55 = vmatprep.subr.mxu0 0.0
  %56 = vmatpush1.msra.mxu0 0.0
  %57 = vmatprep.subr.mxu0 0.0
  %58 = vmatpush1.msra.mxu0 0.0
  %59 = vmatprep.subr.mxu0 0.0
  %60 = vmatpush1.msra.mxu0 0.0
  %61 = vmatprep.subr.mxu0 0.0
  %62 = vmatpush1.msra.mxu0 0.0
  %63 = vmatprep.subr.mxu0 0.0
  %64 = vmatpush1.msra.mxu0 0.0
  %65 = vmatprep.subr.mxu0 0.0
  %66 = vmatpush1.msra.mxu0 0.0
  %67 = vmatprep.subr.mxu0 0.0
  %68 = vmatpush1.msra.mxu0 0.0
  %69 = vmatprep.subr.mxu0 0.0
  %70 = vmatpush1.msra.mxu0 0.0
  %71 = vmatprep.subr.mxu0 0.0
  %72 = vmatpush1.msra.mxu0 0.0
  %73 = vmatprep.subr.mxu0 0.0
  %74 = vmatpush1.msra.mxu0 0.0
  %75 = vmatprep.subr.mxu0 0.0
  %76 = vmatpush1.msra.mxu0 0.0
  %77 = vmatprep.subr.mxu0 0.0
  %78 = vmatpush1.msra.mxu0 0.0
  %79 = vmatprep.subr.mxu0 0.0
  %80 = vmatpush1.msra.mxu0 0.0
  %81 = vmatprep.subr.mxu0 0.0
  %82 = vmatpush1.msra.mxu0 0.0
  %83 = vmatprep.subr.mxu0 0.0
  %84 = vmatpush1.msra.mxu0 0.0
  %85 = vmatprep.subr.mxu0 0.0
  %86 = vmatpush1.msra.mxu0 0.0
  %87 = vmatprep.subr.mxu0 0.0
  %88 = vmatpush1.msra.mxu0 0.0
  %89 = vmatprep.subr.mxu0 0.0
  %90 = vmatpush1.msra.mxu0 0.0
  %91 = vmatprep.subr.mxu0 0.0
  %92 = vmatpush1.msra.mxu0 0.0
  %93 = vmatprep.subr.mxu0 0.0
  %94 = vmatpush1.msra.mxu0 0.0
  %95 = vmatprep.subr.mxu0 0.0
  %96 = vmatpush1.msra.mxu0 0.0
  %97 = vmatprep.subr.mxu0 0.0
  %98 = vmatpush1.msra.mxu0 0.0
  %99 = vmatprep.subr.mxu0 0.0
  %100 = vmatpush1.msra.mxu0 0.0
  %101 = vmatprep.subr.mxu0 0.0
  %102 = vmatpush1.msra.mxu0 0.0
  %103 = vmatprep.subr.mxu0 0.0
  %104 = vmatpush1.msra.mxu0 0.0
  %105 = vmatprep.subr.mxu0 0.0
  %106 = vmatpush1.msra.mxu0 0.0
  %107 = vmatprep.mubr.f32.mxu0 0.0
  %108 = vmatmul.mubr.f32.gmra.mrb[0].mxu0 %v38
  %v109 = vpop.f32.mrb[0].mxu0
  %v110 = vadd.f32 %v34, %v109
  %v111 = vpop.f32.mrb[0].mxu0
  %112 = vmatprep.mubr.f32.mxu0 0.0
  %113 = vmatmul.mubr.f32.gmra.mrb[0].mxu0 %v41
  %v114 = vpop.f32.mrb[0].mxu0
  %v115 = vadd.f32 %v34, %v114
  %v116 = vpop.f32.mrb[0].mxu0
  %117 = vdwg.mxu0
  %v118 = vld [vmem:[%s3] sm:$0xff]
  %v119 = vld [vmem:[%s3 + $0x8] sm:$0xff]
  %v120 = vadd.f32 %v118, %v110
  %v121 = vadd.f32 %v119, %v115
  %v122 = vsel %vm36, %v120, 0.0
  %123 = vadd.xlane.f32.xlu0 %v122
  %v124 = vpop.xlane.xlu0 %123
  %v125 = vsel %vm36, %v121, 0.0
  %126 = vadd.xlane.f32.xlu0 %v125
  %v127 = vpop.xlane.xlu0 %126
  %v128 = vrcp.pop 32.0
  %v129 = vmul.f32 %v124, %v128
  %v130 = vmul.f32 %v127, %v128
  %v131 = vsub.f32 %v120, %v129
  %v132 = vsub.f32 %v121, %v130
  %v133 = vmul.f32 %v131, %v131
  %v134 = vmul.f32 %v132, %v132
  %v135 = vsel %vm36, %v133, 0.0
  %136 = vadd.xlane.f32.xlu0 %v135
  %v137 = vpop.xlane.xlu0 %136
  %v138 = vsel %vm36, %v134, 0.0
  %139 = vadd.xlane.f32.xlu0 %v138
  %v140 = vpop.xlane.xlu0 %139
  %v141 = vmul.f32 %v137, %v128
  %v142 = vmul.f32 %v140, %v128
  %v143 = vadd.f32 %v141, 1e-05
  %v144 = vadd.f32 %v142, 1e-05
  %v145 = vrsqrt.pop %v143
  %v146 = vrsqrt.pop %v144
  %v147 = vmul.f32 %v131, %v145
  %v148 = vmul.f32 %v132, %v146
  %v149 = vld [vmem:[%s4] sm:$0x1]
  %v151 = vlaneseq
  %v152 = vshrl.u32 %v151, 7
  %v153 = vsub.s32 0, %v152
  %v154 = vrot.slane %v149, %v153
  %v156 = vmul.f32 %v147, %v154
  %v157 = vmul.f32 %v148, %v154
  %v158 = vld [vmem:[%s5] sm:$0x1]
  %v160 = vlaneseq
  %v161 = vshrl.u32 %v160, 7
  %v162 = vsub.s32 0, %v161
  %v163 = vrot.slane %v158, %v162
  %v165 = vadd.f32 %v156, %v163
  %v166 = vadd.f32 %v157, %v163
  %167 = vst.msk [vmem:[%s6] sm:$0xff] %vm36, %v165
  %168 = vst.msk [vmem:[%s6 + $0x8] sm:$0xff] %vm36, %v166
  // Predicated region
  $region26: #{transformer_forward.27} parent=0 // pred_check
    _
  $region27: #{transformer_forward.27} parent=0 // pred_check_branch
    %170 = sbr.rel (0) target = $region29
  $region28: #{transformer_forward.27} parent=0 // pred_region
    _
  $region29: #{transformer_forward.27} parent=0 // pred_fallthru
    _
  // Predicated region
  $region30: #{transformer_forward.27} parent=0 // pred_check
    _
  $region31: #{transformer_forward.27} parent=0 // pred_check_branch
    %172 = sbr.rel (0) target = $region33
  $region32: #{transformer_forward.27} parent=0 // pred_region
    _
  $region33: #{transformer_forward.27} parent=0 // pred_fallthru
    _

// kernel: transformer_forward.26
$region0: #{transformer_forward.26}
  #allocation0 [shape = 'u32[]', space=smem, size = 0x4, offset = 0x4, fixed_abs, tag = 'smem constant byte address 0x4 - core index']
  #allocation1 [shape = 'u32[144,128]{1,0:T(1,128)}', space=vmem, size = 0x12000, scoped, tag = 'internal scratch']
  #allocation2 [shape = 'f32[4,8,1]{2,1,0:T(8,128)}', space=vmem, size = 0x4000, scoped, tag = 'scratch operand']
  #allocation3 [shape = 'f32[4,8,1]{2,1,0:T(8,128)}', space=vmem, size = 0x4000, scoped, tag = 'scratch operand']
  #allocation4 [shape = 'f32[4,8,8]{2,1,0:T(8,128)}', space=vmem, size = 0x4000, scoped, tag = 'scratch operand']
  %s0 = inlined_call_operand.vmem [shape: f32[2,8,1], index: 0, kind: input, shape index: {}]
  %s1 = inlined_call_operand.vmem [shape: f32[2,1,8], index: 1, kind: input, shape index: {}]
  %s2 = inlined_call_operand.vmem [shape: f32[2,4,8,8], index: 2, kind: input, shape index: {}]
  %s3 = inlined_call_operand.vmem [shape: f32[2,4,8,8], index: 3, kind: input, shape index: {}]
  %s4 = inlined_call_operand.vmem [shape: f32[2,4,8,8], index: 4, kind: input, shape index: {}]
  %s5 = inlined_call_operand.vmem [shape: f32[2,4,8,8], index: 5, kind: output, shape index: {}]
  %s6 = sld [smem:[#allocation0]]
  $region61: #{transformer_forward.26} parent=0
    _
  %s8 = ssub.s32 1, %s6
  %s9 = scalar_select 0, %s8, %s6
  loop: start=0, step=1, limit=4
  $region2: #{transformer_forward.26} parent=0 // loop_pre_header
    _
  $region3: #{transformer_forward.26} parent=0 // loop_header
    %s11 = sphi 0, %s15
    %p12 = scmp.ge.s32.totalorder %s11, 4
    %s18 = sphi 0, %s37
    %s19 = sphi 0, %s33
    %s20 = sphi 0, %s29
    %s21 = sphi 0, %s18
    %s22 = sphi 0, %s19
    %s23 = sphi 0, %s20
    %s24 = sphi 0, %s21
    %s25 = sphi 0, %s22
    %s26 = sphi 0, %s23
    %s42 = sphi 0, %s44
    %s45 = sphi 0, %s42
    %s46 = sphi 0, %s45
    %s62 = sphi 0, %s46
    %s70 = sphi 0, %s72
    %s73 = sphi 0, %s70
    %s74 = sphi 0, %s73
    %s90 = sphi 0, %s74
    %s98 = sphi 0, %s100
    %s101 = sphi 0, %s98
    %s102 = sphi 0, %s101
    %s118 = sphi 0, %s102
    %s126 = sphi 0, %s128
    %s129 = sphi 0, %s126
    %s130 = sphi 0, %s129
    %s146 = sphi 0, %s130
    %s154 = sphi 0, %s156
    %s157 = sphi 0, %s154
    %s158 = sphi 0, %s157
    %s174 = sphi 0, %s158
    %s182 = sphi 0, %s184
    %s185 = sphi 0, %s182
    %s186 = sphi 0, %s185
    %s202 = sphi 0, %s186
  $region4: #{transformer_forward.26} parent=0 // loop_header_branch
    %14 = sbr.rel (%p12) target = $region8
  $region5: #{transformer_forward.26} parent=0 // loop_body
    %s16 = ssub.s32 %s11, 1
    %s17 = ssub.s32 %s11, 2
    %s27 = sadd.s32 1, %s20
    %p28 = scmp.ge.s32.totalorder %s27, 1
    %s29 = scalar_select %p28, 0, %s27
    %s30 = sadd.s32 1, %s19
    %s31 = scalar_select %p28, %s30, %s19
    %p32 = scmp.ge.s32.totalorder %s31, 1
    %s33 = scalar_select %p32, 0, %s31
    %s34 = sadd.s32 1, %s18
    %s35 = scalar_select %p32, %s34, %s18
    %p36 = scmp.ge.s32.totalorder %s35, 2
    %s37 = scalar_select %p36, 0, %s35
    %s38 = ssub.s32 %s18, %s37
    %s39 = ssub.s32 %s19, %s33
    %s40 = sor.u32 %s38, %s39
    %p41 = scmp.eq.s32.totalorder %s40, 0
    %s43 = sadd.s32 %s42, 1
    %s44 = scalar_select %p41, %s42, %s43
    %p47 = pneg %p41
    %p48 = scmp.eq.s32.totalorder %s11, 1
    %p49 = por %p47, %p48
    %p50 = scmp.ne.s32.totalorder %s42, %s45
    %p51 = scmp.eq.s32.totalorder %s11, 0
    %p52 = por %p50, %p51
    %p53 = scmp.ne.s32.totalorder %s42, %s45
    %p54 = scmp.eq.s32.totalorder %s16, 1
    %p55 = por %p53, %p54
    %p56 = scmp.ne.s32.totalorder %s45, %s46
    %p57 = scmp.eq.s32.totalorder %s16, 0
    %p58 = por %p56, %p57
    %p59 = scmp.ne.s32.totalorder %s45, %s46
    %p60 = scmp.eq.s32.totalorder %s17, 1
    %p61 = por %p59, %p60
    %p63 = scmp.ne.s32.totalorder %s46, %s62
    %p64 = scmp.eq.s32.totalorder %s17, 0
    %p65 = por %p63, %p64
    %s66 = ssub.s32 %s18, %s37
    %s67 = ssub.s32 %s20, %s29
    %s68 = sor.u32 %s66, %s67
    %p69 = scmp.eq.s32.totalorder %s68, 0
    %s71 = sadd.s32 %s70, 1
    %s72 = scalar_select %p69, %s70, %s71
    %p75 = pneg %p69
    %p76 = scmp.eq.s32.totalorder %s11, 1
    %p77 = por %p75, %p76
    %p78 = scmp.ne.s32.totalorder %s70, %s73
    %p79 = scmp.eq.s32.totalorder %s11, 0
    %p80 = por %p78, %p79
    %p81 = scmp.ne.s32.totalorder %s70, %s73
    %p82 = scmp.eq.s32.totalorder %s16, 1
    %p83 = por %p81, %p82
    %p84 = scmp.ne.s32.totalorder %s73, %s74
    %p85 = scmp.eq.s32.totalorder %s16, 0
    %p86 = por %p84, %p85
    %p87 = scmp.ne.s32.totalorder %s73, %s74
    %p88 = scmp.eq.s32.totalorder %s17, 1
    %p89 = por %p87, %p88
    %p91 = scmp.ne.s32.totalorder %s74, %s90
    %p92 = scmp.eq.s32.totalorder %s17, 0
    %p93 = por %p91, %p92
    %s94 = ssub.s32 %s18, %s37
    %s95 = ssub.s32 %s19, %s33
    %s96 = sor.u32 %s94, %s95
    %p97 = scmp.eq.s32.totalorder %s96, 0
    %s99 = sadd.s32 %s98, 1
    %s100 = scalar_select %p97, %s98, %s99
    %p103 = pneg %p97
    %p104 = scmp.eq.s32.totalorder %s11, 1
    %p105 = por %p103, %p104
    %p106 = scmp.ne.s32.totalorder %s98, %s101
    %p107 = scmp.eq.s32.totalorder %s11, 0
    %p108 = por %p106, %p107
    %p109 = scmp.ne.s32.totalorder %s98, %s101
    %p110 = scmp.eq.s32.totalorder %s16, 1
    %p111 = por %p109, %p110
    %p112 = scmp.ne.s32.totalorder %s101, %s102
    %p113 = scmp.eq.s32.totalorder %s16, 0
    %p114 = por %p112, %p113
    %p115 = scmp.ne.s32.totalorder %s101, %s102
    %p116 = scmp.eq.s32.totalorder %s17, 1
    %p117 = por %p115, %p116
    %p119 = scmp.ne.s32.totalorder %s102, %s118
    %p120 = scmp.eq.s32.totalorder %s17, 0
    %p121 = por %p119, %p120
    %s122 = ssub.s32 %s18, %s37
    %s123 = ssub.s32 %s20, %s29
    %s124 = sor.u32 %s122, %s123
    %p125 = scmp.eq.s32.totalorder %s124, 0
    %s127 = sadd.s32 %s126, 1
    %s128 = scalar_select %p125, %s126, %s127
    %p131 = pneg %p125
    %p132 = scmp.eq.s32.totalorder %s11, 1
    %p133 = por %p131, %p132
    %p134 = scmp.ne.s32.totalorder %s126, %s129
    %p135 = scmp.eq.s32.totalorder %s11, 0
    %p136 = por %p134, %p135
    %p137 = scmp.ne.s32.totalorder %s126, %s129
    %p138 = scmp.eq.s32.totalorder %s16, 1
    %p139 = por %p137, %p138
    %p140 = scmp.ne.s32.totalorder %s129, %s130
    %p141 = scmp.eq.s32.totalorder %s16, 0
    %p142 = por %p140, %p141
    %p143 = scmp.ne.s32.totalorder %s129, %s130
    %p144 = scmp.eq.s32.totalorder %s17, 1
    %p145 = por %p143, %p144
    %p147 = scmp.ne.s32.totalorder %s130, %s146
    %p148 = scmp.eq.s32.totalorder %s17, 0
    %p149 = por %p147, %p148
    %s150 = ssub.s32 %s18, %s37
    %s151 = ssub.s32 %s20, %s29
    %s152 = sor.u32 %s150, %s151
    %p153 = scmp.eq.s32.totalorder %s152, 0
    %s155 = sadd.s32 %s154, 1
    %s156 = scalar_select %p153, %s154, %s155
    %p159 = pneg %p153
    %p160 = scmp.eq.s32.totalorder %s11, 1
    %p161 = por %p159, %p160
    %p162 = scmp.ne.s32.totalorder %s154, %s157
    %p163 = scmp.eq.s32.totalorder %s11, 0
    %p164 = por %p162, %p163
    %p165 = scmp.ne.s32.totalorder %s154, %s157
    %p166 = scmp.eq.s32.totalorder %s16, 1
    %p167 = por %p165, %p166
    %p168 = scmp.ne.s32.totalorder %s157, %s158
    %p169 = scmp.eq.s32.totalorder %s16, 0
    %p170 = por %p168, %p169
    %p171 = scmp.ne.s32.totalorder %s157, %s158
    %p172 = scmp.eq.s32.totalorder %s17, 1
    %p173 = por %p171, %p172
    %p175 = scmp.ne.s32.totalorder %s158, %s174
    %p176 = scmp.eq.s32.totalorder %s17, 0
    %p177 = por %p175, %p176
    %s178 = ssub.s32 %s18, %s37
    %s179 = ssub.s32 %s19, %s33
    %s180 = sor.u32 %s178, %s179
    %p181 = scmp.eq.s32.totalorder %s180, 0
    %s183 = sadd.s32 %s182, 1
    %s184 = scalar_select %p181, %s182, %s183
    %p187 = pneg %p181
    %p188 = scmp.eq.s32.totalorder %s11, 1
    %p189 = por %p187, %p188
    %p190 = scmp.ne.s32.totalorder %s182, %s185
    %p191 = scmp.eq.s32.totalorder %s11, 0
    %p192 = por %p190, %p191
    %p193 = scmp.ne.s32.totalorder %s182, %s185
    %p194 = scmp.eq.s32.totalorder %s16, 1
    %p195 = por %p193, %p194
    %p196 = scmp.ne.s32.totalorder %s185, %s186
    %p197 = scmp.eq.s32.totalorder %s16, 0
    %p198 = por %p196, %p197
    %p199 = scmp.ne.s32.totalorder %s185, %s186
    %p200 = scmp.eq.s32.totalorder %s17, 1
    %p201 = por %p199, %p200
    %p203 = scmp.ne.s32.totalorder %s186, %s202
    %p204 = scmp.eq.s32.totalorder %s17, 0
    %p205 = por %p203, %p204
    %p206 = scmp.le.s32.totalorder 1, %s11
    %p207 = scmp.lt.s32.totalorder %s11, 3
    %p208 = pnand %p206, %p207
    %p209 = pneg %p208
    // Predicated region
    $region9: #{transformer_forward.26} parent=5 // pred_check
      _
    $region10: #{transformer_forward.26} parent=5 // pred_check_branch
      %211 = sbr.rel (%p208) target = $region12
    $region11: #{transformer_forward.26} parent=5 // pred_region
      %s212 = ssub.s32 %s11, 1
    $region12: #{transformer_forward.26} parent=5 // pred_fallthru
      _
    %p213 = scmp.lt.s32.totalorder %s11, 2
    // Predicated region
    $region13: #{transformer_forward.26} parent=5 // pred_check
      %p214 = pneg %p213
    $region14: #{transformer_forward.26} parent=5 // pred_check_branch
      %216 = sbr.rel (%p214) target = $region16
    $region15: #{transformer_forward.26} parent=5 // pred_region
      // Predicated region
      $region17: #{transformer_forward.26} parent=15 // pred_check
        %p217 = pneg %p52
      $region18: #{transformer_forward.26} parent=15 // pred_check_branch
        %219 = sbr.rel (%p217) target = $region20
      $region19: #{transformer_forward.26} parent=15 // pred_region
        %p220 = scmp.lt.s32.totalorder %s18, 1
        %s221 = scalar_select %p220, %s18, 1
        %p222 = scmp.lt.s32.totalorder %s19, 0
        %s223 = scalar_select %p222, %s19, 0
        %s224 = sadd.s32 %s223, %s221
        %s225 = smul.addr %s224, 8
        %s226 = scalar_lea.vmem %s0, %s225
      $region20: #{transformer_forward.26} parent=15 // pred_fallthru
        _
      // Predicated region
      $region21: #{transformer_forward.26} parent=15 // pred_check
        %p227 = pneg %p80
      $region22: #{transformer_forward.26} parent=15 // pred_check_branch
        %229 = sbr.rel (%p227) target = $region24
      $region23: #{transformer_forward.26} parent=15 // pred_region
        %p230 = scmp.lt.s32.totalorder %s18, 1
        %s231 = scalar_select %p230, %s18, 1
        %p232 = scmp.lt.s32.totalorder %s20, 0
        %s233 = scalar_select %p232, %s20, 0
        %s234 = sadd.s32 %s233, %s231
        %s235 = scalar_lea.vmem %s1, %s234
      $region24: #{transformer_forward.26} parent=15 // pred_fallthru
        _
      // Predicated region
      $region25: #{transformer_forward.26} parent=15 // pred_check
        %p236 = pneg %p108
      $region26: #{transformer_forward.26} parent=15 // pred_check_branch
        %238 = sbr.rel (%p236) target = $region28
      $region27: #{transformer_forward.26} parent=15 // pred_region
        %p239 = scmp.lt.s32.totalorder %s18, 1
        %s240 = scalar_select %p239, %s18, 1
        %p241 = scmp.lt.s32.totalorder %s19, 0
        %s242 = scalar_select %p241, %s19, 0
        %s243 = smul.addr %s240, 4
        %s244 = sadd.s32 %s242, %s243
        %s245 = smul.addr %s244, 8
        %s246 = scalar_lea.vmem %s2, %s245
      $region28: #{transformer_forward.26} parent=15 // pred_fallthru
        _
      // Predicated region
      $region29: #{transformer_forward.26} parent=15 // pred_check
        %p247 = pneg %p136
      $region30: #{transformer_forward.26} parent=15 // pred_check_branch
        %249 = sbr.rel (%p247) target = $region32
      $region31: #{transformer_forward.26} parent=15 // pred_region
        %p250 = scmp.lt.s32.totalorder %s18, 1
        %s251 = scalar_select %p250, %s18, 1
        %p252 = scmp.lt.s32.totalorder %s20, 0
        %s253 = scalar_select %p252, %s20, 0
        %s254 = smul.addr %s251, 4
        %s255 = sadd.s32 %s253, %s254
        %s256 = smul.addr %s255, 8
        %s257 = scalar_lea.vmem %s3, %s256
      $region32: #{transformer_forward.26} parent=15 // pred_fallthru
        _
      // Predicated region
      $region33: #{transformer_forward.26} parent=15 // pred_check
        %p258 = pneg %p164
      $region34: #{transformer_forward.26} parent=15 // pred_check_branch
        %260 = sbr.rel (%p258) target = $region36
      $region35: #{transformer_forward.26} parent=15 // pred_region
        %p261 = scmp.lt.s32.totalorder %s18, 1
        %s262 = scalar_select %p261, %s18, 1
        %p263 = scmp.lt.s32.totalorder %s20, 0
        %s264 = scalar_select %p263, %s20, 0
        %s265 = smul.addr %s262, 4
        %s266 = sadd.s32 %s264, %s265
        %s267 = smul.addr %s266, 8
        %s268 = scalar_lea.vmem %s4, %s267
      $region36: #{transformer_forward.26} parent=15 // pred_fallthru
        _
    $region16: #{transformer_forward.26} parent=5 // pred_fallthru
      _
    %p269 = scmp.le.s32.totalorder 1, %s11
    %p270 = scmp.lt.s32.totalorder %s11, 3
    %p271 = pnand %p269, %p270
    %p272 = pneg %p271
    // Predicated region
    $region37: #{transformer_forward.26} parent=5 // pred_check
      _
    $region38: #{transformer_forward.26} parent=5 // pred_check_branch
      %274 = sbr.rel (%p271) target = $region40
    $region39: #{transformer_forward.26} parent=5 // pred_region
      %s275 = ssub.s32 %s11, 1
      %p276 = scmp.lt.s32.totalorder %s21, 1
      %s277 = scalar_select %p276, %s21, 1
      %p278 = scmp.lt.s32.totalorder %s22, 0
      %s279 = scalar_select %p278, %s22, 0
      %s280 = sadd.s32 %s279, %s277
      %s281 = smul.addr %s280, 8
      %s282 = scalar_lea.vmem %s0, %s281
      %p283 = pneg %p58
      %p284 = pneg %p55
      %p285 = scmp.lt.s32.totalorder %s21, 1
      %s286 = scalar_select %p285, %s21, 1
      %p287 = scmp.lt.s32.totalorder %s23, 0
      %s288 = scalar_select %p287, %s23, 0
      %s289 = sadd.s32 %s288, %s286
      %s290 = scalar_lea.vmem %s1, %s289
      %p291 = pneg %p86
      %p292 = pneg %p83
      %p293 = scmp.lt.s32.totalorder %s21, 1
      %s294 = scalar_select %p293, %s21, 1
      %p295 = scmp.lt.s32.totalorder %s22, 0
      %s296 = scalar_select %p295, %s22, 0
      %s297 = smul.addr %s294, 4
      %s298 = sadd.s32 %s296, %s297
      %s299 = smul.addr %s298, 8
      %s300 = scalar_lea.vmem %s2, %s299
      %p301 = pneg %p114
      %p302 = pneg %p111
      %p303 = scmp.lt.s32.totalorder %s21, 1
      %s304 = scalar_select %p303, %s21, 1
      %p305 = scmp.lt.s32.totalorder %s23, 0
      %s306 = scalar_select %p305, %s23, 0
      %s307 = smul.addr %s304, 4
      %s308 = sadd.s32 %s306, %s307
      %s309 = smul.addr %s308, 8
      %s310 = scalar_lea.vmem %s3, %s309
      %p311 = pneg %p142
      %p312 = pneg %p139
      %p313 = scmp.lt.s32.totalorder %s21, 1
      %s314 = scalar_select %p313, %s21, 1
      %p315 = scmp.lt.s32.totalorder %s23, 0
      %s316 = scalar_select %p315, %s23, 0
      %s317 = smul.addr %s314, 4
      %s318 = sadd.s32 %s316, %s317
      %s319 = smul.addr %s318, 8
      %s320 = scalar_lea.vmem %s4, %s319
      %p321 = pneg %p170
      %p322 = pneg %p167
      %p323 = pneg %p198
      %p324 = pneg %p195
      %p325 = scmp.lt.s32.totalorder %s21, 1
      %s326 = scalar_select %p325, %s21, 1
      %p327 = scmp.lt.s32.totalorder %s22, 0
      %s328 = scalar_select %p327, %s22, 0
      %s329 = smul.addr %s326, 4
      %s330 = sadd.s32 %s328, %s329
      %s331 = smul.addr %s330, 8
      %s332 = scalar_lea.vmem %s5, %s331
      %p333 = scmp.lt.s32.totalorder %s21, 1
      %s334 = scalar_select %p333, %s21, 1
      %p335 = scmp.lt.s32.totalorder %s22, 0
      %s336 = scalar_select %p335, %s22, 0
      %s337 = sadd.s32 %s336, %s334
      %s338 = smul.addr %s337, 8
      %s339 = scalar_lea.vmem %s0, %s338
      %p340 = scmp.lt.s32.totalorder %s21, 1
      %s341 = scalar_select %p340, %s21, 1
      %p342 = scmp.lt.s32.totalorder %s23, 0
      %s343 = scalar_select %p342, %s23, 0
      %s344 = sadd.s32 %s343, %s341
      %s345 = scalar_lea.vmem %s1, %s344
      %p346 = scmp.lt.s32.totalorder %s21, 1
      %s347 = scalar_select %p346, %s21, 1
      %p348 = scmp.lt.s32.totalorder %s22, 0
      %s349 = scalar_select %p348, %s22, 0
      %s350 = smul.addr %s347, 4
      %s351 = sadd.s32 %s349, %s350
      %s352 = smul.addr %s351, 8
      %s353 = scalar_lea.vmem %s2, %s352
      %p354 = scmp.lt.s32.totalorder %s21, 1
      %s355 = scalar_select %p354, %s21, 1
      %p356 = scmp.lt.s32.totalorder %s23, 0
      %s357 = scalar_select %p356, %s23, 0
      %s358 = smul.addr %s355, 4
      %s359 = sadd.s32 %s357, %s358
      %s360 = smul.addr %s359, 8
      %s361 = scalar_lea.vmem %s3, %s360
      %p362 = scmp.lt.s32.totalorder %s21, 1
      %s363 = scalar_select %p362, %s21, 1
      %p364 = scmp.lt.s32.totalorder %s23, 0
      %s365 = scalar_select %p364, %s23, 0
      %s366 = smul.addr %s363, 4
      %s367 = sadd.s32 %s365, %s366
      %s368 = smul.addr %s367, 8
      %s369 = scalar_lea.vmem %s4, %s368
      %p370 = scmp.lt.s32.totalorder %s21, 1
      %s371 = scalar_select %p370, %s21, 1
      %p372 = scmp.lt.s32.totalorder %s22, 0
      %s373 = scalar_select %p372, %s22, 0
      %s374 = smul.addr %s371, 4
      %s375 = sadd.s32 %s373, %s374
      %s376 = smul.addr %s375, 8
      %s377 = scalar_lea.vmem %s5, %s376
      %p378 = scmp.eq.s32.totalorder %s23, 0
      // Predicated region
      $region41: #{transformer_forward.26} parent=39 // pred_check
        %p379 = pneg %p378
      $region42: #{transformer_forward.26} parent=39 // pred_check_branch
        %381 = sbr.rel (%p379) target = $region44
      $region43: #{transformer_forward.26} parent=39 // pred_region
        %vm382 = vcmask 7168
        %383 = vst.msk [vmem:[#allocation2] sm:$0xff] %vm382, -inf
        %384 = vst.msk [vmem:[#allocation2 + $0x8] sm:$0xff] %vm382, -inf
        %385 = vst.msk [vmem:[#allocation2 + $0x10] sm:$0xff] %vm382, -inf
        %386 = vst.msk [vmem:[#allocation2 + $0x18] sm:$0xff] %vm382, -inf
        %387 = vst.msk [vmem:[#allocation3] sm:$0xff] %vm382, 0.0
        %388 = vst.msk [vmem:[#allocation3 + $0x8] sm:$0xff] %vm382, 0.0
        %389 = vst.msk [vmem:[#allocation3 + $0x10] sm:$0xff] %vm382, 0.0
        %390 = vst.msk [vmem:[#allocation3 + $0x18] sm:$0xff] %vm382, 0.0
        %vm391 = vcmask 64512
        %392 = vst.msk [vmem:[#allocation4] sm:$0xff] %vm391, 0.0
        %393 = vst.msk [vmem:[#allocation4 + $0x8] sm:$0xff] %vm391, 0.0
        %394 = vst.msk [vmem:[#allocation4 + $0x10] sm:$0xff] %vm391, 0.0
        %395 = vst.msk [vmem:[#allocation4 + $0x18] sm:$0xff] %vm391, 0.0
      $region44: #{transformer_forward.26} parent=39 // pred_fallthru
        _
      %v396 = vld [vmem:[%s353] sm:$0xff]
      %v397 = vld [vmem:[%s353 + $0x8] sm:$0xff]
      %v398 = vld [vmem:[%s353 + $0x10] sm:$0xff]
      %v399 = vld [vmem:[%s353 + $0x18] sm:$0xff]
      %v400 = vld [vmem:[%s361] sm:$0xff]
      %v401 = vld [vmem:[%s361 + $0x8] sm:$0xff]
      %v402 = vld [vmem:[%s361 + $0x10] sm:$0xff]
      %v403 = vld [vmem:[%s361 + $0x18] sm:$0xff]
      %v404 = vld [vmem:[%s369] sm:$0xff]
      %v405 = vld [vmem:[%s369 + $0x8] sm:$0xff]
      %v406 = vld [vmem:[%s369 + $0x10] sm:$0xff]
      %v407 = vld [vmem:[%s369 + $0x18] sm:$0xff]
      %vm408 = vcmask 64512
      %v410 = vsel %vm408, %v396, 0
      %v413 = vsel %vm408, %v400, 0
      %415 = vmatprep.subr.mxu0 0.0
      %416 = vmatpush1.xpose.msra.mxu0 %v413
      %417 = vmatprep.subr.mxu0 0.0
      %418 = vmatpush1.xpose.msra.mxu0 0.0
      %419 = vmatprep.subr.mxu0 0.0
      %420 = vmatpush1.xpose.msra.mxu0 0.0
      %421 = vmatprep.subr.mxu0 0.0
      %422 = vmatpush1.xpose.msra.mxu0 0.0
      %423 = vmatprep.subr.mxu0 0.0
      %424 = vmatpush1.xpose.msra.mxu0 0.0
      %425 = vmatprep.subr.mxu0 0.0
      %426 = vmatpush1.xpose.msra.mxu0 0.0
      %427 = vmatprep.subr.mxu0 0.0
      %428 = vmatpush1.xpose.msra.mxu0 0.0
      %429 = vmatprep.subr.mxu0 0.0
      %430 = vmatpush1.xpose.msra.mxu0 0.0
      %431 = vmatprep.subr.mxu0 0.0
      %432 = vmatpush1.xpose.msra.mxu0 0.0
      %433 = vmatprep.subr.mxu0 0.0
      %434 = vmatpush1.xpose.msra.mxu0 0.0
      %435 = vmatprep.subr.mxu0 0.0
      %436 = vmatpush1.xpose.msra.mxu0 0.0
      %437 = vmatprep.subr.mxu0 0.0
      %438 = vmatpush1.xpose.msra.mxu0 0.0
      %439 = vmatprep.subr.mxu0 0.0
      %440 = vmatpush1.xpose.msra.mxu0 0.0
      %441 = vmatprep.subr.mxu0 0.0
      %442 = vmatpush1.xpose.msra.mxu0 0.0
      %443 = vmatprep.subr.mxu0 0.0
      %444 = vmatpush1.xpose.msra.mxu0 0.0
      %445 = vmatprep.subr.mxu0 0.0
      %446 = vmatpush1.xpose.msra.mxu0 0.0
      %447 = vmatprep.subr.mxu0 0.0
      %448 = vmatpush1.xpose.msra.mxu0 0.0
      %449 = vmatprep.subr.mxu0 0.0
      %450 = vmatpush1.xpose.msra.mxu0 0.0
      %451 = vmatprep.subr.mxu0 0.0
      %452 = vmatpush1.xpose.msra.mxu0 0.0
      %453 = vmatprep.subr.mxu0 0.0
      %454 = vmatpush1.xpose.msra.mxu0 0.0
      %455 = vmatprep.subr.mxu0 0.0
      %456 = vmatpush1.xpose.msra.mxu0 0.0
      %457 = vmatprep.subr.mxu0 0.0
      %458 = vmatpush1.xpose.msra.mxu0 0.0
      %459 = vmatprep.subr.mxu0 0.0
      %460 = vmatpush1.xpose.msra.mxu0 0.0
      %461 = vmatprep.subr.mxu0 0.0
      %462 = vmatpush1.xpose.msra.mxu0 0.0
      %463 = vmatprep.subr.mxu0 0.0
      %464 = vmatpush1.xpose.msra.mxu0 0.0
      %465 = vmatprep.subr.mxu0 0.0
      %466 = vmatpush1.xpose.msra.mxu0 0.0
      %467 = vmatprep.subr.mxu0 0.0
      %468 = vmatpush1.xpose.msra.mxu0 0.0
      %469 = vmatprep.subr.mxu0 0.0
      %470 = vmatpush1.xpose.msra.mxu0 0.0
      %471 = vmatprep.subr.mxu0 0.0
      %472 = vmatpush1.xpose.msra.mxu0 0.0
      %473 = vmatprep.subr.mxu0 0.0
      %474 = vmatpush1.xpose.msra.mxu0 0.0
      %475 = vmatprep.subr.mxu0 0.0
      %476 = vmatpush1.xpose.msra.mxu0 0.0
      %477 = vmatprep.subr.mxu0 0.0
      %478 = vmatpush1.xpose.msra.mxu0 0.0
      %479 = vmatprep.mubr.f32.mxu0 0.0
      %480 = vmatmul.mubr.f32.gmra.mrb[0].mxu0 %v410
      %v481 = vpop.f32.mrb[0].mxu0
      %v482 = vadd.f32 0.0, %v481
      %v483 = vpop.f32.mrb[0].mxu0
      %484 = vdwg.mxu0
      %v486 = vsel %vm408, %v397, 0
      %v489 = vsel %vm408, %v401, 0
      %491 = vmatprep.subr.mxu0 0.0
      %492 = vmatpush1.xpose.msra.mxu0 %v489
      %493 = vmatprep.subr.mxu0 0.0
      %494 = vmatpush1.xpose.msra.mxu0 0.0
      %495 = vmatprep.subr.mxu0 0.0
      %496 = vmatpush1.xpose.msra.mxu0 0.0
      %497 = vmatprep.subr.mxu0 0.0
      %498 = vmatpush1.xpose.msra.mxu0 0.0
      %499 = vmatprep.subr.mxu0 0.0
      %500 = vmatpush1.xpose.msra.mxu0 0.0
      %501 = vmatprep.subr.mxu0 0.0
      %502 = vmatpush1.xpose.msra.mxu0 0.0
      %503 = vmatprep.subr.mxu0 0.0
      %504 = vmatpush1.xpose.msra.mxu0 0.0
      %505 = vmatprep.subr.mxu0 0.0
      %506 = vmatpush1.xpose.msra.mxu0 0.0
      %507 = vmatprep.subr.mxu0 0.0
      %508 = vmatpush1.xpose.msra.mxu0 0.0
      %509 = vmatprep.subr.mxu0 0.0
      %510 = vmatpush1.xpose.msra.mxu0 0.0
      %511 = vmatprep.subr.mxu0 0.0
      %512 = vmatpush1.xpose.msra.mxu0 0.0
      %513 = vmatprep.subr.mxu0 0.0
      %514 = vmatpush1.xpose.msra.mxu0 0.0
      %515 = vmatprep.subr.mxu0 0.0
      %516 = vmatpush1.xpose.msra.mxu0 0.0
      %517 = vmatprep.subr.mxu0 0.0
      %518 = vmatpush1.xpose.msra.mxu0 0.0
      %519 = vmatprep.subr.mxu0 0.0
      %520 = vmatpush1.xpose.msra.mxu0 0.0
      %521 = vmatprep.subr.mxu0 0.0
      %522 = vmatpush1.xpose.msra.mxu0 0.0
      %523 = vmatprep.subr.mxu0 0.0
      %524 = vmatpush1.xpose.msra.mxu0 0.0
      %525 = vmatprep.subr.mxu0 0.0
      %526 = vmatpush1.xpose.msra.mxu0 0.0
      %527 = vmatprep.subr.mxu0 0.0
      %528 = vmatpush1.xpose.msra.mxu0 0.0
      %529 = vmatprep.subr.mxu0 0.0
      %530 = vmatpush1.xpose.msra.mxu0 0.0
      %531 = vmatprep.subr.mxu0 0.0
      %532 = vmatpush1.xpose.msra.mxu0 0.0
      %533 = vmatprep.subr.mxu0 0.0
      %534 = vmatpush1.xpose.msra.mxu0 0.0
      %535 = vmatprep.subr.mxu0 0.0
      %536 = vmatpush1.xpose.msra.mxu0 0.0
      %537 = vmatprep.subr.mxu0 0.0
      %538 = vmatpush1.xpose.msra.mxu0 0.0
      %539 = vmatprep.subr.mxu0 0.0
      %540 = vmatpush1.xpose.msra.mxu0 0.0
      %541 = vmatprep.subr.mxu0 0.0
      %542 = vmatpush1.xpose.msra.mxu0 0.0
      %543 = vmatprep.subr.mxu0 0.0
      %544 = vmatpush1.xpose.msra.mxu0 0.0
      %545 = vmatprep.subr.mxu0 0.0
      %546 = vmatpush1.xpose.msra.mxu0 0.0
      %547 = vmatprep.subr.mxu0 0.0
      %548 = vmatpush1.xpose.msra.mxu0 0.0
      %549 = vmatprep.subr.mxu0 0.0
      %550 = vmatpush1.xpose.msra.mxu0 0.0
      %551 = vmatprep.subr.mxu0 0.0
      %552 = vmatpush1.xpose.msra.mxu0 0.0
      %553 = vmatprep.subr.mxu0 0.0
      %554 = vmatpush1.xpose.msra.mxu0 0.0
      %555 = vmatprep.mubr.f32.mxu0 0.0
      %556 = vmatmul.mubr.f32.gmra.mrb[0].mxu0 %v486
      %v557 = vpop.f32.mrb[0].mxu0
      %v558 = vadd.f32 0.0, %v557
      %v559 = vpop.f32.mrb[0].mxu0
      %560 = vdwg.mxu0
      %v562 = vsel %vm408, %v398, 0
      %v565 = vsel %vm408, %v402, 0
      %567 = vmatprep.subr.mxu0 0.0
      %568 = vmatpush1.xpose.msra.mxu0 %v565
      %569 = vmatprep.subr.mxu0 0.0
      %570 = vmatpush1.xpose.msra.mxu0 0.0
      %571 = vmatprep.subr.mxu0 0.0
      %572 = vmatpush1.xpose.msra.mxu0 0.0
      %573 = vmatprep.subr.mxu0 0.0
      %574 = vmatpush1.xpose.msra.mxu0 0.0
      %575 = vmatprep.subr.mxu0 0.0
      %576 = vmatpush1.xpose.msra.mxu0 0.0
      %577 = vmatprep.subr.mxu0 0.0
      %578 = vmatpush1.xpose.msra.mxu0 0.0
      %579 = vmatprep.subr.mxu0 0.0
      %580 = vmatpush1.xpose.msra.mxu0 0.0
      %581 = vmatprep.subr.mxu0 0.0
      %582 = vmatpush1.xpose.msra.mxu0 0.0
      %583 = vmatprep.subr.mxu0 0.0
      %584 = vmatpush1.xpose.msra.mxu0 0.0
      %585 = vmatprep.subr.mxu0 0.0
      %586 = vmatpush1.xpose.msra.mxu0 0.0
      %587 = vmatprep.subr.mxu0 0.0
      %588 = vmatpush1.xpose.msra.mxu0 0.0
      %589 = vmatprep.subr.mxu0 0.0
      %590 = vmatpush1.xpose.msra.mxu0 0.0
      %591 = vmatprep.subr.mxu0 0.0
      %592 = vmatpush1.xpose.msra.mxu0 0.0
      %593 = vmatprep.subr.mxu0 0.0
      %594 = vmatpush1.xpose.msra.mxu0 0.0
      %595 = vmatprep.subr.mxu0 0.0
      %596 = vmatpush1.xpose.msra.mxu0 0.0
      %597 = vmatprep.subr.mxu0 0.0
      %598 = vmatpush1.xpose.msra.mxu0 0.0
      %599 = vmatprep.subr.mxu0 0.0
      %600 = vmatpush1.xpose.msra.mxu0 0.0
      %601 = vmatprep.subr.mxu0 0.0
      %602 = vmatpush1.xpose.msra.mxu0 0.0
      %603 = vmatprep.subr.mxu0 0.0
      %604 = vmatpush1.xpose.msra.mxu0 0.0
      %605 = vmatprep.subr.mxu0 0.0
      %606 = vmatpush1.xpose.msra.mxu0 0.0
      %607 = vmatprep.subr.mxu0 0.0
      %608 = vmatpush1.xpose.msra.mxu0 0.0
      %609 = vmatprep.subr.mxu0 0.0
      %610 = vmatpush1.xpose.msra.mxu0 0.0
      %611 = vmatprep.subr.mxu0 0.0
      %612 = vmatpush1.xpose.msra.mxu0 0.0
      %613 = vmatprep.subr.mxu0 0.0
      %614 = vmatpush1.xpose.msra.mxu0 0.0
      %615 = vmatprep.subr.mxu0 0.0
      %616 = vmatpush1.xpose.msra.mxu0 0.0
      %617 = vmatprep.subr.mxu0 0.0
      %618 = vmatpush1.xpose.msra.mxu0 0.0
      %619 = vmatprep.subr.mxu0 0.0
      %620 = vmatpush1.xpose.msra.mxu0 0.0
      %621 = vmatprep.subr.mxu0 0.0
      %622 = vmatpush1.xpose.msra.mxu0 0.0
      %623 = vmatprep.subr.mxu0 0.0
      %624 = vmatpush1.xpose.msra.mxu0 0.0
      %625 = vmatprep.subr.mxu0 0.0
      %626 = vmatpush1.xpose.msra.mxu0 0.0
      %627 = vmatprep.subr.mxu0 0.0
      %628 = vmatpush1.xpose.msra.mxu0 0.0
      %629 = vmatprep.subr.mxu0 0.0
      %630 = vmatpush1.xpose.msra.mxu0 0.0
      %631 = vmatprep.mubr.f32.mxu0 0.0
      %632 = vmatmul.mubr.f32.gmra.mrb[0].mxu0 %v562
      %v633 = vpop.f32.mrb[0].mxu0
      %v634 = vadd.f32 0.0, %v633
      %v635 = vpop.f32.mrb[0].mxu0
      %636 = vdwg.mxu0
      %v638 = vsel %vm408, %v399, 0
      %v641 = vsel %vm408, %v403, 0
      %643 = vmatprep.subr.mxu0 0.0
      %644 = vmatpush1.xpose.msra.mxu0 %v641
      %645 = vmatprep.subr.mxu0 0.0
      %646 = vmatpush1.xpose.msra.mxu0 0.0
      %647 = vmatprep.subr.mxu0 0.0
      %648 = vmatpush1.xpose.msra.mxu0 0.0
      %649 = vmatprep.subr.mxu0 0.0
      %650 = vmatpush1.xpose.msra.mxu0 0.0
      %651 = vmatprep.subr.mxu0 0.0
      %652 = vmatpush1.xpose.msra.mxu0 0.0
      %653 = vmatprep.subr.mxu0 0.0
      %654 = vmatpush1.xpose.msra.mxu0 0.0
      %655 = vmatprep.subr.mxu0 0.0
      %656 = vmatpush1.xpose.msra.mxu0 0.0
      %657 = vmatprep.subr.mxu0 0.0
      %658 = vmatpush1.xpose.msra.mxu0 0.0
      %659 = vmatprep.subr.mxu0 0.0
      %660 = vmatpush1.xpose.msra.mxu0 0.0
      %661 = vmatprep.subr.mxu0 0.0
      %662 = vmatpush1.xpose.msra.mxu0 0.0
      %663 = vmatprep.subr.mxu0 0.0
      %664 = vmatpush1.xpose.msra.mxu0 0.0
      %665 = vmatprep.subr.mxu0 0.0
      %666 = vmatpush1.xpose.msra.mxu0 0.0
      %667 = vmatprep.subr.mxu0 0.0
      %668 = vmatpush1.xpose.msra.mxu0 0.0
      %669 = vmatprep.subr.mxu0 0.0
      %670 = vmatpush1.xpose.msra.mxu0 0.0
      %671 = vmatprep.subr.mxu0 0.0
      %672 = vmatpush1.xpose.msra.mxu0 0.0
      %673 = vmatprep.subr.mxu0 0.0
      %674 = vmatpush1.xpose.msra.mxu0 0.0
      %675 = vmatprep.subr.mxu0 0.0
      %676 = vmatpush1.xpose.msra.mxu0 0.0
      %677 = vmatprep.subr.mxu0 0.0
      %678 = vmatpush1.xpose.msra.mxu0 0.0
      %679 = vmatprep.subr.mxu0 0.0
      %680 = vmatpush1.xpose.msra.mxu0 0.0
      %681 = vmatprep.subr.mxu0 0.0
      %682 = vmatpush1.xpose.msra.mxu0 0.0
      %683 = vmatprep.subr.mxu0 0.0
      %684 = vmatpush1.xpose.msra.mxu0 0.0
      %685 = vmatprep.subr.mxu0 0.0
      %686 = vmatpush1.xpose.msra.mxu0 0.0
      %687 = vmatprep.subr.mxu0 0.0
      %688 = vmatpush1.xpose.msra.mxu0 0.0
      %689 = vmatprep.subr.mxu0 0.0
      %690 = vmatpush1.xpose.msra.mxu0 0.0
      %691 = vmatprep.subr.mxu0 0.0
      %692 = vmatpush1.xpose.msra.mxu0 0.0
      %693 = vmatprep.subr.mxu0 0.0
      %694 = vmatpush1.xpose.msra.mxu0 0.0
      %695 = vmatprep.subr.mxu0 0.0
      %696 = vmatpush1.xpose.msra.mxu0 0.0
      %697 = vmatprep.subr.mxu0 0.0
      %698 = vmatpush1.xpose.msra.mxu0 0.0
      %699 = vmatprep.subr.mxu0 0.0
      %700 = vmatpush1.xpose.msra.mxu0 0.0
      %701 = vmatprep.subr.mxu0 0.0
      %702 = vmatpush1.xpose.msra.mxu0 0.0
      %703 = vmatprep.subr.mxu0 0.0
      %704 = vmatpush1.xpose.msra.mxu0 0.0
      %705 = vmatprep.subr.mxu0 0.0
      %706 = vmatpush1.xpose.msra.mxu0 0.0
      %707 = vmatprep.mubr.f32.mxu0 0.0
      %708 = vmatmul.mubr.f32.gmra.mrb[0].mxu0 %v638
      %v709 = vpop.f32.mrb[0].mxu0
      %v710 = vadd.f32 0.0, %v709
      %v711 = vpop.f32.mrb[0].mxu0
      %712 = vdwg.mxu0
      %v713 = vld [vmem:[%s339] sm:$0xff]
      %vm714 = vcmp.ne.f32.partialorder %v713, 0.0
      %v715 = vld [vmem:[%s345] sm:$0x1]
      %vm716 = vcmp.ne.f32.partialorder %v715, 0.0
      %v717 = vsel %vm714, 1, 0
      %718 = vset.pattern.permute.xlu0 0
      %719 = vperm.xlu0 %718, %v717
      %v720 = vpop.permute.xlu0 %719
      %vm721 = vcmp.eq.s32.totalorder %v720, 1
      %v722 = vsel %vm716, 1, 0
      %v723 = vlaneseq
      %v724 = vshrl.u32 %v723, 7
      %v725 = vsub.s32 0, %v724
      %v726 = vrot.slane %v722, %v725
      %vm727 = vcmp.eq.s32.totalorder %v726, 1
      %vm728 = vmand %vm721, %vm727
      %v729 = vsel %vm728, 1, 0
      %vm730 = vcmp.eq.s32.totalorder %v729, 1
      %v731 = vsel %vm730, %v482, -1e+09
      %v732 = vsel %vm730, %v558, -1e+09
      %v733 = vsel %vm730, %v634, -1e+09
      %v734 = vsel %vm730, %v710, -1e+09
      %v735 = vld [vmem:[#allocation2] sm:$0xff]
      %v736 = vld [vmem:[#allocation2 + $0x8] sm:$0xff]
      %v737 = vld [vmem:[#allocation2 + $0x10] sm:$0xff]
      %v738 = vld [vmem:[#allocation2 + $0x18] sm:$0xff]
      %v739 = vsel %vm408, %v731, -inf
      %740 = vmax.xlane.f32.xlu0 %v739
      %v741 = vpop.xlane.xlu0 %740
      %v742 = vsel %vm408, %v732, -inf
      %743 = vmax.xlane.f32.xlu0 %v742
      %v744 = vpop.xlane.xlu0 %743
      %v745 = vsel %vm408, %v733, -inf
      %746 = vmax.xlane.f32.xlu0 %v745
      %v747 = vpop.xlane.xlu0 %746
      %v748 = vsel %vm408, %v734, -inf
      %749 = vmax.xlane.f32.xlu0 %v748
      %v750 = vpop.xlane.xlu0 %749
      %v751 = vmax.f32 %v735, %v741
      %v752 = vmax.f32 %v736, %v744
      %v753 = vmax.f32 %v737, %v747
      %v754 = vmax.f32 %v738, %v750
      %v755 = vsub.f32 %v735, %v751
      %v756 = vsub.f32 %v736, %v752
      %v757 = vsub.f32 %v737, %v753
      %v758 = vsub.f32 %v738, %v754
      %v759 = vmul.f32 %v755, 1.442695
      %v760 = vpow.pop %v759
      %v761 = vmul.f32 %v756, 1.442695
      %v762 = vpow.pop %v761
      %v763 = vmul.f32 %v757, 1.442695
      %v764 = vpow.pop %v763
      %v765 = vmul.f32 %v758, 1.442695
      %v766 = vpow.pop %v765
      %768 = vset.pattern.permute.xlu0 0
      %769 = vperm.xlu0 %768, %v751
      %v770 = vpop.permute.xlu0 %769
      %773 = vset.pattern.permute.xlu0 0
      %774 = vperm.xlu0 %773, %v752
      %v775 = vpop.permute.xlu0 %774
      %778 = vset.pattern.permute.xlu0 0
      %779 = vperm.xlu0 %778, %v753
      %v780 = vpop.permute.xlu0 %779
      %783 = vset.pattern.permute.xlu0 0
      %784 = vperm.xlu0 %783, %v754
      %v785 = vpop.permute.xlu0 %784
      %v787 = vsub.f32 %v731, %v770
      %v788 = vsub.f32 %v732, %v775
      %v789 = vsub.f32 %v733, %v780
      %v790 = vsub.f32 %v734, %v785
      %v791 = vmul.f32 %v787, 1.442695
      %v792 = vpow.pop %v791
      %v793 = vmul.f32 %v788, 1.442695
      %v794 = vpow.pop %v793
      %v795 = vmul.f32 %v789, 1.442695
      %v796 = vpow.pop %v795
      %v797 = vmul.f32 %v790, 1.442695
      %v798 = vpow.pop %v797
      %v799 = vld [vmem:[#allocation3] sm:$0xff]
      %v800 = vld [vmem:[#allocation3 + $0x8] sm:$0xff]
      %v801 = vld [vmem:[#allocation3 + $0x10] sm:$0xff]
      %v802 = vld [vmem:[#allocation3 + $0x18] sm:$0xff]
      %v803 = vmul.f32 %v760, %v799
      %v804 = vmul.f32 %v762, %v800
      %v805 = vmul.f32 %v764, %v801
      %v806 = vmul.f32 %v766, %v802
      %v807 = vsel %vm408, %v792, 0.0
      %808 = vadd.xlane.f32.xlu0 %v807
      %v809 = vpop.xlane.xlu0 %808
      %v810 = vsel %vm408, %v794, 0.0
      %811 = vadd.xlane.f32.xlu0 %v810
      %v812 = vpop.xlane.xlu0 %811
      %v813 = vsel %vm408, %v796, 0.0
      %814 = vadd.xlane.f32.xlu0 %v813
      %v815 = vpop.xlane.xlu0 %814
      %v816 = vsel %vm408, %v798, 0.0
      %817 = vadd.xlane.f32.xlu0 %v816
      %v818 = vpop.xlane.xlu0 %817
      %v819 = vadd.f32 %v803, %v809
      %v820 = vadd.f32 %v804, %v812
      %v821 = vadd.f32 %v805, %v815
      %v822 = vadd.f32 %v806, %v818
      %vm823 = vcmask 7168
      %824 = vst.msk [vmem:[#allocation3] sm:$0xff] %vm823, %v819
      %825 = vst.msk [vmem:[#allocation3 + $0x8] sm:$0xff] %vm823, %v820
      %826 = vst.msk [vmem:[#allocation3 + $0x10] sm:$0xff] %vm823, %v821
      %827 = vst.msk [vmem:[#allocation3 + $0x18] sm:$0xff] %vm823, %v822
      %v828 = vld [vmem:[#allocation4] sm:$0xff]
      %v829 = vld [vmem:[#allocation4 + $0x8] sm:$0xff]
      %v830 = vld [vmem:[#allocation4 + $0x10] sm:$0xff]
      %v831 = vld [vmem:[#allocation4 + $0x18] sm:$0xff]
      %833 = vset.pattern.permute.xlu0 0
      %834 = vperm.xlu0 %833, %v760
      %v835 = vpop.permute.xlu0 %834
      %838 = vset.pattern.permute.xlu0 0
      %839 = vperm.xlu0 %838, %v762
      %v840 = vpop.permute.xlu0 %839
      %843 = vset.pattern.permute.xlu0 0
      %844 = vperm.xlu0 %843, %v764
      %v845 = vpop.permute.xlu0 %844
      %848 = vset.pattern.permute.xlu0 0
      %849 = vperm.xlu0 %848, %v766
      %v850 = vpop.permute.xlu0 %849
      %v852 = vmul.f32 %v835, %v828
      %v853 = vmul.f32 %v840, %v829
      %v854 = vmul.f32 %v845, %v830
      %v855 = vmul.f32 %v850, %v831
      %v857 = vsel %vm408, %v792, 0
      %859 = vmatprep.subr.mxu0 0.0
      %860 = vmatpush1.msra.mxu0 %v404
      %861 = vmatprep.subr.mxu0 0.0
      %862 = vmatpush1.msra.mxu0 0.0
      %863 = vmatprep.subr.mxu0 0.0
      %864 = vmatpush1.msra.mxu0 0.0
      %865 = vmatprep.subr.mxu0 0.0
      %866 = vmatpush1.msra.mxu0 0.0
      %867 = vmatprep.subr.mxu0 0.0
      %868 = vmatpush1.msra.mxu0 0.0
      %869 = vmatprep.subr.mxu0 0.0
      %870 = vmatpush1.msra.mxu0 0.0
      %871 = vmatprep.subr.mxu0 0.0
      %872 = vmatpush1.msra.mxu0 0.0
      %873 = vmatprep.subr.mxu0 0.0
      %874 = vmatpush1.msra.mxu0 0.0
      %875 = vmatprep.subr.mxu0 0.0
      %876 = vmatpush1.msra.mxu0 0.0
      %877 = vmatprep.subr.mxu0 0.0
      %878 = vmatpush1.msra.mxu0 0.0
      %879 = vmatprep.subr.mxu0 0.0
      %880 = vmatpush1.msra.mxu0 0.0
      %881 = vmatprep.subr.mxu0 0.0
      %882 = vmatpush1.msra.mxu0 0.0
      %883 = vmatprep.subr.mxu0 0.0
      %884 = vmatpush1.msra.mxu0 0.0
      %885 = vmatprep.subr.mxu0 0.0
      %886 = vmatpush1.msra.mxu0 0.0
      %887 = vmatprep.subr.mxu0 0.0
      %888 = vmatpush1.msra.mxu0 0.0
      %889 = vmatprep.subr.mxu0 0.0
      %890 = vmatpush1.msra.mxu0 0.0
      %891 = vmatprep.subr.mxu0 0.0
      %892 = vmatpush1.msra.mxu0 0.0
      %893 = vmatprep.subr.mxu0 0.0
      %894 = vmatpush1.msra.mxu0 0.0
      %895 = vmatprep.subr.mxu0 0.0
      %896 = vmatpush1.msra.mxu0 0.0
      %897 = vmatprep.subr.mxu0 0.0
      %898 = vmatpush1.msra.mxu0 0.0
      %899 = vmatprep.subr.mxu0 0.0
      %900 = vmatpush1.msra.mxu0 0.0
      %901 = vmatprep.subr.mxu0 0.0
      %902 = vmatpush1.msra.mxu0 0.0
      %903 = vmatprep.subr.mxu0 0.0
      %904 = vmatpush1.msra.mxu0 0.0
      %905 = vmatprep.subr.mxu0 0.0
      %906 = vmatpush1.msra.mxu0 0.0
      %907 = vmatprep.subr.mxu0 0.0
      %908 = vmatpush1.msra.mxu0 0.0
      %909 = vmatprep.subr.mxu0 0.0
      %910 = vmatpush1.msra.mxu0 0.0
      %911 = vmatprep.subr.mxu0 0.0
      %912 = vmatpush1.msra.mxu0 0.0
      %913 = vmatprep.subr.mxu0 0.0
      %914 = vmatpush1.msra.mxu0 0.0
      %915 = vmatprep.subr.mxu0 0.0
      %916 = vmatpush1.msra.mxu0 0.0
      %917 = vmatprep.subr.mxu0 0.0
      %918 = vmatpush1.msra.mxu0 0.0
      %919 = vmatprep.subr.mxu0 0.0
      %920 = vmatpush1.msra.mxu0 0.0
      %921 = vmatprep.subr.mxu0 0.0
      %922 = vmatpush1.msra.mxu0 0.0
      %923 = vmatprep.mubr.f32.mxu0 0.0
      %924 = vmatmul.mubr.f32.gmra.mrb[0].mxu0 %v857
      %v925 = vpop.f32.mrb[0].mxu0
      %v926 = vadd.f32 0.0, %v925
      %v927 = vpop.f32.mrb[0].mxu0
      %928 = vdwg.mxu0
      %v930 = vsel %vm408, %v794, 0
      %932 = vmatprep.subr.mxu0 0.0
      %933 = vmatpush1.msra.mxu0 %v405
      %934 = vmatprep.subr.mxu0 0.0
      %935 = vmatpush1.msra.mxu0 0.0
      %936 = vmatprep.subr.mxu0 0.0
      %937 = vmatpush1.msra.mxu0 0.0
      %938 = vmatprep.subr.mxu0 0.0
      %939 = vmatpush1.msra.mxu0 0.0
      %940 = vmatprep.subr.mxu0 0.0
      %941 = vmatpush1.msra.mxu0 0.0
      %942 = vmatprep.subr.mxu0 0.0
      %943 = vmatpush1.msra.mxu0 0.0
      %944 = vmatprep.subr.mxu0 0.0
      %945 = vmatpush1.msra.mxu0 0.0
      %946 = vmatprep.subr.mxu0 0.0
      %947 = vmatpush1.msra.mxu0 0.0
      %948 = vmatprep.subr.mxu0 0.0
      %949 = vmatpush1.msra.mxu0 0.0
      %950 = vmatprep.subr.mxu0 0.0
      %951 = vmatpush1.msra.mxu0 0.0
      %952 = vmatprep.subr.mxu0 0.0
      %953 = vmatpush1.msra.mxu0 0.0
      %954 = vmatprep.subr.mxu0 0.0
      %955 = vmatpush1.msra.mxu0 0.0
      %956 = vmatprep.subr.mxu0 0.0
      %957 = vmatpush1.msra.mxu0 0.0
      %958 = vmatprep.subr.mxu0 0.0
      %959 = vmatpush1.msra.mxu0 0.0
      %960 = vmatprep.subr.mxu0 0.0
      %961 = vmatpush1.msra.mxu0 0.0
      %962 = vmatprep.subr.mxu0 0.0
      %963 = vmatpush1.msra.mxu0 0.0
      %964 = vmatprep.subr.mxu0 0.0
      %965 = vmatpush1.msra.mxu0 0.0
      %966 = vmatprep.subr.mxu0 0.0
      %967 = vmatpush1.msra.mxu0 0.0
      %968 = vmatprep.subr.mxu0 0.0
      %969 = vmatpush1.msra.mxu0 0.0
      %970 = vmatprep.subr.mxu0 0.0
      %971 = vmatpush1.msra.mxu0 0.0
      %972 = vmatprep.subr.mxu0 0.0
      %973 = vmatpush1.msra.mxu0 0.0
      %974 = vmatprep.subr.mxu0 0.0
      %975 = vmatpush1.msra.mxu0 0.0
      %976 = vmatprep.subr.mxu0 0.0
      %977 = vmatpush1.msra.mxu0 0.0
      %978 = vmatprep.subr.mxu0 0.0
      %979 = vmatpush1.msra.mxu0 0.0
      %980 = vmatprep.subr.mxu0 0.0
      %981 = vmatpush1.msra.mxu0 0.0
      %982 = vmatprep.subr.mxu0 0.0
      %983 = vmatpush1.msra.mxu0 0.0
      %984 = vmatprep.subr.mxu0 0.0
      %985 = vmatpush1.msra.mxu0 0.0
      %986 = vmatprep.subr.mxu0 0.0
      %987 = vmatpush1.msra.mxu0 0.0
      %988 = vmatprep.subr.mxu0 0.0
      %989 = vmatpush1.msra.mxu0 0.0
      %990 = vmatprep.subr.mxu0 0.0
      %991 = vmatpush1.msra.mxu0 0.0
      %992 = vmatprep.subr.mxu0 0.0
      %993 = vmatpush1.msra.mxu0 0.0
      %994 = vmatprep.subr.mxu0 0.0
      %995 = vmatpush1.msra.mxu0 0.0
      %996 = vmatprep.mubr.f32.mxu0 0.0
      %997 = vmatmul.mubr.f32.gmra.mrb[0].mxu0 %v930
      %v998 = vpop.f32.mrb[0].mxu0
      %v999 = vadd.f32 0.0, %v998
      %v1000 = vpop.f32.mrb[0].mxu0
      %1001 = vdwg.mxu0
      %v1003 = vsel %vm408, %v796, 0
      %1005 = vmatprep.subr.mxu0 0.0
      %1006 = vmatpush1.msra.mxu0 %v406
      %1007 = vmatprep.subr.mxu0 0.0
      %1008 = vmatpush1.msra.mxu0 0.0
      %1009 = vmatprep.subr.mxu0 0.0
      %1010 = vmatpush1.msra.mxu0 0.0
      %1011 = vmatprep.subr.mxu0 0.0
      %1012 = vmatpush1.msra.mxu0 0.0
      %1013 = vmatprep.subr.mxu0 0.0
      %1014 = vmatpush1.msra.mxu0 0.0
      %1015 = vmatprep.subr.mxu0 0.0
      %1016 = vmatpush1.msra.mxu0 0.0
      %1017 = vmatprep.subr.mxu0 0.0
      %1018 = vmatpush1.msra.mxu0 0.0
      %1019 = vmatprep.subr.mxu0 0.0
      %1020 = vmatpush1.msra.mxu0 0.0
      %1021 = vmatprep.subr.mxu0 0.0
      %1022 = vmatpush1.msra.mxu0 0.0
      %1023 = vmatprep.subr.mxu0 0.0
      %1024 = vmatpush1.msra.mxu0 0.0
      %1025 = vmatprep.subr.mxu0 0.0
      %1026 = vmatpush1.msra.mxu0 0.0
      %1027 = vmatprep.subr.mxu0 0.0
      %1028 = vmatpush1.msra.mxu0 0.0
      %1029 = vmatprep.subr.mxu0 0.0
      %1030 = vmatpush1.msra.mxu0 0.0
      %1031 = vmatprep.subr.mxu0 0.0
      %1032 = vmatpush1.msra.mxu0 0.0
      %1033 = vmatprep.subr.mxu0 0.0
      %1034 = vmatpush1.msra.mxu0 0.0
      %1035 = vmatprep.subr.mxu0 0.0
      %1036 = vmatpush1.msra.mxu0 0.0
      %1037 = vmatprep.subr.mxu0 0.0
      %1038 = vmatpush1.msra.mxu0 0.0
      %1039 = vmatprep.subr.mxu0 0.0
      %1040 = vmatpush1.msra.mxu0 0.0
      %1041 = vmatprep.subr.mxu0 0.0
      %1042 = vmatpush1.msra.mxu0 0.0
      %1043 = vmatprep.subr.mxu0 0.0
      %1044 = vmatpush1.msra.mxu0 0.0
      %1045 = vmatprep.subr.mxu0 0.0
      %1046 = vmatpush1.msra.mxu0 0.0
      %1047 = vmatprep.subr.mxu0 0.0
      %1048 = vmatpush1.msra.mxu0 0.0
      %1049 = vmatprep.subr.mxu0 0.0
      %1050 = vmatpush1.msra.mxu0 0.0
      %1051 = vmatprep.subr.mxu0 0.0
      %1052 = vmatpush1.msra.mxu0 0.0
      %1053 = vmatprep.subr.mxu0 0.0
      %1054 = vmatpush1.msra.mxu0 0.0
      %1055 = vmatprep.subr.mxu0 0.0
      %1056 = vmatpush1.msra.mxu0 0.0
      %1057 = vmatprep.subr.mxu0 0.0
      %1058 = vmatpush1.msra.mxu0 0.0
      %1059 = vmatprep.subr.mxu0 0.0
      %1060 = vmatpush1.msra.mxu0 0.0
      %1061 = vmatprep.subr.mxu0 0.0
      %1062 = vmatpush1.msra.mxu0 0.0
      %1063 = vmatprep.subr.mxu0 0.0
      %1064 = vmatpush1.msra.mxu0 0.0
      %1065 = vmatprep.subr.mxu0 0.0
      %1066 = vmatpush1.msra.mxu0 0.0
      %1067 = vmatprep.subr.mxu0 0.0
      %1068 = vmatpush1.msra.mxu0 0.0
      %1069 = vmatprep.mubr.f32.mxu0 0.0
      %1070 = vmatmul.mubr.f32.gmra.mrb[0].mxu0 %v1003
      %v1071 = vpop.f32.mrb[0].mxu0
      %v1072 = vadd.f32 0.0, %v1071
      %v1073 = vpop.f32.mrb[0].mxu0
      %1074 = vdwg.mxu0
      %v1076 = vsel %vm408, %v798, 0
      %1078 = vmatprep.subr.mxu0 0.0
      %1079 = vmatpush1.msra.mxu0 %v407
      %1080 = vmatprep.subr.mxu0 0.0
      %1081 = vmatpush1.msra.mxu0 0.0
      %1082 = vmatprep.subr.mxu0 0.0
      %1083 = vmatpush1.msra.mxu0 0.0
      %1084 = vmatprep.subr.mxu0 0.0
      %1085 = vmatpush1.msra.mxu0 0.0
      %1086 = vmatprep.subr.mxu0 0.0
      %1087 = vmatpush1.msra.mxu0 0.0
      %1088 = vmatprep.subr.mxu0 0.0
      %1089 = vmatpush1.msra.mxu0 0.0
      %1090 = vmatprep.subr.mxu0 0.0
      %1091 = vmatpush1.msra.mxu0 0.0
      %1092 = vmatprep.subr.mxu0 0.0
      %1093 = vmatpush1.msra.mxu0 0.0
      %1094 = vmatprep.subr.mxu0 0.0
      %1095 = vmatpush1.msra.mxu0 0.0
      %1096 = vmatprep.subr.mxu0 0.0
      %1097 = vmatpush1.msra.mxu0 0.0
      %1098 = vmatprep.subr.mxu0 0.0
      %1099 = vmatpush1.msra.mxu0 0.0
      %1100 = vmatprep.subr.mxu0 0.0
      %1101 = vmatpush1.msra.mxu0 0.0
      %1102 = vmatprep.subr.mxu0 0.0
      %1103 = vmatpush1.msra.mxu0 0.0
      %1104 = vmatprep.subr.mxu0 0.0
      %1105 = vmatpush1.msra.mxu0 0.0
      %1106 = vmatprep.subr.mxu0 0.0
      %1107 = vmatpush1.msra.mxu0 0.0
      %1108 = vmatprep.subr.mxu0 0.0
      %1109 = vmatpush1.msra.mxu0 0.0
      %1110 = vmatprep.subr.mxu0 0.0
      %1111 = vmatpush1.msra.mxu0 0.0
      %1112 = vmatprep.subr.mxu0 0.0
      %1113 = vmatpush1.msra.mxu0 0.0
      %1114 = vmatprep.subr.mxu0 0.0
      %1115 = vmatpush1.msra.mxu0 0.0
      %1116 = vmatprep.subr.mxu0 0.0
      %1117 = vmatpush1.msra.mxu0 0.0
      %1118 = vmatprep.subr.mxu0 0.0
      %1119 = vmatpush1.msra.mxu0 0.0
      %1120 = vmatprep.subr.mxu0 0.0
      %1121 = vmatpush1.msra.mxu0 0.0
      %1122 = vmatprep.subr.mxu0 0.0
      %1123 = vmatpush1.msra.mxu0 0.0
      %1124 = vmatprep.subr.mxu0 0.0
      %1125 = vmatpush1.msra.mxu0 0.0
      %1126 = vmatprep.subr.mxu0 0.0
      %1127 = vmatpush1.msra.mxu0 0.0
      %1128 = vmatprep.subr.mxu0 0.0
      %1129 = vmatpush1.msra.mxu0 0.0
      %1130 = vmatprep.subr.mxu0 0.0
      %1131 = vmatpush1.msra.mxu0 0.0
      %1132 = vmatprep.subr.mxu0 0.0
      %1133 = vmatpush1.msra.mxu0 0.0
      %1134 = vmatprep.subr.mxu0 0.0
      %1135 = vmatpush1.msra.mxu0 0.0
      %1136 = vmatprep.subr.mxu0 0.0
      %1137 = vmatpush1.msra.mxu0 0.0
      %1138 = vmatprep.subr.mxu0 0.0
      %1139 = vmatpush1.msra.mxu0 0.0
      %1140 = vmatprep.subr.mxu0 0.0
      %1141 = vmatpush1.msra.mxu0 0.0
      %1142 = vmatprep.mubr.f32.mxu0 0.0
      %1143 = vmatmul.mubr.f32.gmra.mrb[0].mxu0 %v1076
      %v1144 = vpop.f32.mrb[0].mxu0
      %v1145 = vadd.f32 0.0, %v1144
      %v1146 = vpop.f32.mrb[0].mxu0
      %1147 = vdwg.mxu0
      %v1148 = vadd.f32 %v852, %v926
      %v1149 = vadd.f32 %v853, %v999
      %v1150 = vadd.f32 %v854, %v1072
      %v1151 = vadd.f32 %v855, %v1145
      %1152 = vst.msk [vmem:[#allocation4] sm:$0xff] %vm408, %v1148
      %1153 = vst.msk [vmem:[#allocation4 + $0x8] sm:$0xff] %vm408, %v1149
      %1154 = vst.msk [vmem:[#allocation4 + $0x10] sm:$0xff] %vm408, %v1150
      %1155 = vst.msk [vmem:[#allocation4 + $0x18] sm:$0xff] %vm408, %v1151
      %1156 = vst.msk [vmem:[#allocation2] sm:$0xff] %vm823, %v751
      %1157 = vst.msk [vmem:[#allocation2 + $0x8] sm:$0xff] %vm823, %v752
      %1158 = vst.msk [vmem:[#allocation2 + $0x10] sm:$0xff] %vm823, %v753
      %1159 = vst.msk [vmem:[#allocation2 + $0x18] sm:$0xff] %vm823, %v754
      // Predicated region
      $region45: #{transformer_forward.26} parent=39 // pred_check
        %p1160 = pneg %p378
      $region46: #{transformer_forward.26} parent=39 // pred_check_branch
        %1162 = sbr.rel (%p1160) target = $region48
      $region47: #{transformer_forward.26} parent=39 // pred_region
        %v1163 = vld [vmem:[#allocation4] sm:$0xff]
        %v1164 = vld [vmem:[#allocation4 + $0x8] sm:$0xff]
        %v1165 = vld [vmem:[#allocation4 + $0x10] sm:$0xff]
        %v1166 = vld [vmem:[#allocation4 + $0x18] sm:$0xff]
        %v1167 = vld [vmem:[#allocation3] sm:$0xff]
        %v1168 = vld [vmem:[#allocation3 + $0x8] sm:$0xff]
        %v1169 = vld [vmem:[#allocation3 + $0x10] sm:$0xff]
        %v1170 = vld [vmem:[#allocation3 + $0x18] sm:$0xff]
        %v1171 = vrcp.pop %v1167
        %v1172 = vrcp.pop %v1168
        %v1173 = vrcp.pop %v1169
        %v1174 = vrcp.pop %v1170
        %1176 = vset.pattern.permute.xlu0 0
        %1177 = vperm.xlu0 %1176, %v1171
        %v1178 = vpop.permute.xlu0 %1177
        %1181 = vset.pattern.permute.xlu0 0
        %1182 = vperm.xlu0 %1181, %v1172
        %v1183 = vpop.permute.xlu0 %1182
        %1186 = vset.pattern.permute.xlu0 0
        %1187 = vperm.xlu0 %1186, %v1173
        %v1188 = vpop.permute.xlu0 %1187
        %1191 = vset.pattern.permute.xlu0 0
        %1192 = vperm.xlu0 %1191, %v1174
        %v1193 = vpop.permute.xlu0 %1192
        %v1195 = vmul.f32 %v1163, %v1178
        %v1196 = vmul.f32 %v1164, %v1183
        %v1197 = vmul.f32 %v1165, %v1188
        %v1198 = vmul.f32 %v1166, %v1193
        %1199 = vst.msk [vmem:[%s377] sm:$0xff] %vm408, %v1195
        %1200 = vst.msk [vmem:[%s377 + $0x8] sm:$0xff] %vm408, %v1196
        %1201 = vst.msk [vmem:[%s377 + $0x10] sm:$0xff] %vm408, %v1197
        %1202 = vst.msk [vmem:[%s377 + $0x18] sm:$0xff] %vm408, %v1198
      $region48: #{transformer_forward.26} parent=39 // pred_fallthru
        _
      %p1203 = scmp.lt.s32.totalorder %s21, 1
      %s1204 = scalar_select %p1203, %s21, 1
      %p1205 = scmp.lt.s32.totalorder %s22, 0
      %s1206 = scalar_select %p1205, %s22, 0
      %s1207 = smul.addr %s1204, 4
      %s1208 = sadd.s32 %s1206, %s1207
      %s1209 = smul.addr %s1208, 8
      %s1210 = scalar_lea.vmem %s5, %s1209
      // Predicated region
      $region49: #{transformer_forward.26} parent=39 // pred_check
        %p1211 = pneg %p195
      $region50: #{transformer_forward.26} parent=39 // pred_check_branch
        %1213 = sbr.rel (%p1211) target = $region52
      $region51: #{transformer_forward.26} parent=39 // pred_region
        _
      $region52: #{transformer_forward.26} parent=39 // pred_fallthru
        _
    $region40: #{transformer_forward.26} parent=5 // pred_fallthru
      _
    %p1214 = scmp.le.s32.totalorder 2, %s11
    // Predicated region
    $region53: #{transformer_forward.26} parent=5 // pred_check
      %p1215 = pneg %p1214
    $region54: #{transformer_forward.26} parent=5 // pred_check_branch
      %1217 = sbr.rel (%p1215) target = $region56
    $region55: #{transformer_forward.26} parent=5 // pred_region
      %s1218 = ssub.s32 %s11, 2
      // Predicated region
      $region57: #{transformer_forward.26} parent=55 // pred_check
        %p1219 = pneg %p201
      $region58: #{transformer_forward.26} parent=55 // pred_check_branch
        %1221 = sbr.rel (%p1219) target = $region60
      $region59: #{transformer_forward.26} parent=55 // pred_region
        %p1222 = scmp.lt.s32.totalorder %s24, 1
        %s1223 = scalar_select %p1222, %s24, 1
        %p1224 = scmp.lt.s32.totalorder %s25, 0
        %s1225 = scalar_select %p1224, %s25, 0
        %s1226 = smul.addr %s1223, 4
        %s1227 = sadd.s32 %s1225, %s1226
        %s1228 = smul.addr %s1227, 8
        %s1229 = scalar_lea.vmem %s5, %s1228
      $region60: #{transformer_forward.26} parent=55 // pred_fallthru
        _
    $region56: #{transformer_forward.26} parent=5 // pred_fallthru
      _
  $region6: #{transformer_forward.26} parent=0 // loop_footer
    %s15 = sadd.s32 1, %s11
  $region7: #{transformer_forward.26} parent=0 // loop_footer_branch
    %10 = sbr.rel target = $region3
  $region8: #{transformer_forward.26} parent=0 // loop_exit
    _

// kernel: transformer_forward.28
$region0: #{transformer_forward.28}
  #allocation0 [shape = 'u32[]', space=smem, size = 0x4, offset = 0x4, fixed_abs, tag = 'smem constant byte address 0x4 - core index']
  #allocation1 [shape = 'u32[144,128]{1,0:T(1,128)}', space=vmem, size = 0x12000, scoped, tag = 'internal scratch']
  #allocation2 [shape = 'f32[16,32]{1,0:T(8,128)}', space=vmem, size = 0x2000, scoped, tag = 'scratch operand']
  %s0 = inlined_call_operand.vmem [shape: f32[16,32], index: 0, kind: input, shape index: {}]
  %s1 = inlined_call_operand.vmem [shape: f32[32,64], index: 1, kind: input, shape index: {}]
  %s2 = inlined_call_operand.vmem [shape: f32[1,64], index: 2, kind: input, shape index: {}]
  %s3 = inlined_call_operand.vmem [shape: f32[64,32], index: 3, kind: input, shape index: {}]
  %s4 = inlined_call_operand.vmem [shape: f32[1,32], index: 4, kind: input, shape index: {}]
  %s5 = inlined_call_operand.vmem [shape: f32[1,32], index: 5, kind: input, shape index: {}]
  %s6 = inlined_call_operand.vmem [shape: f32[1,32], index: 6, kind: input, shape index: {}]
  %s7 = inlined_call_operand.vmem [shape: f32[16,32], index: 7, kind: output, shape index: {}]
  %s8 = sld [smem:[#allocation0]]
  $region46: #{transformer_forward.28} parent=0
    _
  %s10 = ssub.s32 1, %s8
  %s11 = scalar_select 0, %s10, %s8
  // Predicated region
  $region2: #{transformer_forward.28} parent=0 // pred_check
    _
  $region3: #{transformer_forward.28} parent=0 // pred_check_branch
    %13 = sbr.rel (0) target = $region5
  $region4: #{transformer_forward.28} parent=0 // pred_region
    _
  $region5: #{transformer_forward.28} parent=0 // pred_fallthru
    _
  // Predicated region
  $region6: #{transformer_forward.28} parent=0 // pred_check
    _
  $region7: #{transformer_forward.28} parent=0 // pred_check_branch
    %15 = sbr.rel (0) target = $region9
  $region8: #{transformer_forward.28} parent=0 // pred_region
    _
  $region9: #{transformer_forward.28} parent=0 // pred_fallthru
    _
  // Predicated region
  $region10: #{transformer_forward.28} parent=0 // pred_check
    _
  $region11: #{transformer_forward.28} parent=0 // pred_check_branch
    %17 = sbr.rel (0) target = $region13
  $region12: #{transformer_forward.28} parent=0 // pred_region
    _
  $region13: #{transformer_forward.28} parent=0 // pred_fallthru
    _
  // Predicated region
  $region14: #{transformer_forward.28} parent=0 // pred_check
    _
  $region15: #{transformer_forward.28} parent=0 // pred_check_branch
    %19 = sbr.rel (0) target = $region17
  $region16: #{transformer_forward.28} parent=0 // pred_region
    _
  $region17: #{transformer_forward.28} parent=0 // pred_fallthru
    _
  // Predicated region
  $region18: #{transformer_forward.28} parent=0 // pred_check
    _
  $region19: #{transformer_forward.28} parent=0 // pred_check_branch
    %21 = sbr.rel (0) target = $region21
  $region20: #{transformer_forward.28} parent=0 // pred_region
    _
  $region21: #{transformer_forward.28} parent=0 // pred_fallthru
    _
  // Predicated region
  $region22: #{transformer_forward.28} parent=0 // pred_check
    _
  $region23: #{transformer_forward.28} parent=0 // pred_check_branch
    %23 = sbr.rel (0) target = $region25
  $region24: #{transformer_forward.28} parent=0 // pred_region
    _
  $region25: #{transformer_forward.28} parent=0 // pred_fallthru
    _
  // Predicated region
  $region26: #{transformer_forward.28} parent=0 // pred_check
    _
  $region27: #{transformer_forward.28} parent=0 // pred_check_branch
    %25 = sbr.rel (0) target = $region29
  $region28: #{transformer_forward.28} parent=0 // pred_region
    _
  $region29: #{transformer_forward.28} parent=0 // pred_fallthru
    _
  %p26 = scmp.eq.s32.totalorder 0, 0
  // Predicated region
  $region30: #{transformer_forward.28} parent=0 // pred_check
    %p27 = pneg %p26
  $region31: #{transformer_forward.28} parent=0 // pred_check_branch
    %29 = sbr.rel (%p27) target = $region33
  $region32: #{transformer_forward.28} parent=0 // pred_region
    %vm30 = vcmask 261120
    %31 = vst.msk [vmem:[#allocation2] sm:$0xff] %vm30, 0.0
    %32 = vst.msk [vmem:[#allocation2 + $0x8] sm:$0xff] %vm30, 0.0
  $region33: #{transformer_forward.28} parent=0 // pred_fallthru
    _
  %v33 = vld [vmem:[%s0] sm:$0xff]
  %v34 = vld [vmem:[%s0 + $0x8] sm:$0xff]
  %v35 = vld [vmem:[%s1] sm:$0xff]
  %v36 = vld [vmem:[%s1 + $0x8] sm:$0xff]
  %v37 = vld [vmem:[%s1 + $0x10] sm:$0xff]
  %v38 = vld [vmem:[%s1 + $0x18] sm:$0xff]
  %v39 = vld [vmem:[%s2] sm:$0x1]
  %v41 = vlaneseq
  %v42 = vshrl.u32 %v41, 7
  %v43 = vsub.s32 0, %v42
  %v44 = vrot.slane %v39, %v43
  %vm46 = vcmask 261120
  %v48 = vsel %vm46, %v33, 0
  %v51 = vsel %vm46, %v34, 0
  %53 = vmatprep.subr.mxu0 0.0
  %54 = vmatpush1.msra.mxu0 %v35
  %55 = vmatprep.subr.mxu0 0.0
  %56 = vmatpush1.msra.mxu0 %v36
  %57 = vmatprep.subr.mxu0 0.0
  %58 = vmatpush1.msra.mxu0 %v37
  %59 = vmatprep.subr.mxu0 0.0
  %60 = vmatpush1.msra.mxu0 %v38
  %61 = vmatprep.subr.mxu0 0.0
  %62 = vmatpush1.msra.mxu0 0.0
  %63 = vmatprep.subr.mxu0 0.0
  %64 = vmatpush1.msra.mxu0 0.0
  %65 = vmatprep.subr.mxu0 0.0
  %66 = vmatpush1.msra.mxu0 0.0
  %67 = vmatprep.subr.mxu0 0.0
  %68 = vmatpush1.msra.mxu0 0.0
  %69 = vmatprep.subr.mxu0 0.0
  %70 = vmatpush1.msra.mxu0 0.0
  %71 = vmatprep.subr.mxu0 0.0
  %72 = vmatpush1.msra.mxu0 0.0
  %73 = vmatprep.subr.mxu0 0.0
  %74 = vmatpush1.msra.mxu0 0.0
  %75 = vmatprep.subr.mxu0 0.0
  %76 = vmatpush1.msra.mxu0 0.0
  %77 = vmatprep.subr.mxu0 0.0
  %78 = vmatpush1.msra.mxu0 0.0
  %79 = vmatprep.subr.mxu0 0.0
  %80 = vmatpush1.msra.mxu0 0.0
  %81 = vmatprep.subr.mxu0 0.0
  %82 = vmatpush1.msra.mxu0 0.0
  %83 = vmatprep.subr.mxu0 0.0
  %84 = vmatpush1.msra.mxu0 0.0
  %85 = vmatprep.subr.mxu0 0.0
  %86 = vmatpush1.msra.mxu0 0.0
  %87 = vmatprep.subr.mxu0 0.0
  %88 = vmatpush1.msra.mxu0 0.0
  %89 = vmatprep.subr.mxu0 0.0
  %90 = vmatpush1.msra.mxu0 0.0
  %91 = vmatprep.subr.mxu0 0.0
  %92 = vmatpush1.msra.mxu0 0.0
  %93 = vmatprep.subr.mxu0 0.0
  %94 = vmatpush1.msra.mxu0 0.0
  %95 = vmatprep.subr.mxu0 0.0
  %96 = vmatpush1.msra.mxu0 0.0
  %97 = vmatprep.subr.mxu0 0.0
  %98 = vmatpush1.msra.mxu0 0.0
  %99 = vmatprep.subr.mxu0 0.0
  %100 = vmatpush1.msra.mxu0 0.0
  %101 = vmatprep.subr.mxu0 0.0
  %102 = vmatpush1.msra.mxu0 0.0
  %103 = vmatprep.subr.mxu0 0.0
  %104 = vmatpush1.msra.mxu0 0.0
  %105 = vmatprep.subr.mxu0 0.0
  %106 = vmatpush1.msra.mxu0 0.0
  %107 = vmatprep.subr.mxu0 0.0
  %108 = vmatpush1.msra.mxu0 0.0
  %109 = vmatprep.subr.mxu0 0.0
  %110 = vmatpush1.msra.mxu0 0.0
  %111 = vmatprep.subr.mxu0 0.0
  %112 = vmatpush1.msra.mxu0 0.0
  %113 = vmatprep.subr.mxu0 0.0
  %114 = vmatpush1.msra.mxu0 0.0
  %115 = vmatprep.subr.mxu0 0.0
  %116 = vmatpush1.msra.mxu0 0.0
  %117 = vmatprep.mubr.f32.mxu0 0.0
  %118 = vmatmul.mubr.f32.gmra.mrb[0].mxu0 %v48
  %v119 = vpop.f32.mrb[0].mxu0
  %v120 = vadd.f32 %v44, %v119
  %v121 = vpop.f32.mrb[0].mxu0
  %122 = vmatprep.mubr.f32.mxu0 0.0
  %123 = vmatmul.mubr.f32.gmra.mrb[0].mxu0 %v51
  %v124 = vpop.f32.mrb[0].mxu0
  %v125 = vadd.f32 %v44, %v124
  %v126 = vpop.f32.mrb[0].mxu0
  %127 = vdwg.mxu0
  %v128 = vmax.f32 %v120, 0.0
  %v129 = vmax.f32 %v125, 0.0
  %v130 = vld [vmem:[#allocation2] sm:$0xff]
  %v131 = vld [vmem:[#allocation2 + $0x8] sm:$0xff]
  %v132 = vld [vmem:[%s3] sm:$0xff]
  %v133 = vld [vmem:[%s3 + $0x8] sm:$0xff]
  %v134 = vld [vmem:[%s3 + $0x10] sm:$0xff]
  %v135 = vld [vmem:[%s3 + $0x18] sm:$0xff]
  %v136 = vld [vmem:[%s3 + $0x20] sm:$0xff]
  %v137 = vld [vmem:[%s3 + $0x28] sm:$0xff]
  %v138 = vld [vmem:[%s3 + $0x30] sm:$0xff]
  %v139 = vld [vmem:[%s3 + $0x38] sm:$0xff]
  %vm140 = vcmask 523264
  %v142 = vsel %vm140, %v128, 0
  %v145 = vsel %vm140, %v129, 0
  %147 = vmatprep.subr.mxu0 0.0
  %148 = vmatpush1.msra.mxu0 %v132
  %149 = vmatprep.subr.mxu0 0.0
  %150 = vmatpush1.msra.mxu0 %v133
  %151 = vmatprep.subr.mxu0 0.0
  %152 = vmatpush1.msra.mxu0 %v134
  %153 = vmatprep.subr.mxu0 0.0
  %154 = vmatpush1.msra.mxu0 %v135
  %155 = vmatprep.subr.mxu0 0.0
  %156 = vmatpush1.msra.mxu0 %v136
  %157 = vmatprep.subr.mxu0 0.0
  %158 = vmatpush1.msra.mxu0 %v137
  %159 = vmatprep.subr.mxu0 0.0
  %160 = vmatpush1.msra.mxu0 %v138
  %161 = vmatprep.subr.mxu0 0.0
  %162 = vmatpush1.msra.mxu0 %v139
  %163 = vmatprep.subr.mxu0 0.0
  %164 = vmatpush1.msra.mxu0 0.0
  %165 = vmatprep.subr.mxu0 0.0
  %166 = vmatpush1.msra.mxu0 0.0
  %167 = vmatprep.subr.mxu0 0.0
  %168 = vmatpush1.msra.mxu0 0.0
  %169 = vmatprep.subr.mxu0 0.0
  %170 = vmatpush1.msra.mxu0 0.0
  %171 = vmatprep.subr.mxu0 0.0
  %172 = vmatpush1.msra.mxu0 0.0
  %173 = vmatprep.subr.mxu0 0.0
  %174 = vmatpush1.msra.mxu0 0.0
  %175 = vmatprep.subr.mxu0 0.0
  %176 = vmatpush1.msra.mxu0 0.0
  %177 = vmatprep.subr.mxu0 0.0
  %178 = vmatpush1.msra.mxu0 0.0
  %179 = vmatprep.subr.mxu0 0.0
  %180 = vmatpush1.msra.mxu0 0.0
  %181 = vmatprep.subr.mxu0 0.0
  %182 = vmatpush1.msra.mxu0 0.0
  %183 = vmatprep.subr.mxu0 0.0
  %184 = vmatpush1.msra.mxu0 0.0
  %185 = vmatprep.subr.mxu0 0.0
  %186 = vmatpush1.msra.mxu0 0.0
  %187 = vmatprep.subr.mxu0 0.0
  %188 = vmatpush1.msra.mxu0 0.0
  %189 = vmatprep.subr.mxu0 0.0
  %190 = vmatpush1.msra.mxu0 0.0
  %191 = vmatprep.subr.mxu0 0.0
  %192 = vmatpush1.msra.mxu0 0.0
  %193 = vmatprep.subr.mxu0 0.0
  %194 = vmatpush1.msra.mxu0 0.0
  %195 = vmatprep.subr.mxu0 0.0
  %196 = vmatpush1.msra.mxu0 0.0
  %197 = vmatprep.subr.mxu0 0.0
  %198 = vmatpush1.msra.mxu0 0.0
  %199 = vmatprep.subr.mxu0 0.0
  %200 = vmatpush1.msra.mxu0 0.0
  %201 = vmatprep.subr.mxu0 0.0
  %202 = vmatpush1.msra.mxu0 0.0
  %203 = vmatprep.subr.mxu0 0.0
  %204 = vmatpush1.msra.mxu0 0.0
  %205 = vmatprep.subr.mxu0 0.0
  %206 = vmatpush1.msra.mxu0 0.0
  %207 = vmatprep.subr.mxu0 0.0
  %208 = vmatpush1.msra.mxu0 0.0
  %209 = vmatprep.subr.mxu0 0.0
  %210 = vmatpush1.msra.mxu0 0.0
  %211 = vmatprep.mubr.f32.mxu0 0.0
  %212 = vmatmul.mubr.f32.gmra.mrb[0].mxu0 %v142
  %v213 = vpop.f32.mrb[0].mxu0
  %v214 = vadd.f32 0.0, %v213
  %v215 = vpop.f32.mrb[0].mxu0
  %216 = vmatprep.mubr.f32.mxu0 0.0
  %217 = vmatmul.mubr.f32.gmra.mrb[0].mxu0 %v145
  %v218 = vpop.f32.mrb[0].mxu0
  %v219 = vadd.f32 0.0, %v218
  %v220 = vpop.f32.mrb[0].mxu0
  %221 = vdwg.mxu0
  %v222 = vadd.f32 %v130, %v214
  %v223 = vadd.f32 %v131, %v219
  %224 = vst.msk [vmem:[#allocation2] sm:$0xff] %vm46, %v222
  %225 = vst.msk [vmem:[#allocation2 + $0x8] sm:$0xff] %vm46, %v223
  // Predicated region
  $region34: #{transformer_forward.28} parent=0 // pred_check
    %p226 = pneg %p26
  $region35: #{transformer_forward.28} parent=0 // pred_check_branch
    %228 = sbr.rel (%p226) target = $region37
  $region36: #{transformer_forward.28} parent=0 // pred_region
    %v229 = vld [vmem:[%s0] sm:$0xff]
    %v230 = vld [vmem:[%s0 + $0x8] sm:$0xff]
    %v231 = vld [vmem:[#allocation2] sm:$0xff]
    %v232 = vld [vmem:[#allocation2 + $0x8] sm:$0xff]
    %v233 = vadd.f32 %v229, %v231
    %v234 = vadd.f32 %v230, %v232
    %v235 = vld [vmem:[%s4] sm:$0x1]
    %v237 = vlaneseq
    %v238 = vshrl.u32 %v237, 7
    %v239 = vsub.s32 0, %v238
    %v240 = vrot.slane %v235, %v239
    %v242 = vadd.f32 %v233, %v240
    %v243 = vadd.f32 %v234, %v240
    %v244 = vsel %vm46, %v242, 0.0
    %245 = vadd.xlane.f32.xlu0 %v244
    %v246 = vpop.xlane.xlu0 %245
    %v247 = vsel %vm46, %v243, 0.0
    %248 = vadd.xlane.f32.xlu0 %v247
    %v249 = vpop.xlane.xlu0 %248
    %v250 = vrcp.pop 32.0
    %v251 = vmul.f32 %v246, %v250
    %v252 = vmul.f32 %v249, %v250
    %v253 = vsub.f32 %v242, %v251
    %v254 = vsub.f32 %v243, %v252
    %v255 = vmul.f32 %v253, %v253
    %v256 = vmul.f32 %v254, %v254
    %v257 = vsel %vm46, %v255, 0.0
    %258 = vadd.xlane.f32.xlu0 %v257
    %v259 = vpop.xlane.xlu0 %258
    %v260 = vsel %vm46, %v256, 0.0
    %261 = vadd.xlane.f32.xlu0 %v260
    %v262 = vpop.xlane.xlu0 %261
    %v263 = vmul.f32 %v259, %v250
    %v264 = vmul.f32 %v262, %v250
    %v265 = vadd.f32 %v263, 1e-05
    %v266 = vadd.f32 %v264, 1e-05
    %v267 = vrsqrt.pop %v265
    %v268 = vrsqrt.pop %v266
    %v269 = vmul.f32 %v253, %v267
    %v270 = vmul.f32 %v254, %v268
    %v271 = vld [vmem:[%s5] sm:$0x1]
    %v273 = vlaneseq
    %v274 = vshrl.u32 %v273, 7
    %v275 = vsub.s32 0, %v274
    %v276 = vrot.slane %v271, %v275
    %v278 = vmul.f32 %v269, %v276
    %v279 = vmul.f32 %v270, %v276
    %v280 = vld [vmem:[%s6] sm:$0x1]
    %v282 = vlaneseq
    %v283 = vshrl.u32 %v282, 7
    %v284 = vsub.s32 0, %v283
    %v285 = vrot.slane %v280, %v284
    %v287 = vadd.f32 %v278, %v285
    %v288 = vadd.f32 %v279, %v285
    %289 = vst.msk [vmem:[%s7] sm:$0xff] %vm46, %v287
    %290 = vst.msk [vmem:[%s7 + $0x8] sm:$0xff] %vm46, %v288
  $region37: #{transformer_forward.28} parent=0 // pred_fallthru
    _
  // Predicated region
  $region38: #{transformer_forward.28} parent=0 // pred_check
    _
  $region39: #{transformer_forward.28} parent=0 // pred_check_branch
    %292 = sbr.rel (0) target = $region41
  $region40: #{transformer_forward.28} parent=0 // pred_region
    _
  $region41: #{transformer_forward.28} parent=0 // pred_fallthru
    _
  // Predicated region
  $region42: #{transformer_forward.28} parent=0 // pred_check
    _
  $region43: #{transformer_forward.28} parent=0 // pred_check_branch
    %294 = sbr.rel (0) target = $region45
  $region44: #{transformer_forward.28} parent=0 // pred_region
    _
  $region45: #{transformer_forward.28} parent=0 // pred_fallthru
    _

// kernel: transformer_forward.37
$region0: #{transformer_forward.37}
  #allocation0 [shape = 'u32[]', space=smem, size = 0x4, offset = 0x4, fixed_abs, tag = 'smem constant byte address 0x4 - core index']
  #allocation1 [shape = 'u32[144,128]{1,0:T(1,128)}', space=vmem, size = 0x12000, scoped, tag = 'internal scratch']
  %s0 = inlined_call_operand.vmem [shape: f32[16,32], index: 0, kind: input, shape index: {}]
  %s1 = inlined_call_operand.vmem [shape: f32[32,64], index: 1, kind: input, shape index: {}]
  %s2 = inlined_call_operand.vmem [shape: f32[1,64], index: 2, kind: input, shape index: {}]
  %s3 = inlined_call_operand.vmem [shape: f32[16,64], index: 3, kind: output, shape index: {}]
  %s4 = sld [smem:[#allocation0]]
  $region22: #{transformer_forward.37} parent=0
    _
  %s6 = ssub.s32 1, %s4
  %s7 = scalar_select 0, %s6, %s4
  // Predicated region
  $region2: #{transformer_forward.37} parent=0 // pred_check
    _
  $region3: #{transformer_forward.37} parent=0 // pred_check_branch
    %9 = sbr.rel (0) target = $region5
  $region4: #{transformer_forward.37} parent=0 // pred_region
    _
  $region5: #{transformer_forward.37} parent=0 // pred_fallthru
    _
  // Predicated region
  $region6: #{transformer_forward.37} parent=0 // pred_check
    _
  $region7: #{transformer_forward.37} parent=0 // pred_check_branch
    %11 = sbr.rel (0) target = $region9
  $region8: #{transformer_forward.37} parent=0 // pred_region
    _
  $region9: #{transformer_forward.37} parent=0 // pred_fallthru
    _
  // Predicated region
  $region10: #{transformer_forward.37} parent=0 // pred_check
    _
  $region11: #{transformer_forward.37} parent=0 // pred_check_branch
    %13 = sbr.rel (0) target = $region13
  $region12: #{transformer_forward.37} parent=0 // pred_region
    _
  $region13: #{transformer_forward.37} parent=0 // pred_fallthru
    _
  %v14 = vld [vmem:[%s0] sm:$0xff]
  %v15 = vld [vmem:[%s0 + $0x8] sm:$0xff]
  %v16 = vld [vmem:[%s1] sm:$0xff]
  %v17 = vld [vmem:[%s1 + $0x8] sm:$0xff]
  %v18 = vld [vmem:[%s1 + $0x10] sm:$0xff]
  %v19 = vld [vmem:[%s1 + $0x18] sm:$0xff]
  %v20 = vld [vmem:[%s2] sm:$0x1]
  %v22 = vlaneseq
  %v23 = vshrl.u32 %v22, 7
  %v24 = vsub.s32 0, %v23
  %v25 = vrot.slane %v20, %v24
  %vm27 = vcmask 261120
  %v29 = vsel %vm27, %v14, 0
  %v32 = vsel %vm27, %v15, 0
  %34 = vmatprep.subr.mxu0 0.0
  %35 = vmatpush1.msra.mxu0 %v16
  %36 = vmatprep.subr.mxu0 0.0
  %37 = vmatpush1.msra.mxu0 %v17
  %38 = vmatprep.subr.mxu0 0.0
  %39 = vmatpush1.msra.mxu0 %v18
  %40 = vmatprep.subr.mxu0 0.0
  %41 = vmatpush1.msra.mxu0 %v19
  %42 = vmatprep.subr.mxu0 0.0
  %43 = vmatpush1.msra.mxu0 0.0
  %44 = vmatprep.subr.mxu0 0.0
  %45 = vmatpush1.msra.mxu0 0.0
  %46 = vmatprep.subr.mxu0 0.0
  %47 = vmatpush1.msra.mxu0 0.0
  %48 = vmatprep.subr.mxu0 0.0
  %49 = vmatpush1.msra.mxu0 0.0
  %50 = vmatprep.subr.mxu0 0.0
  %51 = vmatpush1.msra.mxu0 0.0
  %52 = vmatprep.subr.mxu0 0.0
  %53 = vmatpush1.msra.mxu0 0.0
  %54 = vmatprep.subr.mxu0 0.0
  %55 = vmatpush1.msra.mxu0 0.0
  %56 = vmatprep.subr.mxu0 0.0
  %57 = vmatpush1.msra.mxu0 0.0
  %58 = vmatprep.subr.mxu0 0.0
  %59 = vmatpush1.msra.mxu0 0.0
  %60 = vmatprep.subr.mxu0 0.0
  %61 = vmatpush1.msra.mxu0 0.0
  %62 = vmatprep.subr.mxu0 0.0
  %63 = vmatpush1.msra.mxu0 0.0
  %64 = vmatprep.subr.mxu0 0.0
  %65 = vmatpush1.msra.mxu0 0.0
  %66 = vmatprep.subr.mxu0 0.0
  %67 = vmatpush1.msra.mxu0 0.0
  %68 = vmatprep.subr.mxu0 0.0
  %69 = vmatpush1.msra.mxu0 0.0
  %70 = vmatprep.subr.mxu0 0.0
  %71 = vmatpush1.msra.mxu0 0.0
  %72 = vmatprep.subr.mxu0 0.0
  %73 = vmatpush1.msra.mxu0 0.0
  %74 = vmatprep.subr.mxu0 0.0
  %75 = vmatpush1.msra.mxu0 0.0
  %76 = vmatprep.subr.mxu0 0.0
  %77 = vmatpush1.msra.mxu0 0.0
  %78 = vmatprep.subr.mxu0 0.0
  %79 = vmatpush1.msra.mxu0 0.0
  %80 = vmatprep.subr.mxu0 0.0
  %81 = vmatpush1.msra.mxu0 0.0
  %82 = vmatprep.subr.mxu0 0.0
  %83 = vmatpush1.msra.mxu0 0.0
  %84 = vmatprep.subr.mxu0 0.0
  %85 = vmatpush1.msra.mxu0 0.0
  %86 = vmatprep.subr.mxu0 0.0
  %87 = vmatpush1.msra.mxu0 0.0
  %88 = vmatprep.subr.mxu0 0.0
  %89 = vmatpush1.msra.mxu0 0.0
  %90 = vmatprep.subr.mxu0 0.0
  %91 = vmatpush1.msra.mxu0 0.0
  %92 = vmatprep.subr.mxu0 0.0
  %93 = vmatpush1.msra.mxu0 0.0
  %94 = vmatprep.subr.mxu0 0.0
  %95 = vmatpush1.msra.mxu0 0.0
  %96 = vmatprep.subr.mxu0 0.0
  %97 = vmatpush1.msra.mxu0 0.0
  %98 = vmatprep.mubr.f32.mxu0 0.0
  %99 = vmatmul.mubr.f32.gmra.mrb[0].mxu0 %v29
  %v100 = vpop.f32.mrb[0].mxu0
  %v101 = vadd.f32 %v25, %v100
  %v102 = vpop.f32.mrb[0].mxu0
  %103 = vmatprep.mubr.f32.mxu0 0.0
  %104 = vmatmul.mubr.f32.gmra.mrb[0].mxu0 %v32
  %v105 = vpop.f32.mrb[0].mxu0
  %v106 = vadd.f32 %v25, %v105
  %v107 = vpop.f32.mrb[0].mxu0
  %108 = vdwg.mxu0
  %vm109 = vcmask 523264
  %110 = vst.msk [vmem:[%s3] sm:$0xff] %vm109, %v101
  %111 = vst.msk [vmem:[%s3 + $0x8] sm:$0xff] %vm109, %v106
  // Predicated region
  $region14: #{transformer_forward.37} parent=0 // pred_check
    _
  $region15: #{transformer_forward.37} parent=0 // pred_check_branch
    %113 = sbr.rel (0) target = $region17
  $region16: #{transformer_forward.37} parent=0 // pred_region
    _
  $region17: #{transformer_forward.37} parent=0 // pred_fallthru
    _
  // Predicated region
  $region18: #{transformer_forward.37} parent=0 // pred_check
    _
  $region19: #{transformer_forward.37} parent=0 // pred_check_branch
    %115 = sbr.rel (0) target = $region21
  $region20: #{transformer_forward.37} parent=0 // pred_region
    _
  $region21: #{transformer_forward.37} parent=0 // pred_fallthru
    _

// kernel: transformer_forward.36
$region0: #{transformer_forward.36}
  #allocation0 [shape = 'u32[]', space=smem, size = 0x4, offset = 0x4, fixed_abs, tag = 'smem constant byte address 0x4 - core index']
  #allocation1 [shape = 'u32[144,128]{1,0:T(1,128)}', space=vmem, size = 0x12000, scoped, tag = 'internal scratch']
  %s0 = inlined_call_operand.vmem [shape: f32[16,32], index: 0, kind: input, shape index: {}]
  %s1 = inlined_call_operand.vmem [shape: f32[32,32], index: 1, kind: input, shape index: {}]
  %s2 = inlined_call_operand.vmem [shape: f32[1,32], index: 2, kind: input, shape index: {}]
  %s3 = inlined_call_operand.vmem [shape: f32[16,32], index: 3, kind: output, shape index: {}]
  %s4 = sld [smem:[#allocation0]]
  $region22: #{transformer_forward.36} parent=0
    _
  %s6 = ssub.s32 1, %s4
  %s7 = scalar_select 0, %s6, %s4
  // Predicated region
  $region2: #{transformer_forward.36} parent=0 // pred_check
    _
  $region3: #{transformer_forward.36} parent=0 // pred_check_branch
    %9 = sbr.rel (0) target = $region5
  $region4: #{transformer_forward.36} parent=0 // pred_region
    _
  $region5: #{transformer_forward.36} parent=0 // pred_fallthru
    _
  // Predicated region
  $region6: #{transformer_forward.36} parent=0 // pred_check
    _
  $region7: #{transformer_forward.36} parent=0 // pred_check_branch
    %11 = sbr.rel (0) target = $region9
  $region8: #{transformer_forward.36} parent=0 // pred_region
    _
  $region9: #{transformer_forward.36} parent=0 // pred_fallthru
    _
  // Predicated region
  $region10: #{transformer_forward.36} parent=0 // pred_check
    _
  $region11: #{transformer_forward.36} parent=0 // pred_check_branch
    %13 = sbr.rel (0) target = $region13
  $region12: #{transformer_forward.36} parent=0 // pred_region
    _
  $region13: #{transformer_forward.36} parent=0 // pred_fallthru
    _
  %v14 = vld [vmem:[%s0] sm:$0xff]
  %v15 = vld [vmem:[%s0 + $0x8] sm:$0xff]
  %v16 = vld [vmem:[%s1] sm:$0xff]
  %v17 = vld [vmem:[%s1 + $0x8] sm:$0xff]
  %v18 = vld [vmem:[%s1 + $0x10] sm:$0xff]
  %v19 = vld [vmem:[%s1 + $0x18] sm:$0xff]
  %v20 = vld [vmem:[%s2] sm:$0x1]
  %v22 = vlaneseq
  %v23 = vshrl.u32 %v22, 7
  %v24 = vsub.s32 0, %v23
  %v25 = vrot.slane %v20, %v24
  %vm27 = vcmask 261120
  %v29 = vsel %vm27, %v14, 0
  %v32 = vsel %vm27, %v15, 0
  %34 = vmatprep.subr.mxu0 0.0
  %35 = vmatpush1.msra.mxu0 %v16
  %36 = vmatprep.subr.mxu0 0.0
  %37 = vmatpush1.msra.mxu0 %v17
  %38 = vmatprep.subr.mxu0 0.0
  %39 = vmatpush1.msra.mxu0 %v18
  %40 = vmatprep.subr.mxu0 0.0
  %41 = vmatpush1.msra.mxu0 %v19
  %42 = vmatprep.subr.mxu0 0.0
  %43 = vmatpush1.msra.mxu0 0.0
  %44 = vmatprep.subr.mxu0 0.0
  %45 = vmatpush1.msra.mxu0 0.0
  %46 = vmatprep.subr.mxu0 0.0
  %47 = vmatpush1.msra.mxu0 0.0
  %48 = vmatprep.subr.mxu0 0.0
  %49 = vmatpush1.msra.mxu0 0.0
  %50 = vmatprep.subr.mxu0 0.0
  %51 = vmatpush1.msra.mxu0 0.0
  %52 = vmatprep.subr.mxu0 0.0
  %53 = vmatpush1.msra.mxu0 0.0
  %54 = vmatprep.subr.mxu0 0.0
  %55 = vmatpush1.msra.mxu0 0.0
  %56 = vmatprep.subr.mxu0 0.0
  %57 = vmatpush1.msra.mxu0 0.0
  %58 = vmatprep.subr.mxu0 0.0
  %59 = vmatpush1.msra.mxu0 0.0
  %60 = vmatprep.subr.mxu0 0.0
  %61 = vmatpush1.msra.mxu0 0.0
  %62 = vmatprep.subr.mxu0 0.0
  %63 = vmatpush1.msra.mxu0 0.0
  %64 = vmatprep.subr.mxu0 0.0
  %65 = vmatpush1.msra.mxu0 0.0
  %66 = vmatprep.subr.mxu0 0.0
  %67 = vmatpush1.msra.mxu0 0.0
  %68 = vmatprep.subr.mxu0 0.0
  %69 = vmatpush1.msra.mxu0 0.0
  %70 = vmatprep.subr.mxu0 0.0
  %71 = vmatpush1.msra.mxu0 0.0
  %72 = vmatprep.subr.mxu0 0.0
  %73 = vmatpush1.msra.mxu0 0.0
  %74 = vmatprep.subr.mxu0 0.0
  %75 = vmatpush1.msra.mxu0 0.0
  %76 = vmatprep.subr.mxu0 0.0
  %77 = vmatpush1.msra.mxu0 0.0
  %78 = vmatprep.subr.mxu0 0.0
  %79 = vmatpush1.msra.mxu0 0.0
  %80 = vmatprep.subr.mxu0 0.0
  %81 = vmatpush1.msra.mxu0 0.0
  %82 = vmatprep.subr.mxu0 0.0
  %83 = vmatpush1.msra.mxu0 0.0
  %84 = vmatprep.subr.mxu0 0.0
  %85 = vmatpush1.msra.mxu0 0.0
  %86 = vmatprep.subr.mxu0 0.0
  %87 = vmatpush1.msra.mxu0 0.0
  %88 = vmatprep.subr.mxu0 0.0
  %89 = vmatpush1.msra.mxu0 0.0
  %90 = vmatprep.subr.mxu0 0.0
  %91 = vmatpush1.msra.mxu0 0.0
  %92 = vmatprep.subr.mxu0 0.0
  %93 = vmatpush1.msra.mxu0 0.0
  %94 = vmatprep.subr.mxu0 0.0
  %95 = vmatpush1.msra.mxu0 0.0
  %96 = vmatprep.subr.mxu0 0.0
  %97 = vmatpush1.msra.mxu0 0.0
  %98 = vmatprep.mubr.f32.mxu0 0.0
  %99 = vmatmul.mubr.f32.gmra.mrb[0].mxu0 %v29
  %v100 = vpop.f32.mrb[0].mxu0
  %v101 = vadd.f32 %v25, %v100
  %v102 = vpop.f32.mrb[0].mxu0
  %103 = vmatprep.mubr.f32.mxu0 0.0
  %104 = vmatmul.mubr.f32.gmra.mrb[0].mxu0 %v32
  %v105 = vpop.f32.mrb[0].mxu0
  %v106 = vadd.f32 %v25, %v105
  %v107 = vpop.f32.mrb[0].mxu0
  %108 = vdwg.mxu0
  %109 = vst.msk [vmem:[%s3] sm:$0xff] %vm27, %v101
  %110 = vst.msk [vmem:[%s3 + $0x8] sm:$0xff] %vm27, %v106
  // Predicated region
  $region14: #{transformer_forward.36} parent=0 // pred_check
    _
  $region15: #{transformer_forward.36} parent=0 // pred_check_branch
    %112 = sbr.rel (0) target = $region17
  $region16: #{transformer_forward.36} parent=0 // pred_region
    _
  $region17: #{transformer_forward.36} parent=0 // pred_fallthru
    _
  // Predicated region
  $region18: #{transformer_forward.36} parent=0 // pred_check
    _
  $region19: #{transformer_forward.36} parent=0 // pred_check_branch
    %114 = sbr.rel (0) target = $region21
  $region20: #{transformer_forward.36} parent=0 // pred_region
    _
  $region21: #{transformer_forward.36} parent=0 // pred_fallthru
    _

// kernel: transformer_forward.49
$region0: #{transformer_forward.49}
  #allocation0 [shape = 'u32[]', space=smem, size = 0x4, offset = 0x4, fixed_abs, tag = 'smem constant byte address 0x4 - core index']
  #allocation1 [shape = 'u32[144,128]{1,0:T(1,128)}', space=vmem, size = 0x12000, scoped, tag = 'internal scratch']
  %s0 = inlined_call_operand.vmem [shape: f32[16,32], index: 0, kind: input, shape index: {}]
  %s1 = inlined_call_operand.vmem [shape: f32[32,128], index: 1, kind: input, shape index: {}]
  %s2 = inlined_call_operand.vmem [shape: f32[1,128], index: 2, kind: input, shape index: {}]
  %s3 = inlined_call_operand.vmem [shape: f32[16,128], index: 3, kind: output, shape index: {}]
  %s4 = sld [smem:[#allocation0]]
  $region22: #{transformer_forward.49} parent=0
    _
  %s6 = ssub.s32 1, %s4
  %s7 = scalar_select 0, %s6, %s4
  // Predicated region
  $region2: #{transformer_forward.49} parent=0 // pred_check
    _
  $region3: #{transformer_forward.49} parent=0 // pred_check_branch
    %9 = sbr.rel (0) target = $region5
  $region4: #{transformer_forward.49} parent=0 // pred_region
    _
  $region5: #{transformer_forward.49} parent=0 // pred_fallthru
    _
  // Predicated region
  $region6: #{transformer_forward.49} parent=0 // pred_check
    _
  $region7: #{transformer_forward.49} parent=0 // pred_check_branch
    %11 = sbr.rel (0) target = $region9
  $region8: #{transformer_forward.49} parent=0 // pred_region
    _
  $region9: #{transformer_forward.49} parent=0 // pred_fallthru
    _
  // Predicated region
  $region10: #{transformer_forward.49} parent=0 // pred_check
    _
  $region11: #{transformer_forward.49} parent=0 // pred_check_branch
    %13 = sbr.rel (0) target = $region13
  $region12: #{transformer_forward.49} parent=0 // pred_region
    _
  $region13: #{transformer_forward.49} parent=0 // pred_fallthru
    _
  %v14 = vld [vmem:[%s0] sm:$0xff]
  %v15 = vld [vmem:[%s0 + $0x8] sm:$0xff]
  %v16 = vld [vmem:[%s1] sm:$0xff]
  %v17 = vld [vmem:[%s1 + $0x8] sm:$0xff]
  %v18 = vld [vmem:[%s1 + $0x10] sm:$0xff]
  %v19 = vld [vmem:[%s1 + $0x18] sm:$0xff]
  %v20 = vld [vmem:[%s2] sm:$0x1]
  %v22 = vlaneseq
  %v23 = vshrl.u32 %v22, 7
  %v24 = vsub.s32 0, %v23
  %v25 = vrot.slane %v20, %v24
  %vm27 = vcmask 261120
  %v29 = vsel %vm27, %v14, 0
  %v32 = vsel %vm27, %v15, 0
  %34 = vmatprep.subr.mxu0 0.0
  %35 = vmatpush1.msra.mxu0 %v16
  %36 = vmatprep.subr.mxu0 0.0
  %37 = vmatpush1.msra.mxu0 %v17
  %38 = vmatprep.subr.mxu0 0.0
  %39 = vmatpush1.msra.mxu0 %v18
  %40 = vmatprep.subr.mxu0 0.0
  %41 = vmatpush1.msra.mxu0 %v19
  %42 = vmatprep.subr.mxu0 0.0
  %43 = vmatpush1.msra.mxu0 0.0
  %44 = vmatprep.subr.mxu0 0.0
  %45 = vmatpush1.msra.mxu0 0.0
  %46 = vmatprep.subr.mxu0 0.0
  %47 = vmatpush1.msra.mxu0 0.0
  %48 = vmatprep.subr.mxu0 0.0
  %49 = vmatpush1.msra.mxu0 0.0
  %50 = vmatprep.subr.mxu0 0.0
  %51 = vmatpush1.msra.mxu0 0.0
  %52 = vmatprep.subr.mxu0 0.0
  %53 = vmatpush1.msra.mxu0 0.0
  %54 = vmatprep.subr.mxu0 0.0
  %55 = vmatpush1.msra.mxu0 0.0
  %56 = vmatprep.subr.mxu0 0.0
  %57 = vmatpush1.msra.mxu0 0.0
  %58 = vmatprep.subr.mxu0 0.0
  %59 = vmatpush1.msra.mxu0 0.0
  %60 = vmatprep.subr.mxu0 0.0
  %61 = vmatpush1.msra.mxu0 0.0
  %62 = vmatprep.subr.mxu0 0.0
  %63 = vmatpush1.msra.mxu0 0.0
  %64 = vmatprep.subr.mxu0 0.0
  %65 = vmatpush1.msra.mxu0 0.0
  %66 = vmatprep.subr.mxu0 0.0
  %67 = vmatpush1.msra.mxu0 0.0
  %68 = vmatprep.subr.mxu0 0.0
  %69 = vmatpush1.msra.mxu0 0.0
  %70 = vmatprep.subr.mxu0 0.0
  %71 = vmatpush1.msra.mxu0 0.0
  %72 = vmatprep.subr.mxu0 0.0
  %73 = vmatpush1.msra.mxu0 0.0
  %74 = vmatprep.subr.mxu0 0.0
  %75 = vmatpush1.msra.mxu0 0.0
  %76 = vmatprep.subr.mxu0 0.0
  %77 = vmatpush1.msra.mxu0 0.0
  %78 = vmatprep.subr.mxu0 0.0
  %79 = vmatpush1.msra.mxu0 0.0
  %80 = vmatprep.subr.mxu0 0.0
  %81 = vmatpush1.msra.mxu0 0.0
  %82 = vmatprep.subr.mxu0 0.0
  %83 = vmatpush1.msra.mxu0 0.0
  %84 = vmatprep.subr.mxu0 0.0
  %85 = vmatpush1.msra.mxu0 0.0
  %86 = vmatprep.subr.mxu0 0.0
  %87 = vmatpush1.msra.mxu0 0.0
  %88 = vmatprep.subr.mxu0 0.0
  %89 = vmatpush1.msra.mxu0 0.0
  %90 = vmatprep.subr.mxu0 0.0
  %91 = vmatpush1.msra.mxu0 0.0
  %92 = vmatprep.subr.mxu0 0.0
  %93 = vmatpush1.msra.mxu0 0.0
  %94 = vmatprep.subr.mxu0 0.0
  %95 = vmatpush1.msra.mxu0 0.0
  %96 = vmatprep.subr.mxu0 0.0
  %97 = vmatpush1.msra.mxu0 0.0
  %98 = vmatprep.mubr.f32.mxu0 0.0
  %99 = vmatmul.mubr.f32.gmra.mrb[0].mxu0 %v29
  %v100 = vpop.f32.mrb[0].mxu0
  %v101 = vadd.f32 %v25, %v100
  %v102 = vpop.f32.mrb[0].mxu0
  %103 = vmatprep.mubr.f32.mxu0 0.0
  %104 = vmatmul.mubr.f32.gmra.mrb[0].mxu0 %v32
  %v105 = vpop.f32.mrb[0].mxu0
  %v106 = vadd.f32 %v25, %v105
  %v107 = vpop.f32.mrb[0].mxu0
  %108 = vdwg.mxu0
  %109 = vst [vmem:[%s3] sm:$0xff] %v101
  %110 = vst [vmem:[%s3 + $0x8] sm:$0xff] %v106
  // Predicated region
  $region14: #{transformer_forward.49} parent=0 // pred_check
    _
  $region15: #{transformer_forward.49} parent=0 // pred_check_branch
    %112 = sbr.rel (0) target = $region17
  $region16: #{transformer_forward.49} parent=0 // pred_region
    _
  $region17: #{transformer_forward.49} parent=0 // pred_fallthru
    _
  // Predicated region
  $region18: #{transformer_forward.49} parent=0 // pred_check
    _
  $region19: #{transformer_forward.49} parent=0 // pred_check_branch
    %114 = sbr.rel (0) target = $region21
  $region20: #{transformer_forward.49} parent=0 // pred_region
    _
  $region21: #{transformer_forward.49} parent=0 // pred_fallthru
    _

// kernel: transformer_forward.34
$region0: #{transformer_forward.34}
  #allocation0 [shape = 'u32[]', space=smem, size = 0x4, offset = 0x4, fixed_abs, tag = 'smem constant byte address 0x4 - core index']
  #allocation1 [shape = 'u32[144,128]{1,0:T(1,128)}', space=vmem, size = 0x12000, scoped, tag = 'internal scratch']
  #allocation2 [shape = 'f32[4,8,1]{2,1,0:T(8,128)}', space=vmem, size = 0x4000, scoped, tag = 'scratch operand']
  #allocation3 [shape = 'f32[4,8,1]{2,1,0:T(8,128)}', space=vmem, size = 0x4000, scoped, tag = 'scratch operand']
  #allocation4 [shape = 'f32[4,8,8]{2,1,0:T(8,128)}', space=vmem, size = 0x4000, scoped, tag = 'scratch operand']
  %s0 = inlined_call_operand.vmem [shape: f32[2,8,1], index: 0, kind: input, shape index: {}]
  %s1 = inlined_call_operand.vmem [shape: f32[2,1,8], index: 1, kind: input, shape index: {}]
  %s2 = inlined_call_operand.vmem [shape: f32[2,4,8,8], index: 2, kind: input, shape index: {}]
  %s3 = inlined_call_operand.vmem [shape: f32[2,4,8,8], index: 3, kind: input, shape index: {}]
  %s4 = inlined_call_operand.vmem [shape: f32[2,4,8,8], index: 4, kind: input, shape index: {}]
  %s5 = inlined_call_operand.vmem [shape: f32[2,4,8,8], index: 5, kind: output, shape index: {}]
  %s6 = sld [smem:[#allocation0]]
  $region61: #{transformer_forward.34} parent=0
    _
  %s8 = ssub.s32 1, %s6
  %s9 = scalar_select 0, %s8, %s6
  loop: start=0, step=1, limit=4
  $region2: #{transformer_forward.34} parent=0 // loop_pre_header
    _
  $region3: #{transformer_forward.34} parent=0 // loop_header
    %s11 = sphi 0, %s15
    %p12 = scmp.ge.s32.totalorder %s11, 4
    %s18 = sphi 0, %s37
    %s19 = sphi 0, %s33
    %s20 = sphi 0, %s29
    %s21 = sphi 0, %s18
    %s22 = sphi 0, %s19
    %s23 = sphi 0, %s20
    %s24 = sphi 0, %s21
    %s25 = sphi 0, %s22
    %s26 = sphi 0, %s23
    %s42 = sphi 0, %s44
    %s45 = sphi 0, %s42
    %s46 = sphi 0, %s45
    %s62 = sphi 0, %s46
    %s70 = sphi 0, %s72
    %s73 = sphi 0, %s70
    %s74 = sphi 0, %s73
    %s90 = sphi 0, %s74
    %s98 = sphi 0, %s100
    %s101 = sphi 0, %s98
    %s102 = sphi 0, %s101
    %s118 = sphi 0, %s102
    %s126 = sphi 0, %s128
    %s129 = sphi 0, %s126
    %s130 = sphi 0, %s129
    %s146 = sphi 0, %s130
    %s154 = sphi 0, %s156
    %s157 = sphi 0, %s154
    %s158 = sphi 0, %s157
    %s174 = sphi 0, %s158
    %s182 = sphi 0, %s184
    %s185 = sphi 0, %s182
    %s186 = sphi 0, %s185
    %s202 = sphi 0, %s186
  $region4: #{transformer_forward.34} parent=0 // loop_header_branch
    %14 = sbr.rel (%p12) target = $region8
  $region5: #{transformer_forward.34} parent=0 // loop_body
    %s16 = ssub.s32 %s11, 1
    %s17 = ssub.s32 %s11, 2
    %s27 = sadd.s32 1, %s20
    %p28 = scmp.ge.s32.totalorder %s27, 1
    %s29 = scalar_select %p28, 0, %s27
    %s30 = sadd.s32 1, %s19
    %s31 = scalar_select %p28, %s30, %s19
    %p32 = scmp.ge.s32.totalorder %s31, 1
    %s33 = scalar_select %p32, 0, %s31
    %s34 = sadd.s32 1, %s18
    %s35 = scalar_select %p32, %s34, %s18
    %p36 = scmp.ge.s32.totalorder %s35, 2
    %s37 = scalar_select %p36, 0, %s35
    %s38 = ssub.s32 %s18, %s37
    %s39 = ssub.s32 %s19, %s33
    %s40 = sor.u32 %s38, %s39
    %p41 = scmp.eq.s32.totalorder %s40, 0
    %s43 = sadd.s32 %s42, 1
    %s44 = scalar_select %p41, %s42, %s43
    %p47 = pneg %p41
    %p48 = scmp.eq.s32.totalorder %s11, 1
    %p49 = por %p47, %p48
    %p50 = scmp.ne.s32.totalorder %s42, %s45
    %p51 = scmp.eq.s32.totalorder %s11, 0
    %p52 = por %p50, %p51
    %p53 = scmp.ne.s32.totalorder %s42, %s45
    %p54 = scmp.eq.s32.totalorder %s16, 1
    %p55 = por %p53, %p54
    %p56 = scmp.ne.s32.totalorder %s45, %s46
    %p57 = scmp.eq.s32.totalorder %s16, 0
    %p58 = por %p56, %p57
    %p59 = scmp.ne.s32.totalorder %s45, %s46
    %p60 = scmp.eq.s32.totalorder %s17, 1
    %p61 = por %p59, %p60
    %p63 = scmp.ne.s32.totalorder %s46, %s62
    %p64 = scmp.eq.s32.totalorder %s17, 0
    %p65 = por %p63, %p64
    %s66 = ssub.s32 %s18, %s37
    %s67 = ssub.s32 %s20, %s29
    %s68 = sor.u32 %s66, %s67
    %p69 = scmp.eq.s32.totalorder %s68, 0
    %s71 = sadd.s32 %s70, 1
    %s72 = scalar_select %p69, %s70, %s71
    %p75 = pneg %p69
    %p76 = scmp.eq.s32.totalorder %s11, 1
    %p77 = por %p75, %p76
    %p78 = scmp.ne.s32.totalorder %s70, %s73
    %p79 = scmp.eq.s32.totalorder %s11, 0
    %p80 = por %p78, %p79
    %p81 = scmp.ne.s32.totalorder %s70, %s73
    %p82 = scmp.eq.s32.totalorder %s16, 1
    %p83 = por %p81, %p82
    %p84 = scmp.ne.s32.totalorder %s73, %s74
    %p85 = scmp.eq.s32.totalorder %s16, 0
    %p86 = por %p84, %p85
    %p87 = scmp.ne.s32.totalorder %s73, %s74
    %p88 = scmp.eq.s32.totalorder %s17, 1
    %p89 = por %p87, %p88
    %p91 = scmp.ne.s32.totalorder %s74, %s90
    %p92 = scmp.eq.s32.totalorder %s17, 0
    %p93 = por %p91, %p92
    %s94 = ssub.s32 %s18, %s37
    %s95 = ssub.s32 %s19, %s33
    %s96 = sor.u32 %s94, %s95
    %p97 = scmp.eq.s32.totalorder %s96, 0
    %s99 = sadd.s32 %s98, 1
    %s100 = scalar_select %p97, %s98, %s99
    %p103 = pneg %p97
    %p104 = scmp.eq.s32.totalorder %s11, 1
    %p105 = por %p103, %p104
    %p106 = scmp.ne.s32.totalorder %s98, %s101
    %p107 = scmp.eq.s32.totalorder %s11, 0
    %p108 = por %p106, %p107
    %p109 = scmp.ne.s32.totalorder %s98, %s101
    %p110 = scmp.eq.s32.totalorder %s16, 1
    %p111 = por %p109, %p110
    %p112 = scmp.ne.s32.totalorder %s101, %s102
    %p113 = scmp.eq.s32.totalorder %s16, 0
    %p114 = por %p112, %p113
    %p115 = scmp.ne.s32.totalorder %s101, %s102
    %p116 = scmp.eq.s32.totalorder %s17, 1
    %p117 = por %p115, %p116
    %p119 = scmp.ne.s32.totalorder %s102, %s118
    %p120 = scmp.eq.s32.totalorder %s17, 0
    %p121 = por %p119, %p120
    %s122 = ssub.s32 %s18, %s37
    %s123 = ssub.s32 %s20, %s29
    %s124 = sor.u32 %s122, %s123
    %p125 = scmp.eq.s32.totalorder %s124, 0
    %s127 = sadd.s32 %s126, 1
    %s128 = scalar_select %p125, %s126, %s127
    %p131 = pneg %p125
    %p132 = scmp.eq.s32.totalorder %s11, 1
    %p133 = por %p131, %p132
    %p134 = scmp.ne.s32.totalorder %s126, %s129
    %p135 = scmp.eq.s32.totalorder %s11, 0
    %p136 = por %p134, %p135
    %p137 = scmp.ne.s32.totalorder %s126, %s129
    %p138 = scmp.eq.s32.totalorder %s16, 1
    %p139 = por %p137, %p138
    %p140 = scmp.ne.s32.totalorder %s129, %s130
    %p141 = scmp.eq.s32.totalorder %s16, 0
    %p142 = por %p140, %p141
    %p143 = scmp.ne.s32.totalorder %s129, %s130
    %p144 = scmp.eq.s32.totalorder %s17, 1
    %p145 = por %p143, %p144
    %p147 = scmp.ne.s32.totalorder %s130, %s146
    %p148 = scmp.eq.s32.totalorder %s17, 0
    %p149 = por %p147, %p148
    %s150 = ssub.s32 %s18, %s37
    %s151 = ssub.s32 %s20, %s29
    %s152 = sor.u32 %s150, %s151
    %p153 = scmp.eq.s32.totalorder %s152, 0
    %s155 = sadd.s32 %s154, 1
    %s156 = scalar_select %p153, %s154, %s155
    %p159 = pneg %p153
    %p160 = scmp.eq.s32.totalorder %s11, 1
    %p161 = por %p159, %p160
    %p162 = scmp.ne.s32.totalorder %s154, %s157
    %p163 = scmp.eq.s32.totalorder %s11, 0
    %p164 = por %p162, %p163
    %p165 = scmp.ne.s32.totalorder %s154, %s157
    %p166 = scmp.eq.s32.totalorder %s16, 1
    %p167 = por %p165, %p166
    %p168 = scmp.ne.s32.totalorder %s157, %s158
    %p169 = scmp.eq.s32.totalorder %s16, 0
    %p170 = por %p168, %p169
    %p171 = scmp.ne.s32.totalorder %s157, %s158
    %p172 = scmp.eq.s32.totalorder %s17, 1
    %p173 = por %p171, %p172
    %p175 = scmp.ne.s32.totalorder %s158, %s174
    %p176 = scmp.eq.s32.totalorder %s17, 0
    %p177 = por %p175, %p176
    %s178 = ssub.s32 %s18, %s37
    %s179 = ssub.s32 %s19, %s33
    %s180 = sor.u32 %s178, %s179
    %p181 = scmp.eq.s32.totalorder %s180, 0
    %s183 = sadd.s32 %s182, 1
    %s184 = scalar_select %p181, %s182, %s183
    %p187 = pneg %p181
    %p188 = scmp.eq.s32.totalorder %s11, 1
    %p189 = por %p187, %p188
    %p190 = scmp.ne.s32.totalorder %s182, %s185
    %p191 = scmp.eq.s32.totalorder %s11, 0
    %p192 = por %p190, %p191
    %p193 = scmp.ne.s32.totalorder %s182, %s185
    %p194 = scmp.eq.s32.totalorder %s16, 1
    %p195 = por %p193, %p194
    %p196 = scmp.ne.s32.totalorder %s185, %s186
    %p197 = scmp.eq.s32.totalorder %s16, 0
    %p198 = por %p196, %p197
    %p199 = scmp.ne.s32.totalorder %s185, %s186
    %p200 = scmp.eq.s32.totalorder %s17, 1
    %p201 = por %p199, %p200
    %p203 = scmp.ne.s32.totalorder %s186, %s202
    %p204 = scmp.eq.s32.totalorder %s17, 0
    %p205 = por %p203, %p204
    %p206 = scmp.le.s32.totalorder 1, %s11
    %p207 = scmp.lt.s32.totalorder %s11, 3
    %p208 = pnand %p206, %p207
    %p209 = pneg %p208
    // Predicated region
    $region9: #{transformer_forward.34} parent=5 // pred_check
      _
    $region10: #{transformer_forward.34} parent=5 // pred_check_branch
      %211 = sbr.rel (%p208) target = $region12
    $region11: #{transformer_forward.34} parent=5 // pred_region
      %s212 = ssub.s32 %s11, 1
    $region12: #{transformer_forward.34} parent=5 // pred_fallthru
      _
    %p213 = scmp.lt.s32.totalorder %s11, 2
    // Predicated region
    $region13: #{transformer_forward.34} parent=5 // pred_check
      %p214 = pneg %p213
    $region14: #{transformer_forward.34} parent=5 // pred_check_branch
      %216 = sbr.rel (%p214) target = $region16
    $region15: #{transformer_forward.34} parent=5 // pred_region
      // Predicated region
      $region17: #{transformer_forward.34} parent=15 // pred_check
        %p217 = pneg %p52
      $region18: #{transformer_forward.34} parent=15 // pred_check_branch
        %219 = sbr.rel (%p217) target = $region20
      $region19: #{transformer_forward.34} parent=15 // pred_region
        %p220 = scmp.lt.s32.totalorder %s18, 1
        %s221 = scalar_select %p220, %s18, 1
        %p222 = scmp.lt.s32.totalorder %s19, 0
        %s223 = scalar_select %p222, %s19, 0
        %s224 = sadd.s32 %s223, %s221
        %s225 = smul.addr %s224, 8
        %s226 = scalar_lea.vmem %s0, %s225
      $region20: #{transformer_forward.34} parent=15 // pred_fallthru
        _
      // Predicated region
      $region21: #{transformer_forward.34} parent=15 // pred_check
        %p227 = pneg %p80
      $region22: #{transformer_forward.34} parent=15 // pred_check_branch
        %229 = sbr.rel (%p227) target = $region24
      $region23: #{transformer_forward.34} parent=15 // pred_region
        %p230 = scmp.lt.s32.totalorder %s18, 1
        %s231 = scalar_select %p230, %s18, 1
        %p232 = scmp.lt.s32.totalorder %s20, 0
        %s233 = scalar_select %p232, %s20, 0
        %s234 = sadd.s32 %s233, %s231
        %s235 = scalar_lea.vmem %s1, %s234
      $region24: #{transformer_forward.34} parent=15 // pred_fallthru
        _
      // Predicated region
      $region25: #{transformer_forward.34} parent=15 // pred_check
        %p236 = pneg %p108
      $region26: #{transformer_forward.34} parent=15 // pred_check_branch
        %238 = sbr.rel (%p236) target = $region28
      $region27: #{transformer_forward.34} parent=15 // pred_region
        %p239 = scmp.lt.s32.totalorder %s18, 1
        %s240 = scalar_select %p239, %s18, 1
        %p241 = scmp.lt.s32.totalorder %s19, 0
        %s242 = scalar_select %p241, %s19, 0
        %s243 = smul.addr %s240, 4
        %s244 = sadd.s32 %s242, %s243
        %s245 = smul.addr %s244, 8
        %s246 = scalar_lea.vmem %s2, %s245
      $region28: #{transformer_forward.34} parent=15 // pred_fallthru
        _
      // Predicated region
      $region29: #{transformer_forward.34} parent=15 // pred_check
        %p247 = pneg %p136
      $region30: #{transformer_forward.34} parent=15 // pred_check_branch
        %249 = sbr.rel (%p247) target = $region32
      $region31: #{transformer_forward.34} parent=15 // pred_region
        %p250 = scmp.lt.s32.totalorder %s18, 1
        %s251 = scalar_select %p250, %s18, 1
        %p252 = scmp.lt.s32.totalorder %s20, 0
        %s253 = scalar_select %p252, %s20, 0
        %s254 = smul.addr %s251, 4
        %s255 = sadd.s32 %s253, %s254
        %s256 = smul.addr %s255, 8
        %s257 = scalar_lea.vmem %s3, %s256
      $region32: #{transformer_forward.34} parent=15 // pred_fallthru
        _
      // Predicated region
      $region33: #{transformer_forward.34} parent=15 // pred_check
        %p258 = pneg %p164
      $region34: #{transformer_forward.34} parent=15 // pred_check_branch
        %260 = sbr.rel (%p258) target = $region36
      $region35: #{transformer_forward.34} parent=15 // pred_region
        %p261 = scmp.lt.s32.totalorder %s18, 1
        %s262 = scalar_select %p261, %s18, 1
        %p263 = scmp.lt.s32.totalorder %s20, 0
        %s264 = scalar_select %p263, %s20, 0
        %s265 = smul.addr %s262, 4
        %s266 = sadd.s32 %s264, %s265
        %s267 = smul.addr %s266, 8
        %s268 = scalar_lea.vmem %s4, %s267
      $region36: #{transformer_forward.34} parent=15 // pred_fallthru
        _
    $region16: #{transformer_forward.34} parent=5 // pred_fallthru
      _
    %p269 = scmp.le.s32.totalorder 1, %s11
    %p270 = scmp.lt.s32.totalorder %s11, 3
    %p271 = pnand %p269, %p270
    %p272 = pneg %p271
    // Predicated region
    $region37: #{transformer_forward.34} parent=5 // pred_check
      _
    $region38: #{transformer_forward.34} parent=5 // pred_check_branch
      %274 = sbr.rel (%p271) target = $region40
    $region39: #{transformer_forward.34} parent=5 // pred_region
      %s275 = ssub.s32 %s11, 1
      %p276 = scmp.lt.s32.totalorder %s21, 1
      %s277 = scalar_select %p276, %s21, 1
      %p278 = scmp.lt.s32.totalorder %s22, 0
      %s279 = scalar_select %p278, %s22, 0
      %s280 = sadd.s32 %s279, %s277
      %s281 = smul.addr %s280, 8
      %s282 = scalar_lea.vmem %s0, %s281
      %p283 = pneg %p58
      %p284 = pneg %p55
      %p285 = scmp.lt.s32.totalorder %s21, 1
      %s286 = scalar_select %p285, %s21, 1
      %p287 = scmp.lt.s32.totalorder %s23, 0
      %s288 = scalar_select %p287, %s23, 0
      %s289 = sadd.s32 %s288, %s286
      %s290 = scalar_lea.vmem %s1, %s289
      %p291 = pneg %p86
      %p292 = pneg %p83
      %p293 = scmp.lt.s32.totalorder %s21, 1
      %s294 = scalar_select %p293, %s21, 1
      %p295 = scmp.lt.s32.totalorder %s22, 0
      %s296 = scalar_select %p295, %s22, 0
      %s297 = smul.addr %s294, 4
      %s298 = sadd.s32 %s296, %s297
      %s299 = smul.addr %s298, 8
      %s300 = scalar_lea.vmem %s2, %s299
      %p301 = pneg %p114
      %p302 = pneg %p111
      %p303 = scmp.lt.s32.totalorder %s21, 1
      %s304 = scalar_select %p303, %s21, 1
      %p305 = scmp.lt.s32.totalorder %s23, 0
      %s306 = scalar_select %p305, %s23, 0
      %s307 = smul.addr %s304, 4
      %s308 = sadd.s32 %s306, %s307
      %s309 = smul.addr %s308, 8
      %s310 = scalar_lea.vmem %s3, %s309
      %p311 = pneg %p142
      %p312 = pneg %p139
      %p313 = scmp.lt.s32.totalorder %s21, 1
      %s314 = scalar_select %p313, %s21, 1
      %p315 = scmp.lt.s32.totalorder %s23, 0
      %s316 = scalar_select %p315, %s23, 0
      %s317 = smul.addr %s314, 4
      %s318 = sadd.s32 %s316, %s317
      %s319 = smul.addr %s318, 8
      %s320 = scalar_lea.vmem %s4, %s319
      %p321 = pneg %p170
      %p322 = pneg %p167
      %p323 = pneg %p198
      %p324 = pneg %p195
      %p325 = scmp.lt.s32.totalorder %s21, 1
      %s326 = scalar_select %p325, %s21, 1
      %p327 = scmp.lt.s32.totalorder %s22, 0
      %s328 = scalar_select %p327, %s22, 0
      %s329 = smul.addr %s326, 4
      %s330 = sadd.s32 %s328, %s329
      %s331 = smul.addr %s330, 8
      %s332 = scalar_lea.vmem %s5, %s331
      %p333 = scmp.lt.s32.totalorder %s21, 1
      %s334 = scalar_select %p333, %s21, 1
      %p335 = scmp.lt.s32.totalorder %s22, 0
      %s336 = scalar_select %p335, %s22, 0
      %s337 = sadd.s32 %s336, %s334
      %s338 = smul.addr %s337, 8
      %s339 = scalar_lea.vmem %s0, %s338
      %p340 = scmp.lt.s32.totalorder %s21, 1
      %s341 = scalar_select %p340, %s21, 1
      %p342 = scmp.lt.s32.totalorder %s23, 0
      %s343 = scalar_select %p342, %s23, 0
      %s344 = sadd.s32 %s343, %s341
      %s345 = scalar_lea.vmem %s1, %s344
      %p346 = scmp.lt.s32.totalorder %s21, 1
      %s347 = scalar_select %p346, %s21, 1
      %p348 = scmp.lt.s32.totalorder %s22, 0
      %s349 = scalar_select %p348, %s22, 0
      %s350 = smul.addr %s347, 4
      %s351 = sadd.s32 %s349, %s350
      %s352 = smul.addr %s351, 8
      %s353 = scalar_lea.vmem %s2, %s352
      %p354 = scmp.lt.s32.totalorder %s21, 1
      %s355 = scalar_select %p354, %s21, 1
      %p356 = scmp.lt.s32.totalorder %s23, 0
      %s357 = scalar_select %p356, %s23, 0
      %s358 = smul.addr %s355, 4
      %s359 = sadd.s32 %s357, %s358
      %s360 = smul.addr %s359, 8
      %s361 = scalar_lea.vmem %s3, %s360
      %p362 = scmp.lt.s32.totalorder %s21, 1
      %s363 = scalar_select %p362, %s21, 1
      %p364 = scmp.lt.s32.totalorder %s23, 0
      %s365 = scalar_select %p364, %s23, 0
      %s366 = smul.addr %s363, 4
      %s367 = sadd.s32 %s365, %s366
      %s368 = smul.addr %s367, 8
      %s369 = scalar_lea.vmem %s4, %s368
      %p370 = scmp.lt.s32.totalorder %s21, 1
      %s371 = scalar_select %p370, %s21, 1
      %p372 = scmp.lt.s32.totalorder %s22, 0
      %s373 = scalar_select %p372, %s22, 0
      %s374 = smul.addr %s371, 4
      %s375 = sadd.s32 %s373, %s374
      %s376 = smul.addr %s375, 8
      %s377 = scalar_lea.vmem %s5, %s376
      %p378 = scmp.eq.s32.totalorder %s23, 0
      // Predicated region
      $region41: #{transformer_forward.34} parent=39 // pred_check
        %p379 = pneg %p378
      $region42: #{transformer_forward.34} parent=39 // pred_check_branch
        %381 = sbr.rel (%p379) target = $region44
      $region43: #{transformer_forward.34} parent=39 // pred_region
        %vm382 = vcmask 7168
        %383 = vst.msk [vmem:[#allocation2] sm:$0xff] %vm382, -inf
        %384 = vst.msk [vmem:[#allocation2 + $0x8] sm:$0xff] %vm382, -inf
        %385 = vst.msk [vmem:[#allocation2 + $0x10] sm:$0xff] %vm382, -inf
        %386 = vst.msk [vmem:[#allocation2 + $0x18] sm:$0xff] %vm382, -inf
        %387 = vst.msk [vmem:[#allocation3] sm:$0xff] %vm382, 0.0
        %388 = vst.msk [vmem:[#allocation3 + $0x8] sm:$0xff] %vm382, 0.0
        %389 = vst.msk [vmem:[#allocation3 + $0x10] sm:$0xff] %vm382, 0.0
        %390 = vst.msk [vmem:[#allocation3 + $0x18] sm:$0xff] %vm382, 0.0
        %vm391 = vcmask 64512
        %392 = vst.msk [vmem:[#allocation4] sm:$0xff] %vm391, 0.0
        %393 = vst.msk [vmem:[#allocation4 + $0x8] sm:$0xff] %vm391, 0.0
        %394 = vst.msk [vmem:[#allocation4 + $0x10] sm:$0xff] %vm391, 0.0
        %395 = vst.msk [vmem:[#allocation4 + $0x18] sm:$0xff] %vm391, 0.0
      $region44: #{transformer_forward.34} parent=39 // pred_fallthru
        _
      %v396 = vld [vmem:[%s353] sm:$0xff]
      %v397 = vld [vmem:[%s353 + $0x8] sm:$0xff]
      %v398 = vld [vmem:[%s353 + $0x10] sm:$0xff]
      %v399 = vld [vmem:[%s353 + $0x18] sm:$0xff]
      %v400 = vld [vmem:[%s361] sm:$0xff]
      %v401 = vld [vmem:[%s361 + $0x8] sm:$0xff]
      %v402 = vld [vmem:[%s361 + $0x10] sm:$0xff]
      %v403 = vld [vmem:[%s361 + $0x18] sm:$0xff]
      %v404 = vld [vmem:[%s369] sm:$0xff]
      %v405 = vld [vmem:[%s369 + $0x8] sm:$0xff]
      %v406 = vld [vmem:[%s369 + $0x10] sm:$0xff]
      %v407 = vld [vmem:[%s369 + $0x18] sm:$0xff]
      %vm408 = vcmask 64512
      %v410 = vsel %vm408, %v396, 0
      %v413 = vsel %vm408, %v400, 0
      %415 = vmatprep.subr.mxu0 0.0
      %416 = vmatpush1.xpose.msra.mxu0 %v413
      %417 = vmatprep.subr.mxu0 0.0
      %418 = vmatpush1.xpose.msra.mxu0 0.0
      %419 = vmatprep.subr.mxu0 0.0
      %420 = vmatpush1.xpose.msra.mxu0 0.0
      %421 = vmatprep.subr.mxu0 0.0
      %422 = vmatpush1.xpose.msra.mxu0 0.0
      %423 = vmatprep.subr.mxu0 0.0
      %424 = vmatpush1.xpose.msra.mxu0 0.0
      %425 = vmatprep.subr.mxu0 0.0
      %426 = vmatpush1.xpose.msra.mxu0 0.0
      %427 = vmatprep.subr.mxu0 0.0
      %428 = vmatpush1.xpose.msra.mxu0 0.0
      %429 = vmatprep.subr.mxu0 0.0
      %430 = vmatpush1.xpose.msra.mxu0 0.0
      %431 = vmatprep.subr.mxu0 0.0
      %432 = vmatpush1.xpose.msra.mxu0 0.0
      %433 = vmatprep.subr.mxu0 0.0
      %434 = vmatpush1.xpose.msra.mxu0 0.0
      %435 = vmatprep.subr.mxu0 0.0
      %436 = vmatpush1.xpose.msra.mxu0 0.0
      %437 = vmatprep.subr.mxu0 0.0
      %438 = vmatpush1.xpose.msra.mxu0 0.0
      %439 = vmatprep.subr.mxu0 0.0
      %440 = vmatpush1.xpose.msra.mxu0 0.0
      %441 = vmatprep.subr.mxu0 0.0
      %442 = vmatpush1.xpose.msra.mxu0 0.0
      %443 = vmatprep.subr.mxu0 0.0
      %444 = vmatpush1.xpose.msra.mxu0 0.0
      %445 = vmatprep.subr.mxu0 0.0
      %446 = vmatpush1.xpose.msra.mxu0 0.0
      %447 = vmatprep.subr.mxu0 0.0
      %448 = vmatpush1.xpose.msra.mxu0 0.0
      %449 = vmatprep.subr.mxu0 0.0
      %450 = vmatpush1.xpose.msra.mxu0 0.0
      %451 = vmatprep.subr.mxu0 0.0
      %452 = vmatpush1.xpose.msra.mxu0 0.0
      %453 = vmatprep.subr.mxu0 0.0
      %454 = vmatpush1.xpose.msra.mxu0 0.0
      %455 = vmatprep.subr.mxu0 0.0
      %456 = vmatpush1.xpose.msra.mxu0 0.0
      %457 = vmatprep.subr.mxu0 0.0
      %458 = vmatpush1.xpose.msra.mxu0 0.0
      %459 = vmatprep.subr.mxu0 0.0
      %460 = vmatpush1.xpose.msra.mxu0 0.0
      %461 = vmatprep.subr.mxu0 0.0
      %462 = vmatpush1.xpose.msra.mxu0 0.0
      %463 = vmatprep.subr.mxu0 0.0
      %464 = vmatpush1.xpose.msra.mxu0 0.0
      %465 = vmatprep.subr.mxu0 0.0
      %466 = vmatpush1.xpose.msra.mxu0 0.0
      %467 = vmatprep.subr.mxu0 0.0
      %468 = vmatpush1.xpose.msra.mxu0 0.0
      %469 = vmatprep.subr.mxu0 0.0
      %470 = vmatpush1.xpose.msra.mxu0 0.0
      %471 = vmatprep.subr.mxu0 0.0
      %472 = vmatpush1.xpose.msra.mxu0 0.0
      %473 = vmatprep.subr.mxu0 0.0
      %474 = vmatpush1.xpose.msra.mxu0 0.0
      %475 = vmatprep.subr.mxu0 0.0
      %476 = vmatpush1.xpose.msra.mxu0 0.0
      %477 = vmatprep.subr.mxu0 0.0
      %478 = vmatpush1.xpose.msra.mxu0 0.0
      %479 = vmatprep.mubr.f32.mxu0 0.0
      %480 = vmatmul.mubr.f32.gmra.mrb[0].mxu0 %v410
      %v481 = vpop.f32.mrb[0].mxu0
      %v482 = vadd.f32 0.0, %v481
      %v483 = vpop.f32.mrb[0].mxu0
      %484 = vdwg.mxu0
      %v486 = vsel %vm408, %v397, 0
      %v489 = vsel %vm408, %v401, 0
      %491 = vmatprep.subr.mxu0 0.0
      %492 = vmatpush1.xpose.msra.mxu0 %v489
      %493 = vmatprep.subr.mxu0 0.0
      %494 = vmatpush1.xpose.msra.mxu0 0.0
      %495 = vmatprep.subr.mxu0 0.0
      %496 = vmatpush1.xpose.msra.mxu0 0.0
      %497 = vmatprep.subr.mxu0 0.0
      %498 = vmatpush1.xpose.msra.mxu0 0.0
      %499 = vmatprep.subr.mxu0 0.0
      %500 = vmatpush1.xpose.msra.mxu0 0.0
      %501 = vmatprep.subr.mxu0 0.0
      %502 = vmatpush1.xpose.msra.mxu0 0.0
      %503 = vmatprep.subr.mxu0 0.0
      %504 = vmatpush1.xpose.msra.mxu0 0.0
      %505 = vmatprep.subr.mxu0 0.0
      %506 = vmatpush1.xpose.msra.mxu0 0.0
      %507 = vmatprep.subr.mxu0 0.0
      %508 = vmatpush1.xpose.msra.mxu0 0.0
      %509 = vmatprep.subr.mxu0 0.0
      %510 = vmatpush1.xpose.msra.mxu0 0.0
      %511 = vmatprep.subr.mxu0 0.0
      %512 = vmatpush1.xpose.msra.mxu0 0.0
      %513 = vmatprep.subr.mxu0 0.0
      %514 = vmatpush1.xpose.msra.mxu0 0.0
      %515 = vmatprep.subr.mxu0 0.0
      %516 = vmatpush1.xpose.msra.mxu0 0.0
      %517 = vmatprep.subr.mxu0 0.0
      %518 = vmatpush1.xpose.msra.mxu0 0.0
      %519 = vmatprep.subr.mxu0 0.0
      %520 = vmatpush1.xpose.msra.mxu0 0.0
      %521 = vmatprep.subr.mxu0 0.0
      %522 = vmatpush1.xpose.msra.mxu0 0.0
      %523 = vmatprep.subr.mxu0 0.0
      %524 = vmatpush1.xpose.msra.mxu0 0.0
      %525 = vmatprep.subr.mxu0 0.0
      %526 = vmatpush1.xpose.msra.mxu0 0.0
      %527 = vmatprep.subr.mxu0 0.0
      %528 = vmatpush1.xpose.msra.mxu0 0.0
      %529 = vmatprep.subr.mxu0 0.0
      %530 = vmatpush1.xpose.msra.mxu0 0.0
      %531 = vmatprep.subr.mxu0 0.0
      %532 = vmatpush1.xpose.msra.mxu0 0.0
      %533 = vmatprep.subr.mxu0 0.0
      %534 = vmatpush1.xpose.msra.mxu0 0.0
      %535 = vmatprep.subr.mxu0 0.0
      %536 = vmatpush1.xpose.msra.mxu0 0.0
      %537 = vmatprep.subr.mxu0 0.0
      %538 = vmatpush1.xpose.msra.mxu0 0.0
      %539 = vmatprep.subr.mxu0 0.0
      %540 = vmatpush1.xpose.msra.mxu0 0.0
      %541 = vmatprep.subr.mxu0 0.0
      %542 = vmatpush1.xpose.msra.mxu0 0.0
      %543 = vmatprep.subr.mxu0 0.0
      %544 = vmatpush1.xpose.msra.mxu0 0.0
      %545 = vmatprep.subr.mxu0 0.0
      %546 = vmatpush1.xpose.msra.mxu0 0.0
      %547 = vmatprep.subr.mxu0 0.0
      %548 = vmatpush1.xpose.msra.mxu0 0.0
      %549 = vmatprep.subr.mxu0 0.0
      %550 = vmatpush1.xpose.msra.mxu0 0.0
      %551 = vmatprep.subr.mxu0 0.0
      %552 = vmatpush1.xpose.msra.mxu0 0.0
      %553 = vmatprep.subr.mxu0 0.0
      %554 = vmatpush1.xpose.msra.mxu0 0.0
      %555 = vmatprep.mubr.f32.mxu0 0.0
      %556 = vmatmul.mubr.f32.gmra.mrb[0].mxu0 %v486
      %v557 = vpop.f32.mrb[0].mxu0
      %v558 = vadd.f32 0.0, %v557
      %v559 = vpop.f32.mrb[0].mxu0
      %560 = vdwg.mxu0
      %v562 = vsel %vm408, %v398, 0
      %v565 = vsel %vm408, %v402, 0
      %567 = vmatprep.subr.mxu0 0.0
      %568 = vmatpush1.xpose.msra.mxu0 %v565
      %569 = vmatprep.subr.mxu0 0.0
      %570 = vmatpush1.xpose.msra.mxu0 0.0
      %571 = vmatprep.subr.mxu0 0.0
      %572 = vmatpush1.xpose.msra.mxu0 0.0
      %573 = vmatprep.subr.mxu0 0.0
      %574 = vmatpush1.xpose.msra.mxu0 0.0
      %575 = vmatprep.subr.mxu0 0.0
      %576 = vmatpush1.xpose.msra.mxu0 0.0
      %577 = vmatprep.subr.mxu0 0.0
      %578 = vmatpush1.xpose.msra.mxu0 0.0
      %579 = vmatprep.subr.mxu0 0.0
      %580 = vmatpush1.xpose.msra.mxu0 0.0
      %581 = vmatprep.subr.mxu0 0.0
      %582 = vmatpush1.xpose.msra.mxu0 0.0
      %583 = vmatprep.subr.mxu0 0.0
      %584 = vmatpush1.xpose.msra.mxu0 0.0
      %585 = vmatprep.subr.mxu0 0.0
      %586 = vmatpush1.xpose.msra.mxu0 0.0
      %587 = vmatprep.subr.mxu0 0.0
      %588 = vmatpush1.xpose.msra.mxu0 0.0
      %589 = vmatprep.subr.mxu0 0.0
      %590 = vmatpush1.xpose.msra.mxu0 0.0
      %591 = vmatprep.subr.mxu0 0.0
      %592 = vmatpush1.xpose.msra.mxu0 0.0
      %593 = vmatprep.subr.mxu0 0.0
      %594 = vmatpush1.xpose.msra.mxu0 0.0
      %595 = vmatprep.subr.mxu0 0.0
      %596 = vmatpush1.xpose.msra.mxu0 0.0
      %597 = vmatprep.subr.mxu0 0.0
      %598 = vmatpush1.xpose.msra.mxu0 0.0
      %599 = vmatprep.subr.mxu0 0.0
      %600 = vmatpush1.xpose.msra.mxu0 0.0
      %601 = vmatprep.subr.mxu0 0.0
      %602 = vmatpush1.xpose.msra.mxu0 0.0
      %603 = vmatprep.subr.mxu0 0.0
      %604 = vmatpush1.xpose.msra.mxu0 0.0
      %605 = vmatprep.subr.mxu0 0.0
      %606 = vmatpush1.xpose.msra.mxu0 0.0
      %607 = vmatprep.subr.mxu0 0.0
      %608 = vmatpush1.xpose.msra.mxu0 0.0
      %609 = vmatprep.subr.mxu0 0.0
      %610 = vmatpush1.xpose.msra.mxu0 0.0
      %611 = vmatprep.subr.mxu0 0.0
      %612 = vmatpush1.xpose.msra.mxu0 0.0
      %613 = vmatprep.subr.mxu0 0.0
      %614 = vmatpush1.xpose.msra.mxu0 0.0
      %615 = vmatprep.subr.mxu0 0.0
      %616 = vmatpush1.xpose.msra.mxu0 0.0
      %617 = vmatprep.subr.mxu0 0.0
      %618 = vmatpush1.xpose.msra.mxu0 0.0
      %619 = vmatprep.subr.mxu0 0.0
      %620 = vmatpush1.xpose.msra.mxu0 0.0
      %621 = vmatprep.subr.mxu0 0.0
      %622 = vmatpush1.xpose.msra.mxu0 0.0
      %623 = vmatprep.subr.mxu0 0.0
      %624 = vmatpush1.xpose.msra.mxu0 0.0
      %625 = vmatprep.subr.mxu0 0.0
      %626 = vmatpush1.xpose.msra.mxu0 0.0
      %627 = vmatprep.subr.mxu0 0.0
      %628 = vmatpush1.xpose.msra.mxu0 0.0
      %629 = vmatprep.subr.mxu0 0.0
      %630 = vmatpush1.xpose.msra.mxu0 0.0
      %631 = vmatprep.mubr.f32.mxu0 0.0
      %632 = vmatmul.mubr.f32.gmra.mrb[0].mxu0 %v562
      %v633 = vpop.f32.mrb[0].mxu0
      %v634 = vadd.f32 0.0, %v633
      %v635 = vpop.f32.mrb[0].mxu0
      %636 = vdwg.mxu0
      %v638 = vsel %vm408, %v399, 0
      %v641 = vsel %vm408, %v403, 0
      %643 = vmatprep.subr.mxu0 0.0
      %644 = vmatpush1.xpose.msra.mxu0 %v641
      %645 = vmatprep.subr.mxu0 0.0
      %646 = vmatpush1.xpose.msra.mxu0 0.0
      %647 = vmatprep.subr.mxu0 0.0
      %648 = vmatpush1.xpose.msra.mxu0 0.0
      %649 = vmatprep.subr.mxu0 0.0
      %650 = vmatpush1.xpose.msra.mxu0 0.0
      %651 = vmatprep.subr.mxu0 0.0
      %652 = vmatpush1.xpose.msra.mxu0 0.0
      %653 = vmatprep.subr.mxu0 0.0
      %654 = vmatpush1.xpose.msra.mxu0 0.0
      %655 = vmatprep.subr.mxu0 0.0
      %656 = vmatpush1.xpose.msra.mxu0 0.0
      %657 = vmatprep.subr.mxu0 0.0
      %658 = vmatpush1.xpose.msra.mxu0 0.0
      %659 = vmatprep.subr.mxu0 0.0
      %660 = vmatpush1.xpose.msra.mxu0 0.0
      %661 = vmatprep.subr.mxu0 0.0
      %662 = vmatpush1.xpose.msra.mxu0 0.0
      %663 = vmatprep.subr.mxu0 0.0
      %664 = vmatpush1.xpose.msra.mxu0 0.0
      %665 = vmatprep.subr.mxu0 0.0
      %666 = vmatpush1.xpose.msra.mxu0 0.0
      %667 = vmatprep.subr.mxu0 0.0
      %668 = vmatpush1.xpose.msra.mxu0 0.0
      %669 = vmatprep.subr.mxu0 0.0
      %670 = vmatpush1.xpose.msra.mxu0 0.0
      %671 = vmatprep.subr.mxu0 0.0
      %672 = vmatpush1.xpose.msra.mxu0 0.0
      %673 = vmatprep.subr.mxu0 0.0
      %674 = vmatpush1.xpose.msra.mxu0 0.0
      %675 = vmatprep.subr.mxu0 0.0
      %676 = vmatpush1.xpose.msra.mxu0 0.0
      %677 = vmatprep.subr.mxu0 0.0
      %678 = vmatpush1.xpose.msra.mxu0 0.0
      %679 = vmatprep.subr.mxu0 0.0
      %680 = vmatpush1.xpose.msra.mxu0 0.0
      %681 = vmatprep.subr.mxu0 0.0
      %682 = vmatpush1.xpose.msra.mxu0 0.0
      %683 = vmatprep.subr.mxu0 0.0
      %684 = vmatpush1.xpose.msra.mxu0 0.0
      %685 = vmatprep.subr.mxu0 0.0
      %686 = vmatpush1.xpose.msra.mxu0 0.0
      %687 = vmatprep.subr.mxu0 0.0
      %688 = vmatpush1.xpose.msra.mxu0 0.0
      %689 = vmatprep.subr.mxu0 0.0
      %690 = vmatpush1.xpose.msra.mxu0 0.0
      %691 = vmatprep.subr.mxu0 0.0
      %692 = vmatpush1.xpose.msra.mxu0 0.0
      %693 = vmatprep.subr.mxu0 0.0
      %694 = vmatpush1.xpose.msra.mxu0 0.0
      %695 = vmatprep.subr.mxu0 0.0
      %696 = vmatpush1.xpose.msra.mxu0 0.0
      %697 = vmatprep.subr.mxu0 0.0
      %698 = vmatpush1.xpose.msra.mxu0 0.0
      %699 = vmatprep.subr.mxu0 0.0
      %700 = vmatpush1.xpose.msra.mxu0 0.0
      %701 = vmatprep.subr.mxu0 0.0
      %702 = vmatpush1.xpose.msra.mxu0 0.0
      %703 = vmatprep.subr.mxu0 0.0
      %704 = vmatpush1.xpose.msra.mxu0 0.0
      %705 = vmatprep.subr.mxu0 0.0
      %706 = vmatpush1.xpose.msra.mxu0 0.0
      %707 = vmatprep.mubr.f32.mxu0 0.0
      %708 = vmatmul.mubr.f32.gmra.mrb[0].mxu0 %v638
      %v709 = vpop.f32.mrb[0].mxu0
      %v710 = vadd.f32 0.0, %v709
      %v711 = vpop.f32.mrb[0].mxu0
      %712 = vdwg.mxu0
      %v713 = vld [vmem:[%s339] sm:$0xff]
      %vm714 = vcmp.ne.f32.partialorder %v713, 0.0
      %v715 = vld [vmem:[%s345] sm:$0x1]
      %vm716 = vcmp.ne.f32.partialorder %v715, 0.0
      %v717 = vsel %vm714, 1, 0
      %718 = vset.pattern.permute.xlu0 0
      %719 = vperm.xlu0 %718, %v717
      %v720 = vpop.permute.xlu0 %719
      %vm721 = vcmp.eq.s32.totalorder %v720, 1
      %v722 = vsel %vm716, 1, 0
      %v723 = vlaneseq
      %v724 = vshrl.u32 %v723, 7
      %v725 = vsub.s32 0, %v724
      %v726 = vrot.slane %v722, %v725
      %vm727 = vcmp.eq.s32.totalorder %v726, 1
      %vm728 = vmand %vm721, %vm727
      %s729 = smul.u32 %s22, 8
      %v730 = vlaneseq
      %v731 = vshrl.u32 %v730, 7
      %v732 = vstv %s729
      %v733 = vadd.s32 %v732, %v731
      %s734 = smul.u32 %s23, 8
      %v735 = vlaneseq
      %v736 = vand.u32 %v735, 127
      %v737 = vstv %s734
      %v738 = vadd.s32 %v737, %v736
      %vm739 = vcmp.le.s32.totalorder %v738, %v733
      %vm740 = vmand %vm728, %vm739
      %v741 = vsel %vm740, 1, 0
      %vm742 = vcmp.eq.s32.totalorder %v741, 1
      %v743 = vsel %vm742, %v482, -1e+09
      %v744 = vsel %vm742, %v558, -1e+09
      %v745 = vsel %vm742, %v634, -1e+09
      %v746 = vsel %vm742, %v710, -1e+09
      %v747 = vld [vmem:[#allocation2] sm:$0xff]
      %v748 = vld [vmem:[#allocation2 + $0x8] sm:$0xff]
      %v749 = vld [vmem:[#allocation2 + $0x10] sm:$0xff]
      %v750 = vld [vmem:[#allocation2 + $0x18] sm:$0xff]
      %v751 = vsel %vm408, %v743, -inf
      %752 = vmax.xlane.f32.xlu0 %v751
      %v753 = vpop.xlane.xlu0 %752
      %v754 = vsel %vm408, %v744, -inf
      %755 = vmax.xlane.f32.xlu0 %v754
      %v756 = vpop.xlane.xlu0 %755
      %v757 = vsel %vm408, %v745, -inf
      %758 = vmax.xlane.f32.xlu0 %v757
      %v759 = vpop.xlane.xlu0 %758
      %v760 = vsel %vm408, %v746, -inf
      %761 = vmax.xlane.f32.xlu0 %v760
      %v762 = vpop.xlane.xlu0 %761
      %v763 = vmax.f32 %v747, %v753
      %v764 = vmax.f32 %v748, %v756
      %v765 = vmax.f32 %v749, %v759
      %v766 = vmax.f32 %v750, %v762
      %v767 = vsub.f32 %v747, %v763
      %v768 = vsub.f32 %v748, %v764
      %v769 = vsub.f32 %v749, %v765
      %v770 = vsub.f32 %v750, %v766
      %v771 = vmul.f32 %v767, 1.442695
      %v772 = vpow.pop %v771
      %v773 = vmul.f32 %v768, 1.442695
      %v774 = vpow.pop %v773
      %v775 = vmul.f32 %v769, 1.442695
      %v776 = vpow.pop %v775
      %v777 = vmul.f32 %v770, 1.442695
      %v778 = vpow.pop %v777
      %780 = vset.pattern.permute.xlu0 0
      %781 = vperm.xlu0 %780, %v763
      %v782 = vpop.permute.xlu0 %781
      %785 = vset.pattern.permute.xlu0 0
      %786 = vperm.xlu0 %785, %v764
      %v787 = vpop.permute.xlu0 %786
      %790 = vset.pattern.permute.xlu0 0
      %791 = vperm.xlu0 %790, %v765
      %v792 = vpop.permute.xlu0 %791
      %795 = vset.pattern.permute.xlu0 0
      %796 = vperm.xlu0 %795, %v766
      %v797 = vpop.permute.xlu0 %796
      %v799 = vsub.f32 %v743, %v782
      %v800 = vsub.f32 %v744, %v787
      %v801 = vsub.f32 %v745, %v792
      %v802 = vsub.f32 %v746, %v797
      %v803 = vmul.f32 %v799, 1.442695
      %v804 = vpow.pop %v803
      %v805 = vmul.f32 %v800, 1.442695
      %v806 = vpow.pop %v805
      %v807 = vmul.f32 %v801, 1.442695
      %v808 = vpow.pop %v807
      %v809 = vmul.f32 %v802, 1.442695
      %v810 = vpow.pop %v809
      %v811 = vld [vmem:[#allocation3] sm:$0xff]
      %v812 = vld [vmem:[#allocation3 + $0x8] sm:$0xff]
      %v813 = vld [vmem:[#allocation3 + $0x10] sm:$0xff]
      %v814 = vld [vmem:[#allocation3 + $0x18] sm:$0xff]
      %v815 = vmul.f32 %v772, %v811
      %v816 = vmul.f32 %v774, %v812
      %v817 = vmul.f32 %v776, %v813
      %v818 = vmul.f32 %v778, %v814
      %v819 = vsel %vm408, %v804, 0.0
      %820 = vadd.xlane.f32.xlu0 %v819
      %v821 = vpop.xlane.xlu0 %820
      %v822 = vsel %vm408, %v806, 0.0
      %823 = vadd.xlane.f32.xlu0 %v822
      %v824 = vpop.xlane.xlu0 %823
      %v825 = vsel %vm408, %v808, 0.0
      %826 = vadd.xlane.f32.xlu0 %v825
      %v827 = vpop.xlane.xlu0 %826
      %v828 = vsel %vm408, %v810, 0.0
      %829 = vadd.xlane.f32.xlu0 %v828
      %v830 = vpop.xlane.xlu0 %829
      %v831 = vadd.f32 %v815, %v821
      %v832 = vadd.f32 %v816, %v824
      %v833 = vadd.f32 %v817, %v827
      %v834 = vadd.f32 %v818, %v830
      %vm835 = vcmask 7168
      %836 = vst.msk [vmem:[#allocation3] sm:$0xff] %vm835, %v831
      %837 = vst.msk [vmem:[#allocation3 + $0x8] sm:$0xff] %vm835, %v832
      %838 = vst.msk [vmem:[#allocation3 + $0x10] sm:$0xff] %vm835, %v833
      %839 = vst.msk [vmem:[#allocation3 + $0x18] sm:$0xff] %vm835, %v834
      %v840 = vld [vmem:[#allocation4] sm:$0xff]
      %v841 = vld [vmem:[#allocation4 + $0x8] sm:$0xff]
      %v842 = vld [vmem:[#allocation4 + $0x10] sm:$0xff]
      %v843 = vld [vmem:[#allocation4 + $0x18] sm:$0xff]
      %845 = vset.pattern.permute.xlu0 0
      %846 = vperm.xlu0 %845, %v772
      %v847 = vpop.permute.xlu0 %846
      %850 = vset.pattern.permute.xlu0 0
      %851 = vperm.xlu0 %850, %v774
      %v852 = vpop.permute.xlu0 %851
      %855 = vset.pattern.permute.xlu0 0
      %856 = vperm.xlu0 %855, %v776
      %v857 = vpop.permute.xlu0 %856
      %860 = vset.pattern.permute.xlu0 0
      %861 = vperm.xlu0 %860, %v778
      %v862 = vpop.permute.xlu0 %861
      %v864 = vmul.f32 %v847, %v840
      %v865 = vmul.f32 %v852, %v841
      %v866 = vmul.f32 %v857, %v842
      %v867 = vmul.f32 %v862, %v843
      %v869 = vsel %vm408, %v804, 0
      %871 = vmatprep.subr.mxu0 0.0
      %872 = vmatpush1.msra.mxu0 %v404
      %873 = vmatprep.subr.mxu0 0.0
      %874 = vmatpush1.msra.mxu0 0.0
      %875 = vmatprep.subr.mxu0 0.0
      %876 = vmatpush1.msra.mxu0 0.0
      %877 = vmatprep.subr.mxu0 0.0
      %878 = vmatpush1.msra.mxu0 0.0
      %879 = vmatprep.subr.mxu0 0.0
      %880 = vmatpush1.msra.mxu0 0.0
      %881 = vmatprep.subr.mxu0 0.0
      %882 = vmatpush1.msra.mxu0 0.0
      %883 = vmatprep.subr.mxu0 0.0
      %884 = vmatpush1.msra.mxu0 0.0
      %885 = vmatprep.subr.mxu0 0.0
      %886 = vmatpush1.msra.mxu0 0.0
      %887 = vmatprep.subr.mxu0 0.0
      %888 = vmatpush1.msra.mxu0 0.0
      %889 = vmatprep.subr.mxu0 0.0
      %890 = vmatpush1.msra.mxu0 0.0
      %891 = vmatprep.subr.mxu0 0.0
      %892 = vmatpush1.msra.mxu0 0.0
      %893 = vmatprep.subr.mxu0 0.0
      %894 = vmatpush1.msra.mxu0 0.0
      %895 = vmatprep.subr.mxu0 0.0
      %896 = vmatpush1.msra.mxu0 0.0
      %897 = vmatprep.subr.mxu0 0.0
      %898 = vmatpush1.msra.mxu0 0.0
      %899 = vmatprep.subr.mxu0 0.0
      %900 = vmatpush1.msra.mxu0 0.0
      %901 = vmatprep.subr.mxu0 0.0
      %902 = vmatpush1.msra.mxu0 0.0
      %903 = vmatprep.subr.mxu0 0.0
      %904 = vmatpush1.msra.mxu0 0.0
      %905 = vmatprep.subr.mxu0 0.0
      %906 = vmatpush1.msra.mxu0 0.0
      %907 = vmatprep.subr.mxu0 0.0
      %908 = vmatpush1.msra.mxu0 0.0
      %909 = vmatprep.subr.mxu0 0.0
      %910 = vmatpush1.msra.mxu0 0.0
      %911 = vmatprep.subr.mxu0 0.0
      %912 = vmatpush1.msra.mxu0 0.0
      %913 = vmatprep.subr.mxu0 0.0
      %914 = vmatpush1.msra.mxu0 0.0
      %915 = vmatprep.subr.mxu0 0.0
      %916 = vmatpush1.msra.mxu0 0.0
      %917 = vmatprep.subr.mxu0 0.0
      %918 = vmatpush1.msra.mxu0 0.0
      %919 = vmatprep.subr.mxu0 0.0
      %920 = vmatpush1.msra.mxu0 0.0
      %921 = vmatprep.subr.mxu0 0.0
      %922 = vmatpush1.msra.mxu0 0.0
      %923 = vmatprep.subr.mxu0 0.0
      %924 = vmatpush1.msra.mxu0 0.0
      %925 = vmatprep.subr.mxu0 0.0
      %926 = vmatpush1.msra.mxu0 0.0
      %927 = vmatprep.subr.mxu0 0.0
      %928 = vmatpush1.msra.mxu0 0.0
      %929 = vmatprep.subr.mxu0 0.0
      %930 = vmatpush1.msra.mxu0 0.0
      %931 = vmatprep.subr.mxu0 0.0
      %932 = vmatpush1.msra.mxu0 0.0
      %933 = vmatprep.subr.mxu0 0.0
      %934 = vmatpush1.msra.mxu0 0.0
      %935 = vmatprep.mubr.f32.mxu0 0.0
      %936 = vmatmul.mubr.f32.gmra.mrb[0].mxu0 %v869
      %v937 = vpop.f32.mrb[0].mxu0
      %v938 = vadd.f32 0.0, %v937
      %v939 = vpop.f32.mrb[0].mxu0
      %940 = vdwg.mxu0
      %v942 = vsel %vm408, %v806, 0
      %944 = vmatprep.subr.mxu0 0.0
      %945 = vmatpush1.msra.mxu0 %v405
      %946 = vmatprep.subr.mxu0 0.0
      %947 = vmatpush1.msra.mxu0 0.0
      %948 = vmatprep.subr.mxu0 0.0
      %949 = vmatpush1.msra.mxu0 0.0
      %950 = vmatprep.subr.mxu0 0.0
      %951 = vmatpush1.msra.mxu0 0.0
      %952 = vmatprep.subr.mxu0 0.0
      %953 = vmatpush1.msra.mxu0 0.0
      %954 = vmatprep.subr.mxu0 0.0
      %955 = vmatpush1.msra.mxu0 0.0
      %956 = vmatprep.subr.mxu0 0.0
      %957 = vmatpush1.msra.mxu0 0.0
      %958 = vmatprep.subr.mxu0 0.0
      %959 = vmatpush1.msra.mxu0 0.0
      %960 = vmatprep.subr.mxu0 0.0
      %961 = vmatpush1.msra.mxu0 0.0
      %962 = vmatprep.subr.mxu0 0.0
      %963 = vmatpush1.msra.mxu0 0.0
      %964 = vmatprep.subr.mxu0 0.0
      %965 = vmatpush1.msra.mxu0 0.0
      %966 = vmatprep.subr.mxu0 0.0
      %967 = vmatpush1.msra.mxu0 0.0
      %968 = vmatprep.subr.mxu0 0.0
      %969 = vmatpush1.msra.mxu0 0.0
      %970 = vmatprep.subr.mxu0 0.0
      %971 = vmatpush1.msra.mxu0 0.0
      %972 = vmatprep.subr.mxu0 0.0
      %973 = vmatpush1.msra.mxu0 0.0
      %974 = vmatprep.subr.mxu0 0.0
      %975 = vmatpush1.msra.mxu0 0.0
      %976 = vmatprep.subr.mxu0 0.0
      %977 = vmatpush1.msra.mxu0 0.0
      %978 = vmatprep.subr.mxu0 0.0
      %979 = vmatpush1.msra.mxu0 0.0
      %980 = vmatprep.subr.mxu0 0.0
      %981 = vmatpush1.msra.mxu0 0.0
      %982 = vmatprep.subr.mxu0 0.0
      %983 = vmatpush1.msra.mxu0 0.0
      %984 = vmatprep.subr.mxu0 0.0
      %985 = vmatpush1.msra.mxu0 0.0
      %986 = vmatprep.subr.mxu0 0.0
      %987 = vmatpush1.msra.mxu0 0.0
      %988 = vmatprep.subr.mxu0 0.0
      %989 = vmatpush1.msra.mxu0 0.0
      %990 = vmatprep.subr.mxu0 0.0
      %991 = vmatpush1.msra.mxu0 0.0
      %992 = vmatprep.subr.mxu0 0.0
      %993 = vmatpush1.msra.mxu0 0.0
      %994 = vmatprep.subr.mxu0 0.0
      %995 = vmatpush1.msra.mxu0 0.0
      %996 = vmatprep.subr.mxu0 0.0
      %997 = vmatpush1.msra.mxu0 0.0
      %998 = vmatprep.subr.mxu0 0.0
      %999 = vmatpush1.msra.mxu0 0.0
      %1000 = vmatprep.subr.mxu0 0.0
      %1001 = vmatpush1.msra.mxu0 0.0
      %1002 = vmatprep.subr.mxu0 0.0
      %1003 = vmatpush1.msra.mxu0 0.0
      %1004 = vmatprep.subr.mxu0 0.0
      %1005 = vmatpush1.msra.mxu0 0.0
      %1006 = vmatprep.subr.mxu0 0.0
      %1007 = vmatpush1.msra.mxu0 0.0
      %1008 = vmatprep.mubr.f32.mxu0 0.0
      %1009 = vmatmul.mubr.f32.gmra.mrb[0].mxu0 %v942
      %v1010 = vpop.f32.mrb[0].mxu0
      %v1011 = vadd.f32 0.0, %v1010
      %v1012 = vpop.f32.mrb[0].mxu0
      %1013 = vdwg.mxu0
      %v1015 = vsel %vm408, %v808, 0
      %1017 = vmatprep.subr.mxu0 0.0
      %1018 = vmatpush1.msra.mxu0 %v406
      %1019 = vmatprep.subr.mxu0 0.0
      %1020 = vmatpush1.msra.mxu0 0.0
      %1021 = vmatprep.subr.mxu0 0.0
      %1022 = vmatpush1.msra.mxu0 0.0
      %1023 = vmatprep.subr.mxu0 0.0
      %1024 = vmatpush1.msra.mxu0 0.0
      %1025 = vmatprep.subr.mxu0 0.0
      %1026 = vmatpush1.msra.mxu0 0.0
      %1027 = vmatprep.subr.mxu0 0.0
      %1028 = vmatpush1.msra.mxu0 0.0
      %1029 = vmatprep.subr.mxu0 0.0
      %1030 = vmatpush1.msra.mxu0 0.0
      %1031 = vmatprep.subr.mxu0 0.0
      %1032 = vmatpush1.msra.mxu0 0.0
      %1033 = vmatprep.subr.mxu0 0.0
      %1034 = vmatpush1.msra.mxu0 0.0
      %1035 = vmatprep.subr.mxu0 0.0
      %1036 = vmatpush1.msra.mxu0 0.0
      %1037 = vmatprep.subr.mxu0 0.0
      %1038 = vmatpush1.msra.mxu0 0.0
      %1039 = vmatprep.subr.mxu0 0.0
      %1040 = vmatpush1.msra.mxu0 0.0
      %1041 = vmatprep.subr.mxu0 0.0
      %1042 = vmatpush1.msra.mxu0 0.0
      %1043 = vmatprep.subr.mxu0 0.0
      %1044 = vmatpush1.msra.mxu0 0.0
      %1045 = vmatprep.subr.mxu0 0.0
      %1046 = vmatpush1.msra.mxu0 0.0
      %1047 = vmatprep.subr.mxu0 0.0
      %1048 = vmatpush1.msra.mxu0 0.0
      %1049 = vmatprep.subr.mxu0 0.0
      %1050 = vmatpush1.msra.mxu0 0.0
      %1051 = vmatprep.subr.mxu0 0.0
      %1052 = vmatpush1.msra.mxu0 0.0
      %1053 = vmatprep.subr.mxu0 0.0
      %1054 = vmatpush1.msra.mxu0 0.0
      %1055 = vmatprep.subr.mxu0 0.0
      %1056 = vmatpush1.msra.mxu0 0.0
      %1057 = vmatprep.subr.mxu0 0.0
      %1058 = vmatpush1.msra.mxu0 0.0
      %1059 = vmatprep.subr.mxu0 0.0
      %1060 = vmatpush1.msra.mxu0 0.0
      %1061 = vmatprep.subr.mxu0 0.0
      %1062 = vmatpush1.msra.mxu0 0.0
      %1063 = vmatprep.subr.mxu0 0.0
      %1064 = vmatpush1.msra.mxu0 0.0
      %1065 = vmatprep.subr.mxu0 0.0
      %1066 = vmatpush1.msra.mxu0 0.0
      %1067 = vmatprep.subr.mxu0 0.0
      %1068 = vmatpush1.msra.mxu0 0.0
      %1069 = vmatprep.subr.mxu0 0.0
      %1070 = vmatpush1.msra.mxu0 0.0
      %1071 = vmatprep.subr.mxu0 0.0
      %1072 = vmatpush1.msra.mxu0 0.0
      %1073 = vmatprep.subr.mxu0 0.0
      %1074 = vmatpush1.msra.mxu0 0.0
      %1075 = vmatprep.subr.mxu0 0.0
      %1076 = vmatpush1.msra.mxu0 0.0
      %1077 = vmatprep.subr.mxu0 0.0
      %1078 = vmatpush1.msra.mxu0 0.0
      %1079 = vmatprep.subr.mxu0 0.0
      %1080 = vmatpush1.msra.mxu0 0.0
      %1081 = vmatprep.mubr.f32.mxu0 0.0
      %1082 = vmatmul.mubr.f32.gmra.mrb[0].mxu0 %v1015
      %v1083 = vpop.f32.mrb[0].mxu0
      %v1084 = vadd.f32 0.0, %v1083
      %v1085 = vpop.f32.mrb[0].mxu0
      %1086 = vdwg.mxu0
      %v1088 = vsel %vm408, %v810, 0
      %1090 = vmatprep.subr.mxu0 0.0
      %1091 = vmatpush1.msra.mxu0 %v407
      %1092 = vmatprep.subr.mxu0 0.0
      %1093 = vmatpush1.msra.mxu0 0.0
      %1094 = vmatprep.subr.mxu0 0.0
      %1095 = vmatpush1.msra.mxu0 0.0
      %1096 = vmatprep.subr.mxu0 0.0
      %1097 = vmatpush1.msra.mxu0 0.0
      %1098 = vmatprep.subr.mxu0 0.0
      %1099 = vmatpush1.msra.mxu0 0.0
      %1100 = vmatprep.subr.mxu0 0.0
      %1101 = vmatpush1.msra.mxu0 0.0
      %1102 = vmatprep.subr.mxu0 0.0
      %1103 = vmatpush1.msra.mxu0 0.0
      %1104 = vmatprep.subr.mxu0 0.0
      %1105 = vmatpush1.msra.mxu0 0.0
      %1106 = vmatprep.subr.mxu0 0.0
      %1107 = vmatpush1.msra.mxu0 0.0
      %1108 = vmatprep.subr.mxu0 0.0
      %1109 = vmatpush1.msra.mxu0 0.0
      %1110 = vmatprep.subr.mxu0 0.0
      %1111 = vmatpush1.msra.mxu0 0.0
      %1112 = vmatprep.subr.mxu0 0.0
      %1113 = vmatpush1.msra.mxu0 0.0
      %1114 = vmatprep.subr.mxu0 0.0
      %1115 = vmatpush1.msra.mxu0 0.0
      %1116 = vmatprep.subr.mxu0 0.0
      %1117 = vmatpush1.msra.mxu0 0.0
      %1118 = vmatprep.subr.mxu0 0.0
      %1119 = vmatpush1.msra.mxu0 0.0
      %1120 = vmatprep.subr.mxu0 0.0
      %1121 = vmatpush1.msra.mxu0 0.0
      %1122 = vmatprep.subr.mxu0 0.0
      %1123 = vmatpush1.msra.mxu0 0.0
      %1124 = vmatprep.subr.mxu0 0.0
      %1125 = vmatpush1.msra.mxu0 0.0
      %1126 = vmatprep.subr.mxu0 0.0
      %1127 = vmatpush1.msra.mxu0 0.0
      %1128 = vmatprep.subr.mxu0 0.0
      %1129 = vmatpush1.msra.mxu0 0.0
      %1130 = vmatprep.subr.mxu0 0.0
      %1131 = vmatpush1.msra.mxu0 0.0
      %1132 = vmatprep.subr.mxu0 0.0
      %1133 = vmatpush1.msra.mxu0 0.0
      %1134 = vmatprep.subr.mxu0 0.0
      %1135 = vmatpush1.msra.mxu0 0.0
      %1136 = vmatprep.subr.mxu0 0.0
      %1137 = vmatpush1.msra.mxu0 0.0
      %1138 = vmatprep.subr.mxu0 0.0
      %1139 = vmatpush1.msra.mxu0 0.0
      %1140 = vmatprep.subr.mxu0 0.0
      %1141 = vmatpush1.msra.mxu0 0.0
      %1142 = vmatprep.subr.mxu0 0.0
      %1143 = vmatpush1.msra.mxu0 0.0
      %1144 = vmatprep.subr.mxu0 0.0
      %1145 = vmatpush1.msra.mxu0 0.0
      %1146 = vmatprep.subr.mxu0 0.0
      %1147 = vmatpush1.msra.mxu0 0.0
      %1148 = vmatprep.subr.mxu0 0.0
      %1149 = vmatpush1.msra.mxu0 0.0
      %1150 = vmatprep.subr.mxu0 0.0
      %1151 = vmatpush1.msra.mxu0 0.0
      %1152 = vmatprep.subr.mxu0 0.0
      %1153 = vmatpush1.msra.mxu0 0.0
      %1154 = vmatprep.mubr.f32.mxu0 0.0
      %1155 = vmatmul.mubr.f32.gmra.mrb[0].mxu0 %v1088
      %v1156 = vpop.f32.mrb[0].mxu0
      %v1157 = vadd.f32 0.0, %v1156
      %v1158 = vpop.f32.mrb[0].mxu0
      %1159 = vdwg.mxu0
      %v1160 = vadd.f32 %v864, %v938
      %v1161 = vadd.f32 %v865, %v1011
      %v1162 = vadd.f32 %v866, %v1084
      %v1163 = vadd.f32 %v867, %v1157
      %1164 = vst.msk [vmem:[#allocation4] sm:$0xff] %vm408, %v1160
      %1165 = vst.msk [vmem:[#allocation4 + $0x8] sm:$0xff] %vm408, %v1161
      %1166 = vst.msk [vmem:[#allocation4 + $0x10] sm:$0xff] %vm408, %v1162
      %1167 = vst.msk [vmem:[#allocation4 + $0x18] sm:$0xff] %vm408, %v1163
      %1168 = vst.msk [vmem:[#allocation2] sm:$0xff] %vm835, %v763
      %1169 = vst.msk [vmem:[#allocation2 + $0x8] sm:$0xff] %vm835, %v764
      %1170 = vst.msk [vmem:[#allocation2 + $0x10] sm:$0xff] %vm835, %v765
      %1171 = vst.msk [vmem:[#allocation2 + $0x18] sm:$0xff] %vm835, %v766
      // Predicated region
      $region45: #{transformer_forward.34} parent=39 // pred_check
        %p1172 = pneg %p378
      $region46: #{transformer_forward.34} parent=39 // pred_check_branch
        %1174 = sbr.rel (%p1172) target = $region48
      $region47: #{transformer_forward.34} parent=39 // pred_region
        %v1175 = vld [vmem:[#allocation4] sm:$0xff]
        %v1176 = vld [vmem:[#allocation4 + $0x8] sm:$0xff]
        %v1177 = vld [vmem:[#allocation4 + $0x10] sm:$0xff]
        %v1178 = vld [vmem:[#allocation4 + $0x18] sm:$0xff]
        %v1179 = vld [vmem:[#allocation3] sm:$0xff]
        %v1180 = vld [vmem:[#allocation3 + $0x8] sm:$0xff]
        %v1181 = vld [vmem:[#allocation3 + $0x10] sm:$0xff]
        %v1182 = vld [vmem:[#allocation3 + $0x18] sm:$0xff]
        %v1183 = vrcp.pop %v1179
        %v1184 = vrcp.pop %v1180
        %v1185 = vrcp.pop %v1181
        %v1186 = vrcp.pop %v1182
        %1188 = vset.pattern.permute.xlu0 0
        %1189 = vperm.xlu0 %1188, %v1183
        %v1190 = vpop.permute.xlu0 %1189
        %1193 = vset.pattern.permute.xlu0 0
        %1194 = vperm.xlu0 %1193, %v1184
        %v1195 = vpop.permute.xlu0 %1194
        %1198 = vset.pattern.permute.xlu0 0
        %1199 = vperm.xlu0 %1198, %v1185
        %v1200 = vpop.permute.xlu0 %1199
        %1203 = vset.pattern.permute.xlu0 0
        %1204 = vperm.xlu0 %1203, %v1186
        %v1205 = vpop.permute.xlu0 %1204
        %v1207 = vmul.f32 %v1175, %v1190
        %v1208 = vmul.f32 %v1176, %v1195
        %v1209 = vmul.f32 %v1177, %v1200
        %v1210 = vmul.f32 %v1178, %v1205
        %1211 = vst.msk [vmem:[%s377] sm:$0xff] %vm408, %v1207
        %1212 = vst.msk [vmem:[%s377 + $0x8] sm:$0xff] %vm408, %v1208
        %1213 = vst.msk [vmem:[%s377 + $0x10] sm:$0xff] %vm408, %v1209
        %1214 = vst.msk [vmem:[%s377 + $0x18] sm:$0xff] %vm408, %v1210
      $region48: #{transformer_forward.34} parent=39 // pred_fallthru
        _
      %p1215 = scmp.lt.s32.totalorder %s21, 1
      %s1216 = scalar_select %p1215, %s21, 1
      %p1217 = scmp.lt.s32.totalorder %s22, 0
      %s1218 = scalar_select %p1217, %s22, 0
      %s1219 = smul.addr %s1216, 4
      %s1220 = sadd.s32 %s1218, %s1219
      %s1221 = smul.addr %s1220, 8
      %s1222 = scalar_lea.vmem %s5, %s1221
      // Predicated region
      $region49: #{transformer_forward.34} parent=39 // pred_check
        %p1223 = pneg %p195
      $region50: #{transformer_forward.34} parent=39 // pred_check_branch
        %1225 = sbr.rel (%p1223) target = $region52
      $region51: #{transformer_forward.34} parent=39 // pred_region
        _
      $region52: #{transformer_forward.34} parent=39 // pred_fallthru
        _
    $region40: #{transformer_forward.34} parent=5 // pred_fallthru
      _
    %p1226 = scmp.le.s32.totalorder 2, %s11
    // Predicated region
    $region53: #{transformer_forward.34} parent=5 // pred_check
      %p1227 = pneg %p1226
    $region54: #{transformer_forward.34} parent=5 // pred_check_branch
      %1229 = sbr.rel (%p1227) target = $region56
    $region55: #{transformer_forward.34} parent=5 // pred_region
      %s1230 = ssub.s32 %s11, 2
      // Predicated region
      $region57: #{transformer_forward.34} parent=55 // pred_check
        %p1231 = pneg %p201
      $region58: #{transformer_forward.34} parent=55 // pred_check_branch
        %1233 = sbr.rel (%p1231) target = $region60
      $region59: #{transformer_forward.34} parent=55 // pred_region
        %p1234 = scmp.lt.s32.totalorder %s24, 1
        %s1235 = scalar_select %p1234, %s24, 1
        %p1236 = scmp.lt.s32.totalorder %s25, 0
        %s1237 = scalar_select %p1236, %s25, 0
        %s1238 = smul.addr %s1235, 4
        %s1239 = sadd.s32 %s1237, %s1238
        %s1240 = smul.addr %s1239, 8
        %s1241 = scalar_lea.vmem %s5, %s1240
      $region60: #{transformer_forward.34} parent=55 // pred_fallthru
        _
    $region56: #{transformer_forward.34} parent=5 // pred_fallthru
      _
  $region6: #{transformer_forward.34} parent=0 // loop_footer
    %s15 = sadd.s32 1, %s11
  $region7: #{transformer_forward.34} parent=0 // loop_footer_branch
    %10 = sbr.rel target = $region3
  $region8: #{transformer_forward.34} parent=0 // loop_exit
    _

</llo_original>
